<compile_context>
chip_gen: v6e
topology: v6e:2x2x1
jax: 0.10.0
libtpu: 0.0.40
codegen_flags: <defaults>
</compile_context>

<pallas_src>
import functools
import math

import jax
import jax.numpy as jnp
from jax import lax
from jax.experimental import pallas as pl
from jax.experimental.pallas import tpu as pltpu

KSIZE = 7
PAD = 3  # padding for kernel_size=7


def _round_up(v, m):
    return (v + m - 1) // m * m


def _spatial_attention_kernel(w_ref, mask_ref, x_ref, o_ref, sum_ref, max_ref,
                              *, img_w, act):
    # w_ref:    (2*49,) f32 SMEM; channel-0 (mean) weights pre-scaled by 1/C.
    # mask_ref: (7, L) f32; mask_ref[dx] = 1 where column x+dx-PAD stays in-row.
    # x_ref:    (bt, ct, hw) input tile (spatially flattened, lane-dense).
    # o_ref:    (bt, 1, L) lane-dense output slab block.
    # sum_ref:  (bt, L) f32 running channel sum  (zero halo tail).
    # max_ref:  (bt, L) f32 running channel max  (zero halo tail).
    ci = pl.program_id(1)
    nc = pl.num_programs(1)
    bt, L = sum_ref.shape
    hw = x_ref.shape[2]

    @pl.when(ci == 0)
    def _init():
        sum_ref[...] = jnp.zeros_like(sum_ref)
        max_ref[...] = jnp.zeros_like(max_ref)  # keeps the halo tail at 0
        max_ref[:, pl.ds(0, hw)] = jnp.full((bt, hw), -jnp.inf, jnp.float32)

    # Lane-dense channel pooling for this (batch-block, channel-tile).
    xs = x_ref[...].astype(jnp.float32)                         # (bt, ct, hw)
    sum_ref[:, pl.ds(0, hw)] = sum_ref[:, pl.ds(0, hw)] + jnp.sum(xs, axis=1)
    max_ref[:, pl.ds(0, hw)] = jnp.maximum(max_ref[:, pl.ds(0, hw)],
                                           jnp.max(xs, axis=1))

    @pl.when(ci == nc - 1)
    def _finalize():
        # 2->1 7x7 conv in the flat layout: per tap one lane roll (XLU) +
        # multiply-add (VPU).  Vertical halo -> zero tail of the accumulators
        # (folded into the roll amount); horizontal halo -> per-dx masks.
        for bi in range(bt):
            feat = (sum_ref[pl.ds(bi, 1), :],      # mean (1/C folded into w)
                    max_ref[pl.ds(bi, 1), :])      # max
            acc = jnp.zeros((1, L), jnp.float32)
            for dx in range(KSIZE):
                part = jnp.zeros((1, L), jnp.float32)
                for c in range(2):
                    frow = feat[c]
                    for dy in range(KSIZE):
                        s = (dy - PAD) * img_w + (dx - PAD)
                        shifted = frow if s == 0 else pltpu.roll(
                            frow, (-s) % L, axis=1)
                        wgt = w_ref[c * (KSIZE * KSIZE) + dy * KSIZE + dx]
                        part = part + wgt * shifted
                acc = acc + mask_ref[pl.ds(dx, 1), :] * part
            out = jnp.tanh(acc) if act == "tanh" else jax.nn.sigmoid(acc)
            o_ref[bi] = out.astype(o_ref.dtype)


def _vmem_capacity_bytes():
    try:
        info = pltpu.get_tpu_info()
        cap = getattr(info, "vmem_capacity_bytes", None)
        if cap:
            return int(cap)
    except Exception:
        pass
    return 64 << 20  # conservative fallback (v7x physical VMEM per core)


def _pick_channel_tile(c, hw, itemsize, budget, vmem_cap):
    """Largest channel tile whose (8,128)-padded block fits the budget."""
    sub = max(8, 32 // itemsize)                 # sublane pack for this dtype
    hw_l = _round_up(hw, 128)
    blk = lambda ct: _round_up(ct, sub) * hw_l * itemsize
    if blk(c) <= budget:
        return c
    for ct in range(c - 1, 0, -1):               # aligned divisors, descending
        if c % ct == 0 and ct % sub == 0 and blk(ct) <= budget:
            return ct
    if blk(c) <= vmem_cap // 3:                  # no aligned divisor: whole C
        return c
    for ct in range(c - 1, 0, -1):               # last resort: any divisor
        if c % ct == 0 and blk(ct) <= budget:
            return ct
    return 1


def _pick_batch_tile(b, c, ct, hw, itemsize, budget):
    """Batch several images per grid step for tiny feature maps."""
    if ct != c or b <= 1:
        return 1
    sub = max(8, 32 // itemsize)
    per_img = _round_up(ct, sub) * _round_up(hw, 128) * itemsize
    cap = min(max(1, budget // max(1, per_img)), 8)
    if b >= 2:
        cap = min(cap, b // 2)   # keep >=2 batch blocks so v7x megacore has work
    for bt in range(max(1, cap), 0, -1):
        if b % bt == 0:
            return bt
    return 1


def spatial_attention(x, conv_weight, *, activation="sigmoid",
                      channel_block_bytes=None, batch_tile=None,
                      channel_tile=None):
    """x: (B, C, H, W); conv_weight: (1, 2, 7, 7), no bias -> (B, 1, H, W)."""
    b, c, h, w = x.shape
    hw = h * w
    itemsize = jnp.dtype(x.dtype).itemsize
    sub = max(8, 32 // itemsize)
    vmem_cap = _vmem_capacity_bytes()

    if channel_block_bytes is None:
        # ~8 MiB/block on v7x (64 MiB VMEM), ~16 MiB on v5e/v6e (128 MiB).
        channel_block_bytes = min(32 << 20, max(4 << 20, vmem_cap // 8))

    ct = channel_tile if channel_tile is not None else _pick_channel_tile(
        c, hw, itemsize, channel_block_bytes, vmem_cap)
    assert c % ct == 0, (c, ct)
    bt = batch_tile if batch_tile is not None else _pick_batch_tile(
        b, c, ct, hw, itemsize, channel_block_bytes)
    assert b % bt == 0, (b, bt)

    # Lane-dense padded length for the flattened pooled maps / output slab:
    # zeros in lanes [hw, L) absorb the vertical (dy) halo of the 7x7 conv.
    L = _round_up(hw + PAD * w + PAD, 128)

    # Fold 1/C of the mean pooling into channel-0 weights; flatten for SMEM.
    w2 = conv_weight.astype(jnp.float32).reshape(2, KSIZE * KSIZE)
    w2 = w2 * jnp.array([[1.0 / c], [1.0]], dtype=jnp.float32)
    w_flat = w2.reshape(-1)

    # Horizontal-validity masks, one per dx: tap column x + dx - PAD in [0, w).
    col = jnp.arange(L, dtype=jnp.int32) % w
    off = col[None, :] + jnp.arange(KSIZE, dtype=jnp.int32)[:, None] - PAD
    masks = ((off >= 0) & (off < w)).astype(jnp.float32)        # (7, L)

    x_flat = x.reshape(b, c, hw)                                # lane-dense view

    # VMEM budget from the (8,128)-tiled footprint (double-buffered blocks).
    hw_l = _round_up(hw, 128)
    in_block = bt * _round_up(ct, sub) * hw_l * itemsize
    out_block = bt * 8 * L * itemsize
    mask_block = 8 * L * 4
    scratch_bytes = 2 * _round_up(bt, 8) * L * 4
    need = 2 * (in_block + out_block + mask_block) + scratch_bytes + (2 << 20)
    vmem_limit = int(min(int(0.9 * vmem_cap), max(need + need // 2, 16 << 20)))

    kernel = functools.partial(_spatial_attention_kernel, img_w=w,
                               act=activation)

    out_slab = pl.pallas_call(
        kernel,
        out_shape=jax.ShapeDtypeStruct((b, 1, L), x.dtype),
        grid=(b // bt, c // ct),
        in_specs=[
            pl.BlockSpec(memory_space=pltpu.MemorySpace.SMEM),       # weights
            pl.BlockSpec((KSIZE, L), lambda i, j: (0, 0)),           # dx masks
            pl.BlockSpec((bt, ct, hw), lambda i, j: (i, j, 0)),      # x tile
        ],
        out_specs=pl.BlockSpec((bt, 1, L), lambda i, j: (i, 0, 0)),
        scratch_shapes=[
            pltpu.VMEM((bt, L), jnp.float32),    # running channel sum
            pltpu.VMEM((bt, L), jnp.float32),    # running channel max
        ],
        compiler_params=pltpu.CompilerParams(
            dimension_semantics=("parallel", "arbitrary"),
            vmem_limit_bytes=vmem_limit),
    )(w_flat, masks, x_flat)

    return out_slab[:, :, :hw].reshape(b, 1, h, w)


def _reference(x, conv_weight, activation="sigmoid"):
    # Pure-JAX reference mirroring the PyTorch forward exactly.
    avg_out = jnp.mean(x, axis=1, keepdims=True)
    max_out = jnp.max(x, axis=1, keepdims=True)
    feat = jnp.concatenate([avg_out, max_out], axis=1)          # (B, 2, H, W)
    conv = lax.conv_general_dilated(
        feat, conv_weight, window_strides=(1, 1),
        padding=((PAD, PAD), (PAD, PAD)),
        dimension_numbers=("NCHW", "OIHW", "NCHW"))
    return jnp.tanh(conv) if activation == "tanh" else jax.nn.sigmoid(conv)


if __name__ == "__main__":
    key = jax.random.PRNGKey(0)
    k_x, k_w, k_x2 = jax.random.split(key, 3)

    # Conv2d(2, 1, 7, bias=False) weight, kaiming-normal (mode='fan_out') init.
    fan_out = 1 * KSIZE * KSIZE
    std = math.sqrt(2.0 / fan_out)
    conv_weight = std * jax.random.normal(
        k_w, (1, 2, KSIZE, KSIZE), dtype=jnp.float32)

    # Primary config (requested small shapes).
    B, C, H, W = 2, 4, 16, 16
    x = jax.random.normal(k_x, (B, C, H, W), dtype=jnp.float32)
    out = jax.block_until_ready(spatial_attention(x, conv_weight))
    ref = _reference(x, conv_weight)
    assert out.shape == (B, 1, H, W), out.shape
    err = float(jnp.max(jnp.abs(out - ref)))
    assert jnp.allclose(out, ref, atol=1e-5, rtol=1e-5), err

    # Secondary config: exercises multi-step channel accumulation (ct < C),
    # batched grid steps (bt > 1) and a width that is not lane-aligned.
    B2, C2, H2, W2 = 4, 16, 10, 12
    x2 = jax.random.normal(k_x2, (B2, C2, H2, W2), dtype=jnp.float32)
    out2 = jax.block_until_ready(
        spatial_attention(x2, conv_weight, batch_tile=2, channel_tile=8))
    ref2 = _reference(x2, conv_weight)
    err2 = float(jnp.max(jnp.abs(out2 - ref2)))
    assert out2.shape == (B2, 1, H2, W2), out2.shape
    assert jnp.allclose(out2, ref2, atol=1e-5, rtol=1e-5), err2

    print("KERNEL_OK")
</pallas_src>

<mosaic_0001>
module attributes {stable_mosaic.version = 11 : i64} {
  func.func @_spatial_attention_kernel(%arg0: i32, %arg1: i32, %arg2: memref<98xf32, #tpu.memory_space<smem>>, %arg3: memref<7x384xf32, #tpu.memory_space<vmem>>, %arg4: memref<1x4x256xf32, #tpu.memory_space<vmem>>, %arg5: memref<1x1x384xf32, #tpu.memory_space<vmem>>, %arg6: memref<1x384xf32, #tpu.memory_space<vmem>>, %arg7: memref<1x384xf32, #tpu.memory_space<vmem>>) attributes {dimension_semantics = [#tpu.dimension_semantics<parallel>, #tpu.dimension_semantics<arbitrary>], iteration_bounds = array<i64: 2, 1>, scalar_prefetch = 0 : i64, scratch_operands = 2 : i64, tpu.core_type = #tpu.core_type<tc>, window_params = [{transform_indices = @transform_0, window_bounds = array<i64: 98>}, {pipeline_mode = #tpu.pipeline_mode<synchronous>, transform_indices = @transform_1, window_bounds = array<i64: 7, 384>}, {transform_indices = @transform_2, window_bounds = array<i64: 1, 4, 256>}, {transform_indices = @transform_3, window_bounds = array<i64: 1, 1, 384>}]} {
    %c0_i32 = arith.constant 0 : i32
    %0 = arith.cmpi eq, %arg1, %c0_i32 : i32
    %1 = arith.extui %0 : i1 to i32
    %c0_i32_0 = arith.constant 0 : i32
    %2 = arith.cmpi ne, %1, %c0_i32_0 : i32
    scf.if %2 {
      %cst_14 = arith.constant 0.000000e+00 : f32
      %15 = vector.broadcast %cst_14 : f32 to vector<1x384xf32>
      %c0_15 = arith.constant 0 : index
      %c0_16 = arith.constant 0 : index
      %16 = vector.load %arg6[%c0_15, %c0_16] : memref<1x384xf32, #tpu.memory_space<vmem>>, vector<1x384xf32>
      tpu.vector_store %arg6[%c0_15, %c0_16], %15 {strides = array<i32>} : memref<1x384xf32, #tpu.memory_space<vmem>>, vector<1x384xf32>,
      %cst_17 = arith.constant 0.000000e+00 : f32
      %17 = vector.broadcast %cst_17 : f32 to vector<1x384xf32>
      %c0_18 = arith.constant 0 : index
      %c0_19 = arith.constant 0 : index
      %18 = vector.load %arg7[%c0_18, %c0_19] : memref<1x384xf32, #tpu.memory_space<vmem>>, vector<1x384xf32>
      tpu.vector_store %arg7[%c0_18, %c0_19], %17 {strides = array<i32>} : memref<1x384xf32, #tpu.memory_space<vmem>>, vector<1x384xf32>,
      %cst_20 = arith.constant 0xFF800000 : f32
      %19 = vector.broadcast %cst_20 : f32 to vector<1x256xf32>
      %c0_21 = arith.constant 0 : index
      %c0_22 = arith.constant 0 : index
      %20 = vector.load %arg7[%c0_21, %c0_22] : memref<1x384xf32, #tpu.memory_space<vmem>>, vector<1x256xf32>
      tpu.vector_store %arg7[%c0_21, %c0_22], %19 {strides = array<i32>} : memref<1x384xf32, #tpu.memory_space<vmem>>, vector<1x256xf32>,
    } else {
    }
    %c0 = arith.constant 0 : index
    %c0_1 = arith.constant 0 : index
    %c0_2 = arith.constant 0 : index
    %3 = vector.load %arg4[%c0, %c0_1, %c0_2] : memref<1x4x256xf32, #tpu.memory_space<vmem>>, vector<1x4x256xf32>
    %c0_3 = arith.constant 0 : index
    %c0_4 = arith.constant 0 : index
    %4 = vector.load %arg6[%c0_3, %c0_4] : memref<1x384xf32, #tpu.memory_space<vmem>>, vector<1x256xf32>
    %cst = arith.constant dense<0.000000e+00> : vector<1x256xf32>
    %5 = vector.multi_reduction <add>, %3, %cst [1] : vector<1x4x256xf32> to vector<1x256xf32>
    %6 = arith.addf %4, %5 : vector<1x256xf32>
    %c0_5 = arith.constant 0 : index
    %c0_6 = arith.constant 0 : index
    %7 = vector.load %arg6[%c0_5, %c0_6] : memref<1x384xf32, #tpu.memory_space<vmem>>, vector<1x256xf32>
    tpu.vector_store %arg6[%c0_5, %c0_6], %6 {strides = array<i32>} : memref<1x384xf32, #tpu.memory_space<vmem>>, vector<1x256xf32>,
    %c0_7 = arith.constant 0 : index
    %c0_8 = arith.constant 0 : index
    %8 = vector.load %arg7[%c0_7, %c0_8] : memref<1x384xf32, #tpu.memory_space<vmem>>, vector<1x256xf32>
    %cst_9 = arith.constant dense<0xFF800000> : vector<1x256xf32>
    %9 = vector.multi_reduction <maximumf>, %3, %cst_9 [1] : vector<1x4x256xf32> to vector<1x256xf32>
    %10 = arith.maximumf %8, %9 : vector<1x256xf32>
    %c0_10 = arith.constant 0 : index
    %c0_11 = arith.constant 0 : index
    %11 = vector.load %arg7[%c0_10, %c0_11] : memref<1x384xf32, #tpu.memory_space<vmem>>, vector<1x256xf32>
    tpu.vector_store %arg7[%c0_10, %c0_11], %10 {strides = array<i32>} : memref<1x384xf32, #tpu.memory_space<vmem>>, vector<1x256xf32>,
    %c0_i32_12 = arith.constant 0 : i32
    %12 = arith.cmpi eq, %arg1, %c0_i32_12 : i32
    %13 = arith.extui %12 : i1 to i32
    %c0_i32_13 = arith.constant 0 : i32
    %14 = arith.cmpi ne, %13, %c0_i32_13 : i32
    scf.if %14 {
      %c0_14 = arith.constant 0 : index
      %c0_15 = arith.constant 0 : index
      %15 = vector.load %arg6[%c0_14, %c0_15] : memref<1x384xf32, #tpu.memory_space<vmem>>, vector<1x384xf32>
      %c0_16 = arith.constant 0 : index
      %c0_17 = arith.constant 0 : index
      %16 = vector.load %arg7[%c0_16, %c0_17] : memref<1x384xf32, #tpu.memory_space<vmem>>, vector<1x384xf32>
      %cst_18 = arith.constant 0.000000e+00 : f32
      %17 = vector.broadcast %cst_18 : f32 to vector<1x384xf32>
      %cst_19 = arith.constant 0.000000e+00 : f32
      %18 = vector.broadcast %cst_19 : f32 to vector<1x384xf32>
      %c51_i32 = arith.constant 51 : i32
      %19 = tpu.dynamic_rotate %15 by %c51_i32 dim 1 : vector<1x384xf32>, i32 -> vector<1x384xf32>
      %c0_20 = arith.constant 0 : index
      %20 = memref.load %arg2[%c0_20] : memref<98xf32, #tpu.memory_space<smem>>
      %21 = vector.broadcast %20 : f32 to vector<1x384xf32>
      %22 = arith.mulf %21, %19 : vector<1x384xf32>
      %23 = arith.addf %18, %22 : vector<1x384xf32>
      %c35_i32 = arith.constant 35 : i32
      %24 = tpu.dynamic_rotate %15 by %c35_i32 dim 1 : vector<1x384xf32>, i32 -> vector<1x384xf32>
      %c7 = arith.constant 7 : index
      %25 = memref.load %arg2[%c7] : memref<98xf32, #tpu.memory_space<smem>>
      %26 = vector.broadcast %25 : f32 to vector<1x384xf32>
      %27 = arith.mulf %26, %24 : vector<1x384xf32>
      %28 = arith.addf %23, %27 : vector<1x384xf32>
      %c19_i32 = arith.constant 19 : i32
      %29 = tpu.dynamic_rotate %15 by %c19_i32 dim 1 : vector<1x384xf32>, i32 -> vector<1x384xf32>
      %c14 = arith.constant 14 : index
      %30 = memref.load %arg2[%c14] : memref<98xf32, #tpu.memory_space<smem>>
      %31 = vector.broadcast %30 : f32 to vector<1x384xf32>
      %32 = arith.mulf %31, %29 : vector<1x384xf32>
      %33 = arith.addf %28, %32 : vector<1x384xf32>
      %c3_i32 = arith.constant 3 : i32
      %34 = tpu.dynamic_rotate %15 by %c3_i32 dim 1 : vector<1x384xf32>, i32 -> vector<1x384xf32>
      %c21 = arith.constant 21 : index
      %35 = memref.load %arg2[%c21] : memref<98xf32, #tpu.memory_space<smem>>
      %36 = vector.broadcast %35 : f32 to vector<1x384xf32>
      %37 = arith.mulf %36, %34 : vector<1x384xf32>
      %38 = arith.addf %33, %37 : vector<1x384xf32>
      %c371_i32 = arith.constant 371 : i32
      %39 = tpu.dynamic_rotate %15 by %c371_i32 dim 1 : vector<1x384xf32>, i32 -> vector<1x384xf32>
      %c28 = arith.constant 28 : index
      %40 = memref.load %arg2[%c28] : memref<98xf32, #tpu.memory_space<smem>>
      %41 = vector.broadcast %40 : f32 to vector<1x384xf32>
      %42 = arith.mulf %41, %39 : vector<1x384xf32>
      %43 = arith.addf %38, %42 : vector<1x384xf32>
      %c355_i32 = arith.constant 355 : i32
      %44 = tpu.dynamic_rotate %15 by %c355_i32 dim 1 : vector<1x384xf32>, i32 -> vector<1x384xf32>
      %c35 = arith.constant 35 : index
      %45 = memref.load %arg2[%c35] : memref<98xf32, #tpu.memory_space<smem>>
      %46 = vector.broadcast %45 : f32 to vector<1x384xf32>
      %47 = arith.mulf %46, %44 : vector<1x384xf32>
      %48 = arith.addf %43, %47 : vector<1x384xf32>
      %c339_i32 = arith.constant 339 : i32
      %49 = tpu.dynamic_rotate %15 by %c339_i32 dim 1 : vector<1x384xf32>, i32 -> vector<1x384xf32>
      %c42 = arith.constant 42 : index
      %50 = memref.load %arg2[%c42] : memref<98xf32, #tpu.memory_space<smem>>
      %51 = vector.broadcast %50 : f32 to vector<1x384xf32>
      %52 = arith.mulf %51, %49 : vector<1x384xf32>
      %53 = arith.addf %48, %52 : vector<1x384xf32>
      %c51_i32_21 = arith.constant 51 : i32
      %54 = tpu.dynamic_rotate %16 by %c51_i32_21 dim 1 : vector<1x384xf32>, i32 -> vector<1x384xf32>
      %c49 = arith.constant 49 : index
      %55 = memref.load %arg2[%c49] : memref<98xf32, #tpu.memory_space<smem>>
      %56 = vector.broadcast %55 : f32 to vector<1x384xf32>
      %57 = arith.mulf %56, %54 : vector<1x384xf32>
      %58 = arith.addf %53, %57 : vector<1x384xf32>
      %c35_i32_22 = arith.constant 35 : i32
      %59 = tpu.dynamic_rotate %16 by %c35_i32_22 dim 1 : vector<1x384xf32>, i32 -> vector<1x384xf32>
      %c56 = arith.constant 56 : index
      %60 = memref.load %arg2[%c56] : memref<98xf32, #tpu.memory_space<smem>>
      %61 = vector.broadcast %60 : f32 to vector<1x384xf32>
      %62 = arith.mulf %61, %59 : vector<1x384xf32>
      %63 = arith.addf %58, %62 : vector<1x384xf32>
      %c19_i32_23 = arith.constant 19 : i32
      %64 = tpu.dynamic_rotate %16 by %c19_i32_23 dim 1 : vector<1x384xf32>, i32 -> vector<1x384xf32>
      %c63 = arith.constant 63 : index
      %65 = memref.load %arg2[%c63] : memref<98xf32, #tpu.memory_space<smem>>
      %66 = vector.broadcast %65 : f32 to vector<1x384xf32>
      %67 = arith.mulf %66, %64 : vector<1x384xf32>
      %68 = arith.addf %63, %67 : vector<1x384xf32>
      %c3_i32_24 = arith.constant 3 : i32
      %69 = tpu.dynamic_rotate %16 by %c3_i32_24 dim 1 : vector<1x384xf32>, i32 -> vector<1x384xf32>
      %c70 = arith.constant 70 : index
      %70 = memref.load %arg2[%c70] : memref<98xf32, #tpu.memory_space<smem>>
      %71 = vector.broadcast %70 : f32 to vector<1x384xf32>
      %72 = arith.mulf %71, %69 : vector<1x384xf32>
      %73 = arith.addf %68, %72 : vector<1x384xf32>
      %c371_i32_25 = arith.constant 371 : i32
      %74 = tpu.dynamic_rotate %16 by %c371_i32_25 dim 1 : vector<1x384xf32>, i32 -> vector<1x384xf32>
      %c77 = arith.constant 77 : index
      %75 = memref.load %arg2[%c77] : memref<98xf32, #tpu.memory_space<smem>>
      %76 = vector.broadcast %75 : f32 to vector<1x384xf32>
      %77 = arith.mulf %76, %74 : vector<1x384xf32>
      %78 = arith.addf %73, %77 : vector<1x384xf32>
      %c355_i32_26 = arith.constant 355 : i32
      %79 = tpu.dynamic_rotate %16 by %c355_i32_26 dim 1 : vector<1x384xf32>, i32 -> vector<1x384xf32>
      %c84 = arith.constant 84 : index
      %80 = memref.load %arg2[%c84] : memref<98xf32, #tpu.memory_space<smem>>
      %81 = vector.broadcast %80 : f32 to vector<1x384xf32>
      %82 = arith.mulf %81, %79 : vector<1x384xf32>
      %83 = arith.addf %78, %82 : vector<1x384xf32>
      %c339_i32_27 = arith.constant 339 : i32
      %84 = tpu.dynamic_rotate %16 by %c339_i32_27 dim 1 : vector<1x384xf32>, i32 -> vector<1x384xf32>
      %c91 = arith.constant 91 : index
      %85 = memref.load %arg2[%c91] : memref<98xf32, #tpu.memory_space<smem>>
      %86 = vector.broadcast %85 : f32 to vector<1x384xf32>
      %87 = arith.mulf %86, %84 : vector<1x384xf32>
      %88 = arith.addf %83, %87 : vector<1x384xf32>
      %c0_28 = arith.constant 0 : index
      %c0_29 = arith.constant 0 : index
      %89 = vector.load %arg3[%c0_28, %c0_29] : memref<7x384xf32, #tpu.memory_space<vmem>>, vector<1x384xf32>
      %90 = arith.mulf %89, %88 : vector<1x384xf32>
      %91 = arith.addf %17, %90 : vector<1x384xf32>
      %cst_30 = arith.constant 0.000000e+00 : f32
      %92 = vector.broadcast %cst_30 : f32 to vector<1x384xf32>
      %c50_i32 = arith.constant 50 : i32
      %93 = tpu.dynamic_rotate %15 by %c50_i32 dim 1 : vector<1x384xf32>, i32 -> vector<1x384xf32>
      %c1 = arith.constant 1 : index
      %94 = memref.load %arg2[%c1] : memref<98xf32, #tpu.memory_space<smem>>
      %95 = vector.broadcast %94 : f32 to vector<1x384xf32>
      %96 = arith.mulf %95, %93 : vector<1x384xf32>
      %97 = arith.addf %92, %96 : vector<1x384xf32>
      %c34_i32 = arith.constant 34 : i32
      %98 = tpu.dynamic_rotate %15 by %c34_i32 dim 1 : vector<1x384xf32>, i32 -> vector<1x384xf32>
      %c8 = arith.constant 8 : index
      %99 = memref.load %arg2[%c8] : memref<98xf32, #tpu.memory_space<smem>>
      %100 = vector.broadcast %99 : f32 to vector<1x384xf32>
      %101 = arith.mulf %100, %98 : vector<1x384xf32>
      %102 = arith.addf %97, %101 : vector<1x384xf32>
      %c18_i32 = arith.constant 18 : i32
      %103 = tpu.dynamic_rotate %15 by %c18_i32 dim 1 : vector<1x384xf32>, i32 -> vector<1x384xf32>
      %c15 = arith.constant 15 : index
      %104 = memref.load %arg2[%c15] : memref<98xf32, #tpu.memory_space<smem>>
      %105 = vector.broadcast %104 : f32 to vector<1x384xf32>
      %106 = arith.mulf %105, %103 : vector<1x384xf32>
      %107 = arith.addf %102, %106 : vector<1x384xf32>
      %c2_i32 = arith.constant 2 : i32
      %108 = tpu.dynamic_rotate %15 by %c2_i32 dim 1 : vector<1x384xf32>, i32 -> vector<1x384xf32>
      %c22 = arith.constant 22 : index
      %109 = memref.load %arg2[%c22] : memref<98xf32, #tpu.memory_space<smem>>
      %110 = vector.broadcast %109 : f32 to vector<1x384xf32>
      %111 = arith.mulf %110, %108 : vector<1x384xf32>
      %112 = arith.addf %107, %111 : vector<1x384xf32>
      %c370_i32 = arith.constant 370 : i32
      %113 = tpu.dynamic_rotate %15 by %c370_i32 dim 1 : vector<1x384xf32>, i32 -> vector<1x384xf32>
      %c29 = arith.constant 29 : index
      %114 = memref.load %arg2[%c29] : memref<98xf32, #tpu.memory_space<smem>>
      %115 = vector.broadcast %114 : f32 to vector<1x384xf32>
      %116 = arith.mulf %115, %113 : vector<1x384xf32>
      %117 = arith.addf %112, %116 : vector<1x384xf32>
      %c354_i32 = arith.constant 354 : i32
      %118 = tpu.dynamic_rotate %15 by %c354_i32 dim 1 : vector<1x384xf32>, i32 -> vector<1x384xf32>
      %c36 = arith.constant 36 : index
      %119 = memref.load %arg2[%c36] : memref<98xf32, #tpu.memory_space<smem>>
      %120 = vector.broadcast %119 : f32 to vector<1x384xf32>
      %121 = arith.mulf %120, %118 : vector<1x384xf32>
      %122 = arith.addf %117, %121 : vector<1x384xf32>
      %c338_i32 = arith.constant 338 : i32
      %123 = tpu.dynamic_rotate %15 by %c338_i32 dim 1 : vector<1x384xf32>, i32 -> vector<1x384xf32>
      %c43 = arith.constant 43 : index
      %124 = memref.load %arg2[%c43] : memref<98xf32, #tpu.memory_space<smem>>
      %125 = vector.broadcast %124 : f32 to vector<1x384xf32>
      %126 = arith.mulf %125, %123 : vector<1x384xf32>
      %127 = arith.addf %122, %126 : vector<1x384xf32>
      %c50_i32_31 = arith.constant 50 : i32
      %128 = tpu.dynamic_rotate %16 by %c50_i32_31 dim 1 : vector<1x384xf32>, i32 -> vector<1x384xf32>
      %c50 = arith.constant 50 : index
      %129 = memref.load %arg2[%c50] : memref<98xf32, #tpu.memory_space<smem>>
      %130 = vector.broadcast %129 : f32 to vector<1x384xf32>
      %131 = arith.mulf %130, %128 : vector<1x384xf32>
      %132 = arith.addf %127, %131 : vector<1x384xf32>
      %c34_i32_32 = arith.constant 34 : i32
      %133 = tpu.dynamic_rotate %16 by %c34_i32_32 dim 1 : vector<1x384xf32>, i32 -> vector<1x384xf32>
      %c57 = arith.constant 57 : index
      %134 = memref.load %arg2[%c57] : memref<98xf32, #tpu.memory_space<smem>>
      %135 = vector.broadcast %134 : f32 to vector<1x384xf32>
      %136 = arith.mulf %135, %133 : vector<1x384xf32>
      %137 = arith.addf %132, %136 : vector<1x384xf32>
      %c18_i32_33 = arith.constant 18 : i32
      %138 = tpu.dynamic_rotate %16 by %c18_i32_33 dim 1 : vector<1x384xf32>, i32 -> vector<1x384xf32>
      %c64 = arith.constant 64 : index
      %139 = memref.load %arg2[%c64] : memref<98xf32, #tpu.memory_space<smem>>
      %140 = vector.broadcast %139 : f32 to vector<1x384xf32>
      %141 = arith.mulf %140, %138 : vector<1x384xf32>
      %142 = arith.addf %137, %141 : vector<1x384xf32>
      %c2_i32_34 = arith.constant 2 : i32
      %143 = tpu.dynamic_rotate %16 by %c2_i32_34 dim 1 : vector<1x384xf32>, i32 -> vector<1x384xf32>
      %c71 = arith.constant 71 : index
      %144 = memref.load %arg2[%c71] : memref<98xf32, #tpu.memory_space<smem>>
      %145 = vector.broadcast %144 : f32 to vector<1x384xf32>
      %146 = arith.mulf %145, %143 : vector<1x384xf32>
      %147 = arith.addf %142, %146 : vector<1x384xf32>
      %c370_i32_35 = arith.constant 370 : i32
      %148 = tpu.dynamic_rotate %16 by %c370_i32_35 dim 1 : vector<1x384xf32>, i32 -> vector<1x384xf32>
      %c78 = arith.constant 78 : index
      %149 = memref.load %arg2[%c78] : memref<98xf32, #tpu.memory_space<smem>>
      %150 = vector.broadcast %149 : f32 to vector<1x384xf32>
      %151 = arith.mulf %150, %148 : vector<1x384xf32>
      %152 = arith.addf %147, %151 : vector<1x384xf32>
      %c354_i32_36 = arith.constant 354 : i32
      %153 = tpu.dynamic_rotate %16 by %c354_i32_36 dim 1 : vector<1x384xf32>, i32 -> vector<1x384xf32>
      %c85 = arith.constant 85 : index
      %154 = memref.load %arg2[%c85] : memref<98xf32, #tpu.memory_space<smem>>
      %155 = vector.broadcast %154 : f32 to vector<1x384xf32>
      %156 = arith.mulf %155, %153 : vector<1x384xf32>
      %157 = arith.addf %152, %156 : vector<1x384xf32>
      %c338_i32_37 = arith.constant 338 : i32
      %158 = tpu.dynamic_rotate %16 by %c338_i32_37 dim 1 : vector<1x384xf32>, i32 -> vector<1x384xf32>
      %c92 = arith.constant 92 : index
      %159 = memref.load %arg2[%c92] : memref<98xf32, #tpu.memory_space<smem>>
      %160 = vector.broadcast %159 : f32 to vector<1x384xf32>
      %161 = arith.mulf %160, %158 : vector<1x384xf32>
      %162 = arith.addf %157, %161 : vector<1x384xf32>
      %c1_38 = arith.constant 1 : index
      %c0_39 = arith.constant 0 : index
      %163 = vector.load %arg3[%c1_38, %c0_39] : memref<7x384xf32, #tpu.memory_space<vmem>>, vector<1x384xf32>
      %164 = arith.mulf %163, %162 : vector<1x384xf32>
      %165 = arith.addf %91, %164 : vector<1x384xf32>
      %cst_40 = arith.constant 0.000000e+00 : f32
      %166 = vector.broadcast %cst_40 : f32 to vector<1x384xf32>
      %c49_i32 = arith.constant 49 : i32
      %167 = tpu.dynamic_rotate %15 by %c49_i32 dim 1 : vector<1x384xf32>, i32 -> vector<1x384xf32>
      %c2 = arith.constant 2 : index
      %168 = memref.load %arg2[%c2] : memref<98xf32, #tpu.memory_space<smem>>
      %169 = vector.broadcast %168 : f32 to vector<1x384xf32>
      %170 = arith.mulf %169, %167 : vector<1x384xf32>
      %171 = arith.addf %166, %170 : vector<1x384xf32>
      %c33_i32 = arith.constant 33 : i32
      %172 = tpu.dynamic_rotate %15 by %c33_i32 dim 1 : vector<1x384xf32>, i32 -> vector<1x384xf32>
      %c9 = arith.constant 9 : index
      %173 = memref.load %arg2[%c9] : memref<98xf32, #tpu.memory_space<smem>>
      %174 = vector.broadcast %173 : f32 to vector<1x384xf32>
      %175 = arith.mulf %174, %172 : vector<1x384xf32>
      %176 = arith.addf %171, %175 : vector<1x384xf32>
      %c17_i32 = arith.constant 17 : i32
      %177 = tpu.dynamic_rotate %15 by %c17_i32 dim 1 : vector<1x384xf32>, i32 -> vector<1x384xf32>
      %c16 = arith.constant 16 : index
      %178 = memref.load %arg2[%c16] : memref<98xf32, #tpu.memory_space<smem>>
      %179 = vector.broadcast %178 : f32 to vector<1x384xf32>
      %180 = arith.mulf %179, %177 : vector<1x384xf32>
      %181 = arith.addf %176, %180 : vector<1x384xf32>
      %c1_i32 = arith.constant 1 : i32
      %182 = tpu.dynamic_rotate %15 by %c1_i32 dim 1 : vector<1x384xf32>, i32 -> vector<1x384xf32>
      %c23 = arith.constant 23 : index
      %183 = memref.load %arg2[%c23] : memref<98xf32, #tpu.memory_space<smem>>
      %184 = vector.broadcast %183 : f32 to vector<1x384xf32>
      %185 = arith.mulf %184, %182 : vector<1x384xf32>
      %186 = arith.addf %181, %185 : vector<1x384xf32>
      %c369_i32 = arith.constant 369 : i32
      %187 = tpu.dynamic_rotate %15 by %c369_i32 dim 1 : vector<1x384xf32>, i32 -> vector<1x384xf32>
      %c30 = arith.constant 30 : index
      %188 = memref.load %arg2[%c30] : memref<98xf32, #tpu.memory_space<smem>>
      %189 = vector.broadcast %188 : f32 to vector<1x384xf32>
      %190 = arith.mulf %189, %187 : vector<1x384xf32>
      %191 = arith.addf %186, %190 : vector<1x384xf32>
      %c353_i32 = arith.constant 353 : i32
      %192 = tpu.dynamic_rotate %15 by %c353_i32 dim 1 : vector<1x384xf32>, i32 -> vector<1x384xf32>
      %c37 = arith.constant 37 : index
      %193 = memref.load %arg2[%c37] : memref<98xf32, #tpu.memory_space<smem>>
      %194 = vector.broadcast %193 : f32 to vector<1x384xf32>
      %195 = arith.mulf %194, %192 : vector<1x384xf32>
      %196 = arith.addf %191, %195 : vector<1x384xf32>
      %c337_i32 = arith.constant 337 : i32
      %197 = tpu.dynamic_rotate %15 by %c337_i32 dim 1 : vector<1x384xf32>, i32 -> vector<1x384xf32>
      %c44 = arith.constant 44 : index
      %198 = memref.load %arg2[%c44] : memref<98xf32, #tpu.memory_space<smem>>
      %199 = vector.broadcast %198 : f32 to vector<1x384xf32>
      %200 = arith.mulf %199, %197 : vector<1x384xf32>
      %201 = arith.addf %196, %200 : vector<1x384xf32>
      %c49_i32_41 = arith.constant 49 : i32
      %202 = tpu.dynamic_rotate %16 by %c49_i32_41 dim 1 : vector<1x384xf32>, i32 -> vector<1x384xf32>
      %c51 = arith.constant 51 : index
      %203 = memref.load %arg2[%c51] : memref<98xf32, #tpu.memory_space<smem>>
      %204 = vector.broadcast %203 : f32 to vector<1x384xf32>
      %205 = arith.mulf %204, %202 : vector<1x384xf32>
      %206 = arith.addf %201, %205 : vector<1x384xf32>
      %c33_i32_42 = arith.constant 33 : i32
      %207 = tpu.dynamic_rotate %16 by %c33_i32_42 dim 1 : vector<1x384xf32>, i32 -> vector<1x384xf32>
      %c58 = arith.constant 58 : index
      %208 = memref.load %arg2[%c58] : memref<98xf32, #tpu.memory_space<smem>>
      %209 = vector.broadcast %208 : f32 to vector<1x384xf32>
      %210 = arith.mulf %209, %207 : vector<1x384xf32>
      %211 = arith.addf %206, %210 : vector<1x384xf32>
      %c17_i32_43 = arith.constant 17 : i32
      %212 = tpu.dynamic_rotate %16 by %c17_i32_43 dim 1 : vector<1x384xf32>, i32 -> vector<1x384xf32>
      %c65 = arith.constant 65 : index
      %213 = memref.load %arg2[%c65] : memref<98xf32, #tpu.memory_space<smem>>
      %214 = vector.broadcast %213 : f32 to vector<1x384xf32>
      %215 = arith.mulf %214, %212 : vector<1x384xf32>
      %216 = arith.addf %211, %215 : vector<1x384xf32>
      %c1_i32_44 = arith.constant 1 : i32
      %217 = tpu.dynamic_rotate %16 by %c1_i32_44 dim 1 : vector<1x384xf32>, i32 -> vector<1x384xf32>
      %c72 = arith.constant 72 : index
      %218 = memref.load %arg2[%c72] : memref<98xf32, #tpu.memory_space<smem>>
      %219 = vector.broadcast %218 : f32 to vector<1x384xf32>
      %220 = arith.mulf %219, %217 : vector<1x384xf32>
      %221 = arith.addf %216, %220 : vector<1x384xf32>
      %c369_i32_45 = arith.constant 369 : i32
      %222 = tpu.dynamic_rotate %16 by %c369_i32_45 dim 1 : vector<1x384xf32>, i32 -> vector<1x384xf32>
      %c79 = arith.constant 79 : index
      %223 = memref.load %arg2[%c79] : memref<98xf32, #tpu.memory_space<smem>>
      %224 = vector.broadcast %223 : f32 to vector<1x384xf32>
      %225 = arith.mulf %224, %222 : vector<1x384xf32>
      %226 = arith.addf %221, %225 : vector<1x384xf32>
      %c353_i32_46 = arith.constant 353 : i32
      %227 = tpu.dynamic_rotate %16 by %c353_i32_46 dim 1 : vector<1x384xf32>, i32 -> vector<1x384xf32>
      %c86 = arith.constant 86 : index
      %228 = memref.load %arg2[%c86] : memref<98xf32, #tpu.memory_space<smem>>
      %229 = vector.broadcast %228 : f32 to vector<1x384xf32>
      %230 = arith.mulf %229, %227 : vector<1x384xf32>
      %231 = arith.addf %226, %230 : vector<1x384xf32>
      %c337_i32_47 = arith.constant 337 : i32
      %232 = tpu.dynamic_rotate %16 by %c337_i32_47 dim 1 : vector<1x384xf32>, i32 -> vector<1x384xf32>
      %c93 = arith.constant 93 : index
      %233 = memref.load %arg2[%c93] : memref<98xf32, #tpu.memory_space<smem>>
      %234 = vector.broadcast %233 : f32 to vector<1x384xf32>
      %235 = arith.mulf %234, %232 : vector<1x384xf32>
      %236 = arith.addf %231, %235 : vector<1x384xf32>
      %c2_48 = arith.constant 2 : index
      %c0_49 = arith.constant 0 : index
      %237 = vector.load %arg3[%c2_48, %c0_49] : memref<7x384xf32, #tpu.memory_space<vmem>>, vector<1x384xf32>
      %238 = arith.mulf %237, %236 : vector<1x384xf32>
      %239 = arith.addf %165, %238 : vector<1x384xf32>
      %cst_50 = arith.constant 0.000000e+00 : f32
      %240 = vector.broadcast %cst_50 : f32 to vector<1x384xf32>
      %c48_i32 = arith.constant 48 : i32
      %241 = tpu.dynamic_rotate %15 by %c48_i32 dim 1 : vector<1x384xf32>, i32 -> vector<1x384xf32>
      %c3 = arith.constant 3 : index
      %242 = memref.load %arg2[%c3] : memref<98xf32, #tpu.memory_space<smem>>
      %243 = vector.broadcast %242 : f32 to vector<1x384xf32>
      %244 = arith.mulf %243, %241 : vector<1x384xf32>
      %245 = arith.addf %240, %244 : vector<1x384xf32>
      %c32_i32 = arith.constant 32 : i32
      %246 = tpu.dynamic_rotate %15 by %c32_i32 dim 1 : vector<1x384xf32>, i32 -> vector<1x384xf32>
      %c10 = arith.constant 10 : index
      %247 = memref.load %arg2[%c10] : memref<98xf32, #tpu.memory_space<smem>>
      %248 = vector.broadcast %247 : f32 to vector<1x384xf32>
      %249 = arith.mulf %248, %246 : vector<1x384xf32>
      %250 = arith.addf %245, %249 : vector<1x384xf32>
      %c16_i32 = arith.constant 16 : i32
      %251 = tpu.dynamic_rotate %15 by %c16_i32 dim 1 : vector<1x384xf32>, i32 -> vector<1x384xf32>
      %c17 = arith.constant 17 : index
      %252 = memref.load %arg2[%c17] : memref<98xf32, #tpu.memory_space<smem>>
      %253 = vector.broadcast %252 : f32 to vector<1x384xf32>
      %254 = arith.mulf %253, %251 : vector<1x384xf32>
      %255 = arith.addf %250, %254 : vector<1x384xf32>
      %c24 = arith.constant 24 : index
      %256 = memref.load %arg2[%c24] : memref<98xf32, #tpu.memory_space<smem>>
      %257 = vector.broadcast %256 : f32 to vector<1x384xf32>
      %258 = arith.mulf %257, %15 : vector<1x384xf32>
      %259 = arith.addf %255, %258 : vector<1x384xf32>
      %c368_i32 = arith.constant 368 : i32
      %260 = tpu.dynamic_rotate %15 by %c368_i32 dim 1 : vector<1x384xf32>, i32 -> vector<1x384xf32>
      %c31 = arith.constant 31 : index
      %261 = memref.load %arg2[%c31] : memref<98xf32, #tpu.memory_space<smem>>
      %262 = vector.broadcast %261 : f32 to vector<1x384xf32>
      %263 = arith.mulf %262, %260 : vector<1x384xf32>
      %264 = arith.addf %259, %263 : vector<1x384xf32>
      %c352_i32 = arith.constant 352 : i32
      %265 = tpu.dynamic_rotate %15 by %c352_i32 dim 1 : vector<1x384xf32>, i32 -> vector<1x384xf32>
      %c38 = arith.constant 38 : index
      %266 = memref.load %arg2[%c38] : memref<98xf32, #tpu.memory_space<smem>>
      %267 = vector.broadcast %266 : f32 to vector<1x384xf32>
      %268 = arith.mulf %267, %265 : vector<1x384xf32>
      %269 = arith.addf %264, %268 : vector<1x384xf32>
      %c336_i32 = arith.constant 336 : i32
      %270 = tpu.dynamic_rotate %15 by %c336_i32 dim 1 : vector<1x384xf32>, i32 -> vector<1x384xf32>
      %c45 = arith.constant 45 : index
      %271 = memref.load %arg2[%c45] : memref<98xf32, #tpu.memory_space<smem>>
      %272 = vector.broadcast %271 : f32 to vector<1x384xf32>
      %273 = arith.mulf %272, %270 : vector<1x384xf32>
      %274 = arith.addf %269, %273 : vector<1x384xf32>
      %c48_i32_51 = arith.constant 48 : i32
      %275 = tpu.dynamic_rotate %16 by %c48_i32_51 dim 1 : vector<1x384xf32>, i32 -> vector<1x384xf32>
      %c52 = arith.constant 52 : index
      %276 = memref.load %arg2[%c52] : memref<98xf32, #tpu.memory_space<smem>>
      %277 = vector.broadcast %276 : f32 to vector<1x384xf32>
      %278 = arith.mulf %277, %275 : vector<1x384xf32>
      %279 = arith.addf %274, %278 : vector<1x384xf32>
      %c32_i32_52 = arith.constant 32 : i32
      %280 = tpu.dynamic_rotate %16 by %c32_i32_52 dim 1 : vector<1x384xf32>, i32 -> vector<1x384xf32>
      %c59 = arith.constant 59 : index
      %281 = memref.load %arg2[%c59] : memref<98xf32, #tpu.memory_space<smem>>
      %282 = vector.broadcast %281 : f32 to vector<1x384xf32>
      %283 = arith.mulf %282, %280 : vector<1x384xf32>
      %284 = arith.addf %279, %283 : vector<1x384xf32>
      %c16_i32_53 = arith.constant 16 : i32
      %285 = tpu.dynamic_rotate %16 by %c16_i32_53 dim 1 : vector<1x384xf32>, i32 -> vector<1x384xf32>
      %c66 = arith.constant 66 : index
      %286 = memref.load %arg2[%c66] : memref<98xf32, #tpu.memory_space<smem>>
      %287 = vector.broadcast %286 : f32 to vector<1x384xf32>
      %288 = arith.mulf %287, %285 : vector<1x384xf32>
      %289 = arith.addf %284, %288 : vector<1x384xf32>
      %c73 = arith.constant 73 : index
      %290 = memref.load %arg2[%c73] : memref<98xf32, #tpu.memory_space<smem>>
      %291 = vector.broadcast %290 : f32 to vector<1x384xf32>
      %292 = arith.mulf %291, %16 : vector<1x384xf32>
      %293 = arith.addf %289, %292 : vector<1x384xf32>
      %c368_i32_54 = arith.constant 368 : i32
      %294 = tpu.dynamic_rotate %16 by %c368_i32_54 dim 1 : vector<1x384xf32>, i32 -> vector<1x384xf32>
      %c80 = arith.constant 80 : index
      %295 = memref.load %arg2[%c80] : memref<98xf32, #tpu.memory_space<smem>>
      %296 = vector.broadcast %295 : f32 to vector<1x384xf32>
      %297 = arith.mulf %296, %294 : vector<1x384xf32>
      %298 = arith.addf %293, %297 : vector<1x384xf32>
      %c352_i32_55 = arith.constant 352 : i32
      %299 = tpu.dynamic_rotate %16 by %c352_i32_55 dim 1 : vector<1x384xf32>, i32 -> vector<1x384xf32>
      %c87 = arith.constant 87 : index
      %300 = memref.load %arg2[%c87] : memref<98xf32, #tpu.memory_space<smem>>
      %301 = vector.broadcast %300 : f32 to vector<1x384xf32>
      %302 = arith.mulf %301, %299 : vector<1x384xf32>
      %303 = arith.addf %298, %302 : vector<1x384xf32>
      %c336_i32_56 = arith.constant 336 : i32
      %304 = tpu.dynamic_rotate %16 by %c336_i32_56 dim 1 : vector<1x384xf32>, i32 -> vector<1x384xf32>
      %c94 = arith.constant 94 : index
      %305 = memref.load %arg2[%c94] : memref<98xf32, #tpu.memory_space<smem>>
      %306 = vector.broadcast %305 : f32 to vector<1x384xf32>
      %307 = arith.mulf %306, %304 : vector<1x384xf32>
      %308 = arith.addf %303, %307 : vector<1x384xf32>
      %c3_57 = arith.constant 3 : index
      %c0_58 = arith.constant 0 : index
      %309 = vector.load %arg3[%c3_57, %c0_58] : memref<7x384xf32, #tpu.memory_space<vmem>>, vector<1x384xf32>
      %310 = arith.mulf %309, %308 : vector<1x384xf32>
      %311 = arith.addf %239, %310 : vector<1x384xf32>
      %cst_59 = arith.constant 0.000000e+00 : f32
      %312 = vector.broadcast %cst_59 : f32 to vector<1x384xf32>
      %c47_i32 = arith.constant 47 : i32
      %313 = tpu.dynamic_rotate %15 by %c47_i32 dim 1 : vector<1x384xf32>, i32 -> vector<1x384xf32>
      %c4 = arith.constant 4 : index
      %314 = memref.load %arg2[%c4] : memref<98xf32, #tpu.memory_space<smem>>
      %315 = vector.broadcast %314 : f32 to vector<1x384xf32>
      %316 = arith.mulf %315, %313 : vector<1x384xf32>
      %317 = arith.addf %312, %316 : vector<1x384xf32>
      %c31_i32 = arith.constant 31 : i32
      %318 = tpu.dynamic_rotate %15 by %c31_i32 dim 1 : vector<1x384xf32>, i32 -> vector<1x384xf32>
      %c11 = arith.constant 11 : index
      %319 = memref.load %arg2[%c11] : memref<98xf32, #tpu.memory_space<smem>>
      %320 = vector.broadcast %319 : f32 to vector<1x384xf32>
      %321 = arith.mulf %320, %318 : vector<1x384xf32>
      %322 = arith.addf %317, %321 : vector<1x384xf32>
      %c15_i32 = arith.constant 15 : i32
      %323 = tpu.dynamic_rotate %15 by %c15_i32 dim 1 : vector<1x384xf32>, i32 -> vector<1x384xf32>
      %c18 = arith.constant 18 : index
      %324 = memref.load %arg2[%c18] : memref<98xf32, #tpu.memory_space<smem>>
      %325 = vector.broadcast %324 : f32 to vector<1x384xf32>
      %326 = arith.mulf %325, %323 : vector<1x384xf32>
      %327 = arith.addf %322, %326 : vector<1x384xf32>
      %c383_i32 = arith.constant 383 : i32
      %328 = tpu.dynamic_rotate %15 by %c383_i32 dim 1 : vector<1x384xf32>, i32 -> vector<1x384xf32>
      %c25 = arith.constant 25 : index
      %329 = memref.load %arg2[%c25] : memref<98xf32, #tpu.memory_space<smem>>
      %330 = vector.broadcast %329 : f32 to vector<1x384xf32>
      %331 = arith.mulf %330, %328 : vector<1x384xf32>
      %332 = arith.addf %327, %331 : vector<1x384xf32>
      %c367_i32 = arith.constant 367 : i32
      %333 = tpu.dynamic_rotate %15 by %c367_i32 dim 1 : vector<1x384xf32>, i32 -> vector<1x384xf32>
      %c32 = arith.constant 32 : index
      %334 = memref.load %arg2[%c32] : memref<98xf32, #tpu.memory_space<smem>>
      %335 = vector.broadcast %334 : f32 to vector<1x384xf32>
      %336 = arith.mulf %335, %333 : vector<1x384xf32>
      %337 = arith.addf %332, %336 : vector<1x384xf32>
      %c351_i32 = arith.constant 351 : i32
      %338 = tpu.dynamic_rotate %15 by %c351_i32 dim 1 : vector<1x384xf32>, i32 -> vector<1x384xf32>
      %c39 = arith.constant 39 : index
      %339 = memref.load %arg2[%c39] : memref<98xf32, #tpu.memory_space<smem>>
      %340 = vector.broadcast %339 : f32 to vector<1x384xf32>
      %341 = arith.mulf %340, %338 : vector<1x384xf32>
      %342 = arith.addf %337, %341 : vector<1x384xf32>
      %c335_i32 = arith.constant 335 : i32
      %343 = tpu.dynamic_rotate %15 by %c335_i32 dim 1 : vector<1x384xf32>, i32 -> vector<1x384xf32>
      %c46 = arith.constant 46 : index
      %344 = memref.load %arg2[%c46] : memref<98xf32, #tpu.memory_space<smem>>
      %345 = vector.broadcast %344 : f32 to vector<1x384xf32>
      %346 = arith.mulf %345, %343 : vector<1x384xf32>
      %347 = arith.addf %342, %346 : vector<1x384xf32>
      %c47_i32_60 = arith.constant 47 : i32
      %348 = tpu.dynamic_rotate %16 by %c47_i32_60 dim 1 : vector<1x384xf32>, i32 -> vector<1x384xf32>
      %c53 = arith.constant 53 : index
      %349 = memref.load %arg2[%c53] : memref<98xf32, #tpu.memory_space<smem>>
      %350 = vector.broadcast %349 : f32 to vector<1x384xf32>
      %351 = arith.mulf %350, %348 : vector<1x384xf32>
      %352 = arith.addf %347, %351 : vector<1x384xf32>
      %c31_i32_61 = arith.constant 31 : i32
      %353 = tpu.dynamic_rotate %16 by %c31_i32_61 dim 1 : vector<1x384xf32>, i32 -> vector<1x384xf32>
      %c60 = arith.constant 60 : index
      %354 = memref.load %arg2[%c60] : memref<98xf32, #tpu.memory_space<smem>>
      %355 = vector.broadcast %354 : f32 to vector<1x384xf32>
      %356 = arith.mulf %355, %353 : vector<1x384xf32>
      %357 = arith.addf %352, %356 : vector<1x384xf32>
      %c15_i32_62 = arith.constant 15 : i32
      %358 = tpu.dynamic_rotate %16 by %c15_i32_62 dim 1 : vector<1x384xf32>, i32 -> vector<1x384xf32>
      %c67 = arith.constant 67 : index
      %359 = memref.load %arg2[%c67] : memref<98xf32, #tpu.memory_space<smem>>
      %360 = vector.broadcast %359 : f32 to vector<1x384xf32>
      %361 = arith.mulf %360, %358 : vector<1x384xf32>
      %362 = arith.addf %357, %361 : vector<1x384xf32>
      %c383_i32_63 = arith.constant 383 : i32
      %363 = tpu.dynamic_rotate %16 by %c383_i32_63 dim 1 : vector<1x384xf32>, i32 -> vector<1x384xf32>
      %c74 = arith.constant 74 : index
      %364 = memref.load %arg2[%c74] : memref<98xf32, #tpu.memory_space<smem>>
      %365 = vector.broadcast %364 : f32 to vector<1x384xf32>
      %366 = arith.mulf %365, %363 : vector<1x384xf32>
      %367 = arith.addf %362, %366 : vector<1x384xf32>
      %c367_i32_64 = arith.constant 367 : i32
      %368 = tpu.dynamic_rotate %16 by %c367_i32_64 dim 1 : vector<1x384xf32>, i32 -> vector<1x384xf32>
      %c81 = arith.constant 81 : index
      %369 = memref.load %arg2[%c81] : memref<98xf32, #tpu.memory_space<smem>>
      %370 = vector.broadcast %369 : f32 to vector<1x384xf32>
      %371 = arith.mulf %370, %368 : vector<1x384xf32>
      %372 = arith.addf %367, %371 : vector<1x384xf32>
      %c351_i32_65 = arith.constant 351 : i32
      %373 = tpu.dynamic_rotate %16 by %c351_i32_65 dim 1 : vector<1x384xf32>, i32 -> vector<1x384xf32>
      %c88 = arith.constant 88 : index
      %374 = memref.load %arg2[%c88] : memref<98xf32, #tpu.memory_space<smem>>
      %375 = vector.broadcast %374 : f32 to vector<1x384xf32>
      %376 = arith.mulf %375, %373 : vector<1x384xf32>
      %377 = arith.addf %372, %376 : vector<1x384xf32>
      %c335_i32_66 = arith.constant 335 : i32
      %378 = tpu.dynamic_rotate %16 by %c335_i32_66 dim 1 : vector<1x384xf32>, i32 -> vector<1x384xf32>
      %c95 = arith.constant 95 : index
      %379 = memref.load %arg2[%c95] : memref<98xf32, #tpu.memory_space<smem>>
      %380 = vector.broadcast %379 : f32 to vector<1x384xf32>
      %381 = arith.mulf %380, %378 : vector<1x384xf32>
      %382 = arith.addf %377, %381 : vector<1x384xf32>
      %c4_67 = arith.constant 4 : index
      %c0_68 = arith.constant 0 : index
      %383 = vector.load %arg3[%c4_67, %c0_68] : memref<7x384xf32, #tpu.memory_space<vmem>>, vector<1x384xf32>
      %384 = arith.mulf %383, %382 : vector<1x384xf32>
      %385 = arith.addf %311, %384 : vector<1x384xf32>
      %cst_69 = arith.constant 0.000000e+00 : f32
      %386 = vector.broadcast %cst_69 : f32 to vector<1x384xf32>
      %c46_i32 = arith.constant 46 : i32
      %387 = tpu.dynamic_rotate %15 by %c46_i32 dim 1 : vector<1x384xf32>, i32 -> vector<1x384xf32>
      %c5 = arith.constant 5 : index
      %388 = memref.load %arg2[%c5] : memref<98xf32, #tpu.memory_space<smem>>
      %389 = vector.broadcast %388 : f32 to vector<1x384xf32>
      %390 = arith.mulf %389, %387 : vector<1x384xf32>
      %391 = arith.addf %386, %390 : vector<1x384xf32>
      %c30_i32 = arith.constant 30 : i32
      %392 = tpu.dynamic_rotate %15 by %c30_i32 dim 1 : vector<1x384xf32>, i32 -> vector<1x384xf32>
      %c12 = arith.constant 12 : index
      %393 = memref.load %arg2[%c12] : memref<98xf32, #tpu.memory_space<smem>>
      %394 = vector.broadcast %393 : f32 to vector<1x384xf32>
      %395 = arith.mulf %394, %392 : vector<1x384xf32>
      %396 = arith.addf %391, %395 : vector<1x384xf32>
      %c14_i32 = arith.constant 14 : i32
      %397 = tpu.dynamic_rotate %15 by %c14_i32 dim 1 : vector<1x384xf32>, i32 -> vector<1x384xf32>
      %c19 = arith.constant 19 : index
      %398 = memref.load %arg2[%c19] : memref<98xf32, #tpu.memory_space<smem>>
      %399 = vector.broadcast %398 : f32 to vector<1x384xf32>
      %400 = arith.mulf %399, %397 : vector<1x384xf32>
      %401 = arith.addf %396, %400 : vector<1x384xf32>
      %c382_i32 = arith.constant 382 : i32
      %402 = tpu.dynamic_rotate %15 by %c382_i32 dim 1 : vector<1x384xf32>, i32 -> vector<1x384xf32>
      %c26 = arith.constant 26 : index
      %403 = memref.load %arg2[%c26] : memref<98xf32, #tpu.memory_space<smem>>
      %404 = vector.broadcast %403 : f32 to vector<1x384xf32>
      %405 = arith.mulf %404, %402 : vector<1x384xf32>
      %406 = arith.addf %401, %405 : vector<1x384xf32>
      %c366_i32 = arith.constant 366 : i32
      %407 = tpu.dynamic_rotate %15 by %c366_i32 dim 1 : vector<1x384xf32>, i32 -> vector<1x384xf32>
      %c33 = arith.constant 33 : index
      %408 = memref.load %arg2[%c33] : memref<98xf32, #tpu.memory_space<smem>>
      %409 = vector.broadcast %408 : f32 to vector<1x384xf32>
      %410 = arith.mulf %409, %407 : vector<1x384xf32>
      %411 = arith.addf %406, %410 : vector<1x384xf32>
      %c350_i32 = arith.constant 350 : i32
      %412 = tpu.dynamic_rotate %15 by %c350_i32 dim 1 : vector<1x384xf32>, i32 -> vector<1x384xf32>
      %c40 = arith.constant 40 : index
      %413 = memref.load %arg2[%c40] : memref<98xf32, #tpu.memory_space<smem>>
      %414 = vector.broadcast %413 : f32 to vector<1x384xf32>
      %415 = arith.mulf %414, %412 : vector<1x384xf32>
      %416 = arith.addf %411, %415 : vector<1x384xf32>
      %c334_i32 = arith.constant 334 : i32
      %417 = tpu.dynamic_rotate %15 by %c334_i32 dim 1 : vector<1x384xf32>, i32 -> vector<1x384xf32>
      %c47 = arith.constant 47 : index
      %418 = memref.load %arg2[%c47] : memref<98xf32, #tpu.memory_space<smem>>
      %419 = vector.broadcast %418 : f32 to vector<1x384xf32>
      %420 = arith.mulf %419, %417 : vector<1x384xf32>
      %421 = arith.addf %416, %420 : vector<1x384xf32>
      %c46_i32_70 = arith.constant 46 : i32
      %422 = tpu.dynamic_rotate %16 by %c46_i32_70 dim 1 : vector<1x384xf32>, i32 -> vector<1x384xf32>
      %c54 = arith.constant 54 : index
      %423 = memref.load %arg2[%c54] : memref<98xf32, #tpu.memory_space<smem>>
      %424 = vector.broadcast %423 : f32 to vector<1x384xf32>
      %425 = arith.mulf %424, %422 : vector<1x384xf32>
      %426 = arith.addf %421, %425 : vector<1x384xf32>
      %c30_i32_71 = arith.constant 30 : i32
      %427 = tpu.dynamic_rotate %16 by %c30_i32_71 dim 1 : vector<1x384xf32>, i32 -> vector<1x384xf32>
      %c61 = arith.constant 61 : index
      %428 = memref.load %arg2[%c61] : memref<98xf32, #tpu.memory_space<smem>>
      %429 = vector.broadcast %428 : f32 to vector<1x384xf32>
      %430 = arith.mulf %429, %427 : vector<1x384xf32>
      %431 = arith.addf %426, %430 : vector<1x384xf32>
      %c14_i32_72 = arith.constant 14 : i32
      %432 = tpu.dynamic_rotate %16 by %c14_i32_72 dim 1 : vector<1x384xf32>, i32 -> vector<1x384xf32>
      %c68 = arith.constant 68 : index
      %433 = memref.load %arg2[%c68] : memref<98xf32, #tpu.memory_space<smem>>
      %434 = vector.broadcast %433 : f32 to vector<1x384xf32>
      %435 = arith.mulf %434, %432 : vector<1x384xf32>
      %436 = arith.addf %431, %435 : vector<1x384xf32>
      %c382_i32_73 = arith.constant 382 : i32
      %437 = tpu.dynamic_rotate %16 by %c382_i32_73 dim 1 : vector<1x384xf32>, i32 -> vector<1x384xf32>
      %c75 = arith.constant 75 : index
      %438 = memref.load %arg2[%c75] : memref<98xf32, #tpu.memory_space<smem>>
      %439 = vector.broadcast %438 : f32 to vector<1x384xf32>
      %440 = arith.mulf %439, %437 : vector<1x384xf32>
      %441 = arith.addf %436, %440 : vector<1x384xf32>
      %c366_i32_74 = arith.constant 366 : i32
      %442 = tpu.dynamic_rotate %16 by %c366_i32_74 dim 1 : vector<1x384xf32>, i32 -> vector<1x384xf32>
      %c82 = arith.constant 82 : index
      %443 = memref.load %arg2[%c82] : memref<98xf32, #tpu.memory_space<smem>>
      %444 = vector.broadcast %443 : f32 to vector<1x384xf32>
      %445 = arith.mulf %444, %442 : vector<1x384xf32>
      %446 = arith.addf %441, %445 : vector<1x384xf32>
      %c350_i32_75 = arith.constant 350 : i32
      %447 = tpu.dynamic_rotate %16 by %c350_i32_75 dim 1 : vector<1x384xf32>, i32 -> vector<1x384xf32>
      %c89 = arith.constant 89 : index
      %448 = memref.load %arg2[%c89] : memref<98xf32, #tpu.memory_space<smem>>
      %449 = vector.broadcast %448 : f32 to vector<1x384xf32>
      %450 = arith.mulf %449, %447 : vector<1x384xf32>
      %451 = arith.addf %446, %450 : vector<1x384xf32>
      %c334_i32_76 = arith.constant 334 : i32
      %452 = tpu.dynamic_rotate %16 by %c334_i32_76 dim 1 : vector<1x384xf32>, i32 -> vector<1x384xf32>
      %c96 = arith.constant 96 : index
      %453 = memref.load %arg2[%c96] : memref<98xf32, #tpu.memory_space<smem>>
      %454 = vector.broadcast %453 : f32 to vector<1x384xf32>
      %455 = arith.mulf %454, %452 : vector<1x384xf32>
      %456 = arith.addf %451, %455 : vector<1x384xf32>
      %c5_77 = arith.constant 5 : index
      %c0_78 = arith.constant 0 : index
      %457 = vector.load %arg3[%c5_77, %c0_78] : memref<7x384xf32, #tpu.memory_space<vmem>>, vector<1x384xf32>
      %458 = arith.mulf %457, %456 : vector<1x384xf32>
      %459 = arith.addf %385, %458 : vector<1x384xf32>
      %cst_79 = arith.constant 0.000000e+00 : f32
      %460 = vector.broadcast %cst_79 : f32 to vector<1x384xf32>
      %c45_i32 = arith.constant 45 : i32
      %461 = tpu.dynamic_rotate %15 by %c45_i32 dim 1 : vector<1x384xf32>, i32 -> vector<1x384xf32>
      %c6 = arith.constant 6 : index
      %462 = memref.load %arg2[%c6] : memref<98xf32, #tpu.memory_space<smem>>
      %463 = vector.broadcast %462 : f32 to vector<1x384xf32>
      %464 = arith.mulf %463, %461 : vector<1x384xf32>
      %465 = arith.addf %460, %464 : vector<1x384xf32>
      %c29_i32 = arith.constant 29 : i32
      %466 = tpu.dynamic_rotate %15 by %c29_i32 dim 1 : vector<1x384xf32>, i32 -> vector<1x384xf32>
      %c13 = arith.constant 13 : index
      %467 = memref.load %arg2[%c13] : memref<98xf32, #tpu.memory_space<smem>>
      %468 = vector.broadcast %467 : f32 to vector<1x384xf32>
      %469 = arith.mulf %468, %466 : vector<1x384xf32>
      %470 = arith.addf %465, %469 : vector<1x384xf32>
      %c13_i32 = arith.constant 13 : i32
      %471 = tpu.dynamic_rotate %15 by %c13_i32 dim 1 : vector<1x384xf32>, i32 -> vector<1x384xf32>
      %c20 = arith.constant 20 : index
      %472 = memref.load %arg2[%c20] : memref<98xf32, #tpu.memory_space<smem>>
      %473 = vector.broadcast %472 : f32 to vector<1x384xf32>
      %474 = arith.mulf %473, %471 : vector<1x384xf32>
      %475 = arith.addf %470, %474 : vector<1x384xf32>
      %c381_i32 = arith.constant 381 : i32
      %476 = tpu.dynamic_rotate %15 by %c381_i32 dim 1 : vector<1x384xf32>, i32 -> vector<1x384xf32>
      %c27 = arith.constant 27 : index
      %477 = memref.load %arg2[%c27] : memref<98xf32, #tpu.memory_space<smem>>
      %478 = vector.broadcast %477 : f32 to vector<1x384xf32>
      %479 = arith.mulf %478, %476 : vector<1x384xf32>
      %480 = arith.addf %475, %479 : vector<1x384xf32>
      %c365_i32 = arith.constant 365 : i32
      %481 = tpu.dynamic_rotate %15 by %c365_i32 dim 1 : vector<1x384xf32>, i32 -> vector<1x384xf32>
      %c34 = arith.constant 34 : index
      %482 = memref.load %arg2[%c34] : memref<98xf32, #tpu.memory_space<smem>>
      %483 = vector.broadcast %482 : f32 to vector<1x384xf32>
      %484 = arith.mulf %483, %481 : vector<1x384xf32>
      %485 = arith.addf %480, %484 : vector<1x384xf32>
      %c349_i32 = arith.constant 349 : i32
      %486 = tpu.dynamic_rotate %15 by %c349_i32 dim 1 : vector<1x384xf32>, i32 -> vector<1x384xf32>
      %c41 = arith.constant 41 : index
      %487 = memref.load %arg2[%c41] : memref<98xf32, #tpu.memory_space<smem>>
      %488 = vector.broadcast %487 : f32 to vector<1x384xf32>
      %489 = arith.mulf %488, %486 : vector<1x384xf32>
      %490 = arith.addf %485, %489 : vector<1x384xf32>
      %c333_i32 = arith.constant 333 : i32
      %491 = tpu.dynamic_rotate %15 by %c333_i32 dim 1 : vector<1x384xf32>, i32 -> vector<1x384xf32>
      %c48 = arith.constant 48 : index
      %492 = memref.load %arg2[%c48] : memref<98xf32, #tpu.memory_space<smem>>
      %493 = vector.broadcast %492 : f32 to vector<1x384xf32>
      %494 = arith.mulf %493, %491 : vector<1x384xf32>
      %495 = arith.addf %490, %494 : vector<1x384xf32>
      %c45_i32_80 = arith.constant 45 : i32
      %496 = tpu.dynamic_rotate %16 by %c45_i32_80 dim 1 : vector<1x384xf32>, i32 -> vector<1x384xf32>
      %c55 = arith.constant 55 : index
      %497 = memref.load %arg2[%c55] : memref<98xf32, #tpu.memory_space<smem>>
      %498 = vector.broadcast %497 : f32 to vector<1x384xf32>
      %499 = arith.mulf %498, %496 : vector<1x384xf32>
      %500 = arith.addf %495, %499 : vector<1x384xf32>
      %c29_i32_81 = arith.constant 29 : i32
      %501 = tpu.dynamic_rotate %16 by %c29_i32_81 dim 1 : vector<1x384xf32>, i32 -> vector<1x384xf32>
      %c62 = arith.constant 62 : index
      %502 = memref.load %arg2[%c62] : memref<98xf32, #tpu.memory_space<smem>>
      %503 = vector.broadcast %502 : f32 to vector<1x384xf32>
      %504 = arith.mulf %503, %501 : vector<1x384xf32>
      %505 = arith.addf %500, %504 : vector<1x384xf32>
      %c13_i32_82 = arith.constant 13 : i32
      %506 = tpu.dynamic_rotate %16 by %c13_i32_82 dim 1 : vector<1x384xf32>, i32 -> vector<1x384xf32>
      %c69 = arith.constant 69 : index
      %507 = memref.load %arg2[%c69] : memref<98xf32, #tpu.memory_space<smem>>
      %508 = vector.broadcast %507 : f32 to vector<1x384xf32>
      %509 = arith.mulf %508, %506 : vector<1x384xf32>
      %510 = arith.addf %505, %509 : vector<1x384xf32>
      %c381_i32_83 = arith.constant 381 : i32
      %511 = tpu.dynamic_rotate %16 by %c381_i32_83 dim 1 : vector<1x384xf32>, i32 -> vector<1x384xf32>
      %c76 = arith.constant 76 : index
      %512 = memref.load %arg2[%c76] : memref<98xf32, #tpu.memory_space<smem>>
      %513 = vector.broadcast %512 : f32 to vector<1x384xf32>
      %514 = arith.mulf %513, %511 : vector<1x384xf32>
      %515 = arith.addf %510, %514 : vector<1x384xf32>
      %c365_i32_84 = arith.constant 365 : i32
      %516 = tpu.dynamic_rotate %16 by %c365_i32_84 dim 1 : vector<1x384xf32>, i32 -> vector<1x384xf32>
      %c83 = arith.constant 83 : index
      %517 = memref.load %arg2[%c83] : memref<98xf32, #tpu.memory_space<smem>>
      %518 = vector.broadcast %517 : f32 to vector<1x384xf32>
      %519 = arith.mulf %518, %516 : vector<1x384xf32>
      %520 = arith.addf %515, %519 : vector<1x384xf32>
      %c349_i32_85 = arith.constant 349 : i32
      %521 = tpu.dynamic_rotate %16 by %c349_i32_85 dim 1 : vector<1x384xf32>, i32 -> vector<1x384xf32>
      %c90 = arith.constant 90 : index
      %522 = memref.load %arg2[%c90] : memref<98xf32, #tpu.memory_space<smem>>
      %523 = vector.broadcast %522 : f32 to vector<1x384xf32>
      %524 = arith.mulf %523, %521 : vector<1x384xf32>
      %525 = arith.addf %520, %524 : vector<1x384xf32>
      %c333_i32_86 = arith.constant 333 : i32
      %526 = tpu.dynamic_rotate %16 by %c333_i32_86 dim 1 : vector<1x384xf32>, i32 -> vector<1x384xf32>
      %c97 = arith.constant 97 : index
      %527 = memref.load %arg2[%c97] : memref<98xf32, #tpu.memory_space<smem>>
      %528 = vector.broadcast %527 : f32 to vector<1x384xf32>
      %529 = arith.mulf %528, %526 : vector<1x384xf32>
      %530 = arith.addf %525, %529 : vector<1x384xf32>
      %c6_87 = arith.constant 6 : index
      %c0_88 = arith.constant 0 : index
      %531 = vector.load %arg3[%c6_87, %c0_88] : memref<7x384xf32, #tpu.memory_space<vmem>>, vector<1x384xf32>
      %532 = arith.mulf %531, %530 : vector<1x384xf32>
      %533 = arith.addf %459, %532 : vector<1x384xf32>
      %534 = arith.negf %533 : vector<1x384xf32>
      %535 = math.exp %534 : vector<1x384xf32>
      %cst_89 = arith.constant 1.000000e+00 : f32
      %536 = vector.broadcast %cst_89 : f32 to vector<1x384xf32>
      %537 = arith.addf %536, %535 : vector<1x384xf32>
      %538 = arith.divf %536, %537 : vector<1x384xf32>
      %c0_90 = arith.constant 0 : index
      %c0_91 = arith.constant 0 : index
      %c0_92 = arith.constant 0 : index
      %539 = vector.load %arg5[%c0_90, %c0_91, %c0_92] : memref<1x1x384xf32, #tpu.memory_space<vmem>>, vector<1x1x384xf32>
      %540 = vector.shape_cast %539 : vector<1x1x384xf32> to vector<1x384xf32>
      %541 = vector.shape_cast %538 : vector<1x384xf32> to vector<1x1x384xf32>
      tpu.vector_store %arg5[%c0_90, %c0_91, %c0_92], %541 {strides = array<i32>} : memref<1x1x384xf32, #tpu.memory_space<vmem>>, vector<1x1x384xf32>,
    } else {
    }
    return
  }
  func.func @transform_0(%arg0: i32, %arg1: i32) -> i32 {
    %c0_i32 = arith.constant 0 : i32
    %c0_i32_0 = arith.constant 0 : i32
    return %c0_i32 : i32
  }
  func.func @transform_1(%arg0: i32, %arg1: i32) -> (i32, i32) {
    %c0_i32 = arith.constant 0 : i32
    %c0_i32_0 = arith.constant 0 : i32
    %c0_i32_1 = arith.constant 0 : i32
    return %c0_i32, %c0_i32_0 : i32, i32
  }
  func.func @transform_2(%arg0: i32, %arg1: i32) -> (i32, i32, i32) {
    %c0_i32 = arith.constant 0 : i32
    %c0_i32_0 = arith.constant 0 : i32
    return %arg0, %arg1, %c0_i32 : i32, i32, i32
  }
  func.func @transform_3(%arg0: i32, %arg1: i32) -> (i32, i32, i32) {
    %c0_i32 = arith.constant 0 : i32
    %c0_i32_0 = arith.constant 0 : i32
    %c0_i32_1 = arith.constant 0 : i32
    return %arg0, %c0_i32, %c0_i32_0 : i32, i32, i32
  }
}

</mosaic_0001>

<llo_original>
// kernel: tpu_custom_call.1
$region0: #{tpu_custom_call.1}
  #allocation0 [shape = 'u32[]', space=smem, size = 0x4, offset = 0x4, fixed_abs, tag = 'smem constant byte address 0x4 - core index']
  #allocation1 [shape = 'u32[144,128]{1,0:T(1,128)}', space=vmem, size = 0x12000, scoped, tag = 'internal scratch']
  #allocation2 [shape = 'f32[1,384]{1,0:T(1,128)}', space=vmem, size = 0x600, scoped, tag = 'scratch operand']
  #allocation3 [shape = 'f32[1,384]{1,0:T(1,128)}', space=vmem, size = 0x600, scoped, tag = 'scratch operand']
  %s0 = inlined_call_operand.hbm [shape: f32[98], index: 0, kind: input, shape index: {}]
  %s1 = inlined_call_operand.hbm [shape: f32[7,384], index: 1, kind: input, shape index: {}]
  %s2 = inlined_call_operand.hbm [shape: f32[2,4,256], index: 2, kind: input, shape index: {}]
  %s3 = inlined_call_operand.hbm [shape: f32[2,1,384], index: 3, kind: output, shape index: {}]
  %s4 = sld [smem:[#allocation0]]
  $region65: #{tpu_custom_call.1} parent=0
    _
  %s6 = ssub.s32 1, %s4
  %s7 = scalar_select 0, %s6, %s4
  $region1: #{tpu_custom_call.1} parent=0
    #allocation4 [shape = 'u8[512]{0}', space=smem, size = 0x200, scoped, tag = 'input window, operand 0, single buffered']
    #allocation5 [shape = 's32[2]{0}', space=sflag, size = 0x8, scoped, tag = 'scoped memory for tpu_custom_call.1']
    #allocation6 [shape = 's32[2]{0}', space=sflag, size = 0x8, scoped, tag = 'scoped memory for tpu_custom_call.1']
    #allocation7 [shape = 's32[2]{0}', space=sflag, size = 0x8, scoped, tag = 'scoped memory for tpu_custom_call.1']
    #allocation8 [shape = 'u8[12288]{0}', space=vmem, size = 0x3000, scoped, tag = 'input window, operand 1, single buffered']
    #allocation9 [shape = 'u8[8192]{0}', space=vmem, size = 0x2000, scoped, tag = 'input window, operand 2']
    #allocation10 [shape = 's32[2]{0}', space=sflag, size = 0x8, scoped, tag = 'scoped memory for tpu_custom_call.1']
    #allocation11 [shape = 'u8[3072]{0}', space=vmem, size = 0xc00, scoped, tag = 'output window, operand 0']
    %8 = vsyncpa [#allocation7], 0
    %9 = vsyncpa [#allocation5], 0
    %10 = vsyncpa [#allocation10], 0
    %s11 = scalar_lea.sflag [#allocation10], 1
    %12 = vsyncpa %s11, 0
    %13 = vsyncpa [#allocation6], 0
    %s14 = scalar_lea.sflag [#allocation6], 1
    %15 = vsyncpa %s14, 0
    loop: start=0, step=1, limit=4
    $region2: #{tpu_custom_call.1} parent=1 // loop_pre_header
      _
    $region3: #{tpu_custom_call.1} parent=1 // loop_header
      %s17 = sphi 0, %s21
      %p18 = scmp.ge.s32.totalorder %s17, 4
      %s24 = sphi 0, %s36
      %s25 = sphi 0, %s32
      %s26 = sphi 0, %s24
      %s27 = sphi 0, %s25
      %s28 = sphi 0, %s26
      %s29 = sphi 0, %s27
      %s37 = sphi 0, %s37
      %s39 = sphi 0, %s37
      %s40 = sphi 0, %s39
      %s54 = sphi 0, %s40
      %s58 = sphi 0, %s58
      %s60 = sphi 0, %s58
      %s61 = sphi 0, %s60
      %s75 = sphi 0, %s61
      %s83 = sphi 0, %s85
      %s86 = sphi 0, %s83
      %s87 = sphi 0, %s86
      %s103 = sphi 0, %s87
      %s109 = sphi 0, %s111
      %s112 = sphi 0, %s109
      %s113 = sphi 0, %s112
      %s129 = sphi 0, %s113
    $region4: #{tpu_custom_call.1} parent=1 // loop_header_branch
      %20 = sbr.rel (%p18) target = $region8
    $region5: #{tpu_custom_call.1} parent=1 // loop_body
      %s22 = ssub.s32 %s17, 1
      %s23 = ssub.s32 %s17, 2
      %s30 = sadd.s32 1, %s25
      %p31 = scmp.ge.s32.totalorder %s30, 1
      %s32 = scalar_select %p31, 0, %s30
      %s33 = sadd.s32 1, %s24
      %s34 = scalar_select %p31, %s33, %s24
      %p35 = scmp.ge.s32.totalorder %s34, 2
      %s36 = scalar_select %p35, 0, %s34
      %s38 = sadd.s32 %s37, 1
      %p41 = scmp.eq.s32.totalorder %s17, 1
      %p42 = scmp.ne.s32.totalorder %s37, %s39
      %p43 = scmp.eq.s32.totalorder %s17, 0
      %p44 = por %p42, %p43
      %p45 = scmp.ne.s32.totalorder %s37, %s39
      %p46 = scmp.eq.s32.totalorder %s22, 1
      %p47 = por %p45, %p46
      %p48 = scmp.ne.s32.totalorder %s39, %s40
      %p49 = scmp.eq.s32.totalorder %s22, 0
      %p50 = por %p48, %p49
      %p51 = scmp.ne.s32.totalorder %s39, %s40
      %p52 = scmp.eq.s32.totalorder %s23, 1
      %p53 = por %p51, %p52
      %p55 = scmp.ne.s32.totalorder %s40, %s54
      %p56 = scmp.eq.s32.totalorder %s23, 0
      %p57 = por %p55, %p56
      %s59 = sadd.s32 %s58, 1
      %p62 = scmp.eq.s32.totalorder %s17, 1
      %p63 = scmp.ne.s32.totalorder %s58, %s60
      %p64 = scmp.eq.s32.totalorder %s17, 0
      %p65 = por %p63, %p64
      %p66 = scmp.ne.s32.totalorder %s58, %s60
      %p67 = scmp.eq.s32.totalorder %s22, 1
      %p68 = por %p66, %p67
      %p69 = scmp.ne.s32.totalorder %s60, %s61
      %p70 = scmp.eq.s32.totalorder %s22, 0
      %p71 = por %p69, %p70
      %p72 = scmp.ne.s32.totalorder %s60, %s61
      %p73 = scmp.eq.s32.totalorder %s23, 1
      %p74 = por %p72, %p73
      %p76 = scmp.ne.s32.totalorder %s61, %s75
      %p77 = scmp.eq.s32.totalorder %s23, 0
      %p78 = por %p76, %p77
      %s79 = ssub.s32 %s24, %s36
      %s80 = ssub.s32 %s25, %s32
      %s81 = sor.u32 %s79, %s80
      %p82 = scmp.eq.s32.totalorder %s81, 0
      %s84 = sadd.s32 %s83, 1
      %s85 = scalar_select %p82, %s83, %s84
      %p88 = pneg %p82
      %p89 = scmp.eq.s32.totalorder %s17, 1
      %p90 = por %p88, %p89
      %p91 = scmp.ne.s32.totalorder %s83, %s86
      %p92 = scmp.eq.s32.totalorder %s17, 0
      %p93 = por %p91, %p92
      %p94 = scmp.ne.s32.totalorder %s83, %s86
      %p95 = scmp.eq.s32.totalorder %s22, 1
      %p96 = por %p94, %p95
      %p97 = scmp.ne.s32.totalorder %s86, %s87
      %p98 = scmp.eq.s32.totalorder %s22, 0
      %p99 = por %p97, %p98
      %p100 = scmp.ne.s32.totalorder %s86, %s87
      %p101 = scmp.eq.s32.totalorder %s23, 1
      %p102 = por %p100, %p101
      %p104 = scmp.ne.s32.totalorder %s87, %s103
      %p105 = scmp.eq.s32.totalorder %s23, 0
      %p106 = por %p104, %p105
      %s107 = ssub.s32 %s24, %s36
      %p108 = scmp.eq.s32.totalorder %s107, 0
      %s110 = sadd.s32 %s109, 1
      %s111 = scalar_select %p108, %s109, %s110
      %p114 = pneg %p108
      %p115 = scmp.eq.s32.totalorder %s17, 1
      %p116 = por %p114, %p115
      %p117 = scmp.ne.s32.totalorder %s109, %s112
      %p118 = scmp.eq.s32.totalorder %s17, 0
      %p119 = por %p117, %p118
      %p120 = scmp.ne.s32.totalorder %s109, %s112
      %p121 = scmp.eq.s32.totalorder %s22, 1
      %p122 = por %p120, %p121
      %p123 = scmp.ne.s32.totalorder %s112, %s113
      %p124 = scmp.eq.s32.totalorder %s22, 0
      %p125 = por %p123, %p124
      %p126 = scmp.ne.s32.totalorder %s112, %s113
      %p127 = scmp.eq.s32.totalorder %s23, 1
      %p128 = por %p126, %p127
      %p130 = scmp.ne.s32.totalorder %s113, %s129
      %p131 = scmp.eq.s32.totalorder %s23, 0
      %p132 = por %p130, %p131
      %p133 = scmp.le.s32.totalorder 1, %s17
      %p134 = scmp.lt.s32.totalorder %s17, 3
      %p135 = pnand %p133, %p134
      %p136 = pneg %p135
      // Predicated region
      $region9: #{tpu_custom_call.1} parent=5 // pred_check
        _
      $region10: #{tpu_custom_call.1} parent=5 // pred_check_branch
        %138 = sbr.rel (%p135) target = $region12
      $region11: #{tpu_custom_call.1} parent=5 // pred_region
        %s139 = ssub.s32 %s17, 1
        // Predicated region
        $region13: #{tpu_custom_call.1} parent=11 // pred_check
          %p140 = pneg %p50
        $region14: #{tpu_custom_call.1} parent=11 // pred_check_branch
          %142 = sbr.rel (%p140) target = $region16
        $region15: #{tpu_custom_call.1} parent=11 // pred_region
          %s144 = ssub.s32 16, 16
          %145 = vsyncadd [#allocation7], %s144
          %148 = dma.hbm_to_smem %s0, 16, [#allocation4], [#allocation7]
        $region16: #{tpu_custom_call.1} parent=11 // pred_fallthru
          _
        // Predicated region
        $region17: #{tpu_custom_call.1} parent=11 // pred_check
          %p149 = pneg %p71
        $region18: #{tpu_custom_call.1} parent=11 // pred_check_branch
          %151 = sbr.rel (%p149) target = $region20
        $region19: #{tpu_custom_call.1} parent=11 // pred_region
          %s153 = ssub.s32 384, 384
          %154 = vsyncadd [#allocation5], %s153
          %s156 = sshll.u32 [#allocation8], 4
          %s157 = int_to_ptr.vmem [resolvable:$true] %s156
          %159 = dma.hbm_to_vmem [thread:$0]  %s1, 384, %s157, [#allocation5]
        $region20: #{tpu_custom_call.1} parent=11 // pred_fallthru
          _
      $region12: #{tpu_custom_call.1} parent=5 // pred_fallthru
        _
      %p160 = scmp.lt.s32.totalorder %s17, 2
      // Predicated region
      $region21: #{tpu_custom_call.1} parent=5 // pred_check
        %p161 = pneg %p160
      $region22: #{tpu_custom_call.1} parent=5 // pred_check_branch
        %163 = sbr.rel (%p161) target = $region24
      $region23: #{tpu_custom_call.1} parent=5 // pred_region
        // Predicated region
        $region25: #{tpu_custom_call.1} parent=23 // pred_check
          %p164 = pneg %p93
        $region26: #{tpu_custom_call.1} parent=23 // pred_check_branch
          %166 = sbr.rel (%p164) target = $region28
        $region27: #{tpu_custom_call.1} parent=23 // pred_region
          %s167 = sand.u32 %s83, 1
          %s168 = scalar_lea.sflag [#allocation10], %s167
          %s169 = sand.u32 %s83, 1
          %s170 = smul.addr %s169, 8
          %s171 = scalar_lea.vmem [#allocation9], %s170
          %s173 = ssub.s32 128, 128
          %174 = vsyncadd %s168, %s173
          %s175 = smul.addr %s25, 2
          %s176 = smul.addr %s24, 2
          %s177 = sadd.s32 %s175, %s176
          %s178 = smul.addr %s177, 64
          %s179 = scalar_lea.hbm %s2, %s178
          %s181 = sshll.u32 %s171, 4
          %s182 = int_to_ptr.vmem [resolvable:$true] %s181
          %184 = dma.hbm_to_vmem [thread:$0]  %s179, 128, %s182, %s168
        $region28: #{tpu_custom_call.1} parent=23 // pred_fallthru
          _
      $region24: #{tpu_custom_call.1} parent=5 // pred_fallthru
        _
      %p185 = scmp.le.s32.totalorder 1, %s17
      %p186 = scmp.lt.s32.totalorder %s17, 3
      %p187 = pnand %p185, %p186
      %p188 = pneg %p187
      // Predicated region
      $region29: #{tpu_custom_call.1} parent=5 // pred_check
        _
      $region30: #{tpu_custom_call.1} parent=5 // pred_check_branch
        %190 = sbr.rel (%p187) target = $region32
      $region31: #{tpu_custom_call.1} parent=5 // pred_region
        %s191 = ssub.s32 %s17, 1
        // Predicated region
        $region33: #{tpu_custom_call.1} parent=31 // pred_check
          %p192 = pneg %p50
        $region34: #{tpu_custom_call.1} parent=31 // pred_check_branch
          %194 = sbr.rel (%p192) target = $region36
        $region35: #{tpu_custom_call.1} parent=31 // pred_region
          %195 = dma.done [#allocation7], 16
        $region36: #{tpu_custom_call.1} parent=31 // pred_fallthru
          _
        // Predicated region
        $region37: #{tpu_custom_call.1} parent=31 // pred_check
          %p196 = pneg %p71
        $region38: #{tpu_custom_call.1} parent=31 // pred_check_branch
          %198 = sbr.rel (%p196) target = $region40
        $region39: #{tpu_custom_call.1} parent=31 // pred_region
          %199 = dma.done [#allocation5], 384
        $region40: #{tpu_custom_call.1} parent=31 // pred_fallthru
          _
        %s200 = sand.u32 %s86, 1
        %s201 = scalar_lea.sflag [#allocation10], %s200
        %s202 = sand.u32 %s86, 1
        %s203 = smul.addr %s202, 8
        %s204 = scalar_lea.vmem [#allocation9], %s203
        // Predicated region
        $region41: #{tpu_custom_call.1} parent=31 // pred_check
          %p205 = pneg %p99
        $region42: #{tpu_custom_call.1} parent=31 // pred_check_branch
          %207 = sbr.rel (%p205) target = $region44
        $region43: #{tpu_custom_call.1} parent=31 // pred_region
          %208 = dma.done %s201, 128
        $region44: #{tpu_custom_call.1} parent=31 // pred_fallthru
          _
        %209 = sfence
        %p210 = pneg %p50
        %p211 = pneg %p47
        %p212 = pneg %p71
        %p213 = pneg %p68
        %s214 = sand.u32 %s86, 1
        %s215 = scalar_lea.sflag [#allocation10], %s214
        %s216 = sand.u32 %s86, 1
        %s217 = smul.addr %s216, 8
        %s218 = scalar_lea.vmem [#allocation9], %s217
        %p219 = pneg %p99
        %p220 = pneg %p96
        %p221 = pneg %p125
        %p222 = pneg %p122
        %s223 = sand.u32 %s112, 1
        %s224 = scalar_lea.sflag [#allocation6], %s223
        %s225 = sand.u32 %s112, 1
        %s226 = smul.addr %s225, 3
        %s227 = scalar_lea.vmem [#allocation11], %s226
        %p228 = scmp.eq.s32.totalorder %s27, 0
        // Predicated region
        $region45: #{tpu_custom_call.1} parent=31 // pred_check
          %p229 = pneg %p228
        $region46: #{tpu_custom_call.1} parent=31 // pred_check_branch
          %231 = sbr.rel (%p229) target = $region48
        $region47: #{tpu_custom_call.1} parent=31 // pred_region
          %v232 = vlaneseq
          %vm233 = vcmp.ge.s32.totalorder %v232, 0
          %vm234 = vcmp.lt.s32.totalorder %v232, 384
          %vm235 = vmand %vm233, %vm234
          %236 = vst.msk [vmem:[#allocation2] sm:$0x7] %vm235, 0.0
          %237 = vst.msk [vmem:[#allocation3] sm:$0x7] %vm235, 0.0
          %vm238 = vcmp.lt.s32.totalorder %v232, 256
          %vm239 = vmand %vm233, %vm238
          %240 = vst.msk [vmem:[#allocation3] sm:$0x3] %vm239, -inf
        $region48: #{tpu_custom_call.1} parent=31 // pred_fallthru
          _
        %v241 = vld [vmem:[%s204] sm:$0xff]
        %v242 = vld [vmem:[#allocation2] sm:$0x3]
        %v244 = vcombine.high %v241, %v241
        %vm246 = vcmask 1043456
        %v247 = vsel %vm246, %v241, 0.0
        %v248 = vrot.slane %v247, 4
        %v249 = vadd.f32 %v247, %v248
        %v250 = vrot.slane %v249, 2
        %v251 = vadd.f32 %v249, %v250
        %v252 = vrot.slane %v251, 1
        %v253 = vadd.f32 %v251, %v252
        %v254 = vsel %vm246, %v244, 0.0
        %v255 = vrot.slane %v254, 4
        %v256 = vadd.f32 %v254, %v255
        %v257 = vrot.slane %v256, 2
        %v258 = vadd.f32 %v256, %v257
        %v259 = vrot.slane %v258, 1
        %v260 = vadd.f32 %v258, %v259
        %v263 = vcombine.low %v253, %v260
        %v265 = vunpack.c.l.s4 1966171168
        %v266 = vunpack.c.0.s8 %v265
        %v267 = vlaneseq
        %v268 = vshrl.u32 %v267, 7
        %v269 = vsub.s32 %v266, %v268
        %v270 = vrot.slane %v263, %v269
        %v272 = vunpack.c.l.s4 1966171168
        %v273 = vunpack.c.0.s8 %v272
        %v274 = vlaneseq
        %v275 = vshrl.u32 %v274, 7
        %v276 = vsub.s32 %v273, %v275
        %v277 = vrot.slane %v270, %v276
        %v279 = vadd.f32 %v242, %v277
        %v280 = vlaneseq
        %vm281 = vcmp.ge.s32.totalorder %v280, 0
        %vm282 = vcmp.lt.s32.totalorder %v280, 256
        %vm283 = vmand %vm281, %vm282
        %284 = vst.msk [vmem:[#allocation2] sm:$0x3] %vm283, %v279
        %v285 = vld [vmem:[#allocation3] sm:$0x3]
        %v286 = vsel %vm246, %v241, -inf
        %v287 = vrot.slane %v286, 4
        %v288 = vmax.f32 %v286, %v287
        %v289 = vrot.slane %v288, 2
        %v290 = vmax.f32 %v288, %v289
        %v291 = vrot.slane %v290, 1
        %v292 = vmax.f32 %v290, %v291
        %v293 = vsel %vm246, %v244, -inf
        %v294 = vrot.slane %v293, 4
        %v295 = vmax.f32 %v293, %v294
        %v296 = vrot.slane %v295, 2
        %v297 = vmax.f32 %v295, %v296
        %v298 = vrot.slane %v297, 1
        %v299 = vmax.f32 %v297, %v298
        %v302 = vcombine.low %v292, %v299
        %v304 = vunpack.c.l.s4 1966171168
        %v305 = vunpack.c.0.s8 %v304
        %v306 = vlaneseq
        %v307 = vshrl.u32 %v306, 7
        %v308 = vsub.s32 %v305, %v307
        %v309 = vrot.slane %v302, %v308
        %v311 = vunpack.c.l.s4 1966171168
        %v312 = vunpack.c.0.s8 %v311
        %v313 = vlaneseq
        %v314 = vshrl.u32 %v313, 7
        %v315 = vsub.s32 %v312, %v314
        %v316 = vrot.slane %v309, %v315
        %v318 = vmax.f32 %v285, %v316
        %319 = vst.msk [vmem:[#allocation3] sm:$0x3] %vm283, %v318
        // Predicated region
        $region49: #{tpu_custom_call.1} parent=31 // pred_check
          %p320 = pneg %p228
        $region50: #{tpu_custom_call.1} parent=31 // pred_check_branch
          %322 = sbr.rel (%p320) target = $region52
        $region51: #{tpu_custom_call.1} parent=31 // pred_region
          %v323 = vld [vmem:[#allocation2] sm:$0x7]
          %v324 = vld [vmem:[#allocation3] sm:$0x7]
          %v326 = vlaneseq
          %v327 = vshrl.u32 %v326, 7
          %v328 = vsub.s32 0, %v327
          %v329 = vrot.slane %v323, %v328
          %v330 = vlaneseq
          %v331 = vshrl.u32 %v330, 7
          %v332 = vsub.s32 1, %v331
          %v333 = vrot.slane %v323, %v332
          %v334 = vlaneseq
          %v335 = vshrl.u32 %v334, 7
          %v336 = vsub.s32 2, %v335
          %v337 = vrot.slane %v323, %v336
          %341 = vrot.lane.b32.xlu0 %v329, 51
          %v342 = vpop.permute.xlu0 %341
          %343 = vrot.lane.b32.xlu0 %v333, 51
          %v344 = vpop.permute.xlu0 %343
          %345 = vrot.lane.b32.xlu0 %v337, 51
          %v346 = vpop.permute.xlu0 %345
          %v347 = vlaneseq
          %v348 = vand.u32 %v347, 127
          %vm349 = vcmp.lt.s32.totalorder %v348, 51
          %v350 = vsel %vm349, %v344, %v346
          %v351 = vsel %vm349, %v342, %v344
          %v352 = vsel %vm349, %v346, %v342
          %s353 = sld [smem:[#allocation4]]
          %v354 = vstv %s353
          %v355 = vmul.f32 %v354, %v352
          %v356 = vmul.f32 %v354, %v351
          %v357 = vmul.f32 %v354, %v350
          %v358 = vadd.f32 %v355, 0.0
          %v359 = vadd.f32 %v356, 0.0
          %v360 = vadd.f32 %v357, 0.0
          %361 = vrot.lane.b32.xlu0 %v329, 35
          %v362 = vpop.permute.xlu0 %361
          %363 = vrot.lane.b32.xlu0 %v333, 35
          %v364 = vpop.permute.xlu0 %363
          %365 = vrot.lane.b32.xlu0 %v337, 35
          %v366 = vpop.permute.xlu0 %365
          %vm367 = vcmp.lt.s32.totalorder %v348, 35
          %v368 = vsel %vm367, %v364, %v366
          %v369 = vsel %vm367, %v362, %v364
          %v370 = vsel %vm367, %v366, %v362
          %s371 = sld [smem:[#allocation4 + $0x7]]
          %v372 = vstv %s371
          %v373 = vmul.f32 %v372, %v370
          %v374 = vmul.f32 %v372, %v369
          %v375 = vmul.f32 %v372, %v368
          %v376 = vadd.f32 %v358, %v373
          %v377 = vadd.f32 %v359, %v374
          %v378 = vadd.f32 %v360, %v375
          %379 = vrot.lane.b32.xlu0 %v329, 19
          %v380 = vpop.permute.xlu0 %379
          %381 = vrot.lane.b32.xlu0 %v333, 19
          %v382 = vpop.permute.xlu0 %381
          %383 = vrot.lane.b32.xlu0 %v337, 19
          %v384 = vpop.permute.xlu0 %383
          %vm385 = vcmp.lt.s32.totalorder %v348, 19
          %v386 = vsel %vm385, %v382, %v384
          %v387 = vsel %vm385, %v380, %v382
          %v388 = vsel %vm385, %v384, %v380
          %s389 = sld [smem:[#allocation4 + $0xe]]
          %v390 = vstv %s389
          %v391 = vmul.f32 %v390, %v388
          %v392 = vmul.f32 %v390, %v387
          %v393 = vmul.f32 %v390, %v386
          %v394 = vadd.f32 %v376, %v391
          %v395 = vadd.f32 %v377, %v392
          %v396 = vadd.f32 %v378, %v393
          %397 = vrot.lane.b32.xlu0 %v329, 3
          %v398 = vpop.permute.xlu0 %397
          %399 = vrot.lane.b32.xlu0 %v333, 3
          %v400 = vpop.permute.xlu0 %399
          %401 = vrot.lane.b32.xlu0 %v337, 3
          %v402 = vpop.permute.xlu0 %401
          %vm403 = vcmp.lt.s32.totalorder %v348, 3
          %v404 = vsel %vm403, %v400, %v402
          %v405 = vsel %vm403, %v398, %v400
          %v406 = vsel %vm403, %v402, %v398
          %s407 = sld [smem:[#allocation4 + $0x15]]
          %v408 = vstv %s407
          %v409 = vmul.f32 %v408, %v406
          %v410 = vmul.f32 %v408, %v405
          %v411 = vmul.f32 %v408, %v404
          %v412 = vadd.f32 %v394, %v409
          %v413 = vadd.f32 %v395, %v410
          %v414 = vadd.f32 %v396, %v411
          %415 = vrot.lane.b32.xlu0 %v329, 115
          %v416 = vpop.permute.xlu0 %415
          %417 = vrot.lane.b32.xlu0 %v333, 115
          %v418 = vpop.permute.xlu0 %417
          %419 = vrot.lane.b32.xlu0 %v337, 115
          %v420 = vpop.permute.xlu0 %419
          %vm421 = vcmp.lt.s32.totalorder %v348, 115
          %v422 = vsel %vm421, %v418, %v420
          %v423 = vsel %vm421, %v416, %v418
          %v424 = vsel %vm421, %v420, %v416
          %s425 = sld [smem:[#allocation4 + $0x1c]]
          %v426 = vstv %s425
          %v427 = vmul.f32 %v426, %v423
          %v428 = vmul.f32 %v426, %v422
          %v429 = vmul.f32 %v426, %v424
          %v430 = vadd.f32 %v412, %v427
          %v431 = vadd.f32 %v413, %v428
          %v432 = vadd.f32 %v414, %v429
          %433 = vrot.lane.b32.xlu0 %v329, 99
          %v434 = vpop.permute.xlu0 %433
          %435 = vrot.lane.b32.xlu0 %v333, 99
          %v436 = vpop.permute.xlu0 %435
          %437 = vrot.lane.b32.xlu0 %v337, 99
          %v438 = vpop.permute.xlu0 %437
          %vm439 = vcmp.lt.s32.totalorder %v348, 99
          %v440 = vsel %vm439, %v436, %v438
          %v441 = vsel %vm439, %v434, %v436
          %v442 = vsel %vm439, %v438, %v434
          %s443 = sld [smem:[#allocation4 + $0x23]]
          %v444 = vstv %s443
          %v445 = vmul.f32 %v444, %v441
          %v446 = vmul.f32 %v444, %v440
          %v447 = vmul.f32 %v444, %v442
          %v448 = vadd.f32 %v430, %v445
          %v449 = vadd.f32 %v431, %v446
          %v450 = vadd.f32 %v432, %v447
          %451 = vrot.lane.b32.xlu0 %v329, 83
          %v452 = vpop.permute.xlu0 %451
          %453 = vrot.lane.b32.xlu0 %v333, 83
          %v454 = vpop.permute.xlu0 %453
          %455 = vrot.lane.b32.xlu0 %v337, 83
          %v456 = vpop.permute.xlu0 %455
          %vm457 = vcmp.lt.s32.totalorder %v348, 83
          %v458 = vsel %vm457, %v454, %v456
          %v459 = vsel %vm457, %v452, %v454
          %v460 = vsel %vm457, %v456, %v452
          %s461 = sld [smem:[#allocation4 + $0x2a]]
          %v462 = vstv %s461
          %v463 = vmul.f32 %v462, %v459
          %v464 = vmul.f32 %v462, %v458
          %v465 = vmul.f32 %v462, %v460
          %v466 = vadd.f32 %v448, %v463
          %v467 = vadd.f32 %v449, %v464
          %v468 = vadd.f32 %v450, %v465
          %v470 = vlaneseq
          %v471 = vshrl.u32 %v470, 7
          %v472 = vsub.s32 0, %v471
          %v473 = vrot.slane %v324, %v472
          %v474 = vlaneseq
          %v475 = vshrl.u32 %v474, 7
          %v476 = vsub.s32 1, %v475
          %v477 = vrot.slane %v324, %v476
          %v478 = vlaneseq
          %v479 = vshrl.u32 %v478, 7
          %v480 = vsub.s32 2, %v479
          %v481 = vrot.slane %v324, %v480
          %485 = vrot.lane.b32.xlu0 %v473, 51
          %v486 = vpop.permute.xlu0 %485
          %487 = vrot.lane.b32.xlu0 %v477, 51
          %v488 = vpop.permute.xlu0 %487
          %489 = vrot.lane.b32.xlu0 %v481, 51
          %v490 = vpop.permute.xlu0 %489
          %v491 = vsel %vm349, %v488, %v490
          %v492 = vsel %vm349, %v486, %v488
          %v493 = vsel %vm349, %v490, %v486
          %s494 = sld [smem:[#allocation4 + $0x31]]
          %v495 = vstv %s494
          %v496 = vmul.f32 %v495, %v493
          %v497 = vmul.f32 %v495, %v492
          %v498 = vmul.f32 %v495, %v491
          %v499 = vadd.f32 %v466, %v496
          %v500 = vadd.f32 %v467, %v497
          %v501 = vadd.f32 %v468, %v498
          %502 = vrot.lane.b32.xlu0 %v473, 35
          %v503 = vpop.permute.xlu0 %502
          %504 = vrot.lane.b32.xlu0 %v477, 35
          %v505 = vpop.permute.xlu0 %504
          %506 = vrot.lane.b32.xlu0 %v481, 35
          %v507 = vpop.permute.xlu0 %506
          %v508 = vsel %vm367, %v505, %v507
          %v509 = vsel %vm367, %v503, %v505
          %v510 = vsel %vm367, %v507, %v503
          %s511 = sld [smem:[#allocation4 + $0x38]]
          %v512 = vstv %s511
          %v513 = vmul.f32 %v512, %v510
          %v514 = vmul.f32 %v512, %v509
          %v515 = vmul.f32 %v512, %v508
          %v516 = vadd.f32 %v499, %v513
          %v517 = vadd.f32 %v500, %v514
          %v518 = vadd.f32 %v501, %v515
          %519 = vrot.lane.b32.xlu0 %v473, 19
          %v520 = vpop.permute.xlu0 %519
          %521 = vrot.lane.b32.xlu0 %v477, 19
          %v522 = vpop.permute.xlu0 %521
          %523 = vrot.lane.b32.xlu0 %v481, 19
          %v524 = vpop.permute.xlu0 %523
          %v525 = vsel %vm385, %v522, %v524
          %v526 = vsel %vm385, %v520, %v522
          %v527 = vsel %vm385, %v524, %v520
          %s528 = sld [smem:[#allocation4 + $0x3f]]
          %v529 = vstv %s528
          %v530 = vmul.f32 %v529, %v527
          %v531 = vmul.f32 %v529, %v526
          %v532 = vmul.f32 %v529, %v525
          %v533 = vadd.f32 %v516, %v530
          %v534 = vadd.f32 %v517, %v531
          %v535 = vadd.f32 %v518, %v532
          %536 = vrot.lane.b32.xlu0 %v473, 3
          %v537 = vpop.permute.xlu0 %536
          %538 = vrot.lane.b32.xlu0 %v477, 3
          %v539 = vpop.permute.xlu0 %538
          %540 = vrot.lane.b32.xlu0 %v481, 3
          %v541 = vpop.permute.xlu0 %540
          %v542 = vsel %vm403, %v539, %v541
          %v543 = vsel %vm403, %v537, %v539
          %v544 = vsel %vm403, %v541, %v537
          %s545 = sld [smem:[#allocation4 + $0x46]]
          %v546 = vstv %s545
          %v547 = vmul.f32 %v546, %v544
          %v548 = vmul.f32 %v546, %v543
          %v549 = vmul.f32 %v546, %v542
          %v550 = vadd.f32 %v533, %v547
          %v551 = vadd.f32 %v534, %v548
          %v552 = vadd.f32 %v535, %v549
          %553 = vrot.lane.b32.xlu0 %v473, 115
          %v554 = vpop.permute.xlu0 %553
          %555 = vrot.lane.b32.xlu0 %v477, 115
          %v556 = vpop.permute.xlu0 %555
          %557 = vrot.lane.b32.xlu0 %v481, 115
          %v558 = vpop.permute.xlu0 %557
          %v559 = vsel %vm421, %v556, %v558
          %v560 = vsel %vm421, %v554, %v556
          %v561 = vsel %vm421, %v558, %v554
          %s562 = sld [smem:[#allocation4 + $0x4d]]
          %v563 = vstv %s562
          %v564 = vmul.f32 %v563, %v560
          %v565 = vmul.f32 %v563, %v559
          %v566 = vmul.f32 %v563, %v561
          %v567 = vadd.f32 %v550, %v564
          %v568 = vadd.f32 %v551, %v565
          %v569 = vadd.f32 %v552, %v566
          %570 = vrot.lane.b32.xlu0 %v473, 99
          %v571 = vpop.permute.xlu0 %570
          %572 = vrot.lane.b32.xlu0 %v477, 99
          %v573 = vpop.permute.xlu0 %572
          %574 = vrot.lane.b32.xlu0 %v481, 99
          %v575 = vpop.permute.xlu0 %574
          %v576 = vsel %vm439, %v573, %v575
          %v577 = vsel %vm439, %v571, %v573
          %v578 = vsel %vm439, %v575, %v571
          %s579 = sld [smem:[#allocation4 + $0x54]]
          %v580 = vstv %s579
          %v581 = vmul.f32 %v580, %v577
          %v582 = vmul.f32 %v580, %v576
          %v583 = vmul.f32 %v580, %v578
          %v584 = vadd.f32 %v567, %v581
          %v585 = vadd.f32 %v568, %v582
          %v586 = vadd.f32 %v569, %v583
          %587 = vrot.lane.b32.xlu0 %v473, 83
          %v588 = vpop.permute.xlu0 %587
          %589 = vrot.lane.b32.xlu0 %v477, 83
          %v590 = vpop.permute.xlu0 %589
          %591 = vrot.lane.b32.xlu0 %v481, 83
          %v592 = vpop.permute.xlu0 %591
          %v593 = vsel %vm457, %v590, %v592
          %v594 = vsel %vm457, %v588, %v590
          %v595 = vsel %vm457, %v592, %v588
          %s596 = sld [smem:[#allocation4 + $0x5b]]
          %v597 = vstv %s596
          %v598 = vmul.f32 %v597, %v594
          %v599 = vmul.f32 %v597, %v593
          %v600 = vmul.f32 %v597, %v595
          %v601 = vadd.f32 %v584, %v598
          %v602 = vadd.f32 %v585, %v599
          %v603 = vadd.f32 %v586, %v600
          %v604 = vld [vmem:[#allocation8] ss:$8 sm:$0x7]
          %v608 = vcombine.low %v601, %v602
          %v610 = vunpack.c.l.s4 1966171168
          %v611 = vunpack.c.0.s8 %v610
          %v612 = vlaneseq
          %v613 = vshrl.u32 %v612, 7
          %v614 = vsub.s32 %v611, %v613
          %v615 = vrot.slane %v608, %v614
          %v617 = vunpack.c.l.s4 1966171168
          %v618 = vunpack.c.0.s8 %v617
          %v619 = vlaneseq
          %v620 = vshrl.u32 %v619, 7
          %v621 = vsub.s32 %v618, %v620
          %v622 = vrot.slane %v603, %v621
          %v623 = vcombine.low %v615, %v622
          %v625 = vunpack.c.l.s4 1966171168
          %v626 = vunpack.c.0.s8 %v625
          %v627 = vlaneseq
          %v628 = vshrl.u32 %v627, 7
          %v629 = vsub.s32 %v626, %v628
          %v630 = vrot.slane %v623, %v629
          %v632 = vmul.f32 %v604, %v630
          %v633 = vadd.f32 %v632, 0.0
          %634 = vrot.lane.b32.xlu0 %v329, 50
          %v635 = vpop.permute.xlu0 %634
          %636 = vrot.lane.b32.xlu0 %v333, 50
          %v637 = vpop.permute.xlu0 %636
          %638 = vrot.lane.b32.xlu0 %v337, 50
          %v639 = vpop.permute.xlu0 %638
          %vm640 = vcmp.lt.s32.totalorder %v348, 50
          %v641 = vsel %vm640, %v637, %v639
          %v642 = vsel %vm640, %v635, %v637
          %v643 = vsel %vm640, %v639, %v635
          %s644 = sld [smem:[#allocation4 + $0x1]]
          %v645 = vstv %s644
          %v646 = vmul.f32 %v645, %v643
          %v647 = vmul.f32 %v645, %v642
          %v648 = vmul.f32 %v645, %v641
          %v649 = vadd.f32 %v646, 0.0
          %v650 = vadd.f32 %v647, 0.0
          %v651 = vadd.f32 %v648, 0.0
          %652 = vrot.lane.b32.xlu0 %v329, 34
          %v653 = vpop.permute.xlu0 %652
          %654 = vrot.lane.b32.xlu0 %v333, 34
          %v655 = vpop.permute.xlu0 %654
          %656 = vrot.lane.b32.xlu0 %v337, 34
          %v657 = vpop.permute.xlu0 %656
          %vm658 = vcmp.lt.s32.totalorder %v348, 34
          %v659 = vsel %vm658, %v655, %v657
          %v660 = vsel %vm658, %v653, %v655
          %v661 = vsel %vm658, %v657, %v653
          %s662 = sld [smem:[#allocation4 + $0x8]]
          %v663 = vstv %s662
          %v664 = vmul.f32 %v663, %v661
          %v665 = vmul.f32 %v663, %v660
          %v666 = vmul.f32 %v663, %v659
          %v667 = vadd.f32 %v649, %v664
          %v668 = vadd.f32 %v650, %v665
          %v669 = vadd.f32 %v651, %v666
          %670 = vrot.lane.b32.xlu0 %v329, 18
          %v671 = vpop.permute.xlu0 %670
          %672 = vrot.lane.b32.xlu0 %v333, 18
          %v673 = vpop.permute.xlu0 %672
          %674 = vrot.lane.b32.xlu0 %v337, 18
          %v675 = vpop.permute.xlu0 %674
          %vm676 = vcmp.lt.s32.totalorder %v348, 18
          %v677 = vsel %vm676, %v673, %v675
          %v678 = vsel %vm676, %v671, %v673
          %v679 = vsel %vm676, %v675, %v671
          %s680 = sld [smem:[#allocation4 + $0xf]]
          %v681 = vstv %s680
          %v682 = vmul.f32 %v681, %v679
          %v683 = vmul.f32 %v681, %v678
          %v684 = vmul.f32 %v681, %v677
          %v685 = vadd.f32 %v667, %v682
          %v686 = vadd.f32 %v668, %v683
          %v687 = vadd.f32 %v669, %v684
          %688 = vrot.lane.b32.xlu0 %v329, 2
          %v689 = vpop.permute.xlu0 %688
          %690 = vrot.lane.b32.xlu0 %v333, 2
          %v691 = vpop.permute.xlu0 %690
          %692 = vrot.lane.b32.xlu0 %v337, 2
          %v693 = vpop.permute.xlu0 %692
          %vm694 = vcmp.lt.s32.totalorder %v348, 2
          %v695 = vsel %vm694, %v691, %v693
          %v696 = vsel %vm694, %v689, %v691
          %v697 = vsel %vm694, %v693, %v689
          %s698 = sld [smem:[#allocation4 + $0x16]]
          %v699 = vstv %s698
          %v700 = vmul.f32 %v699, %v697
          %v701 = vmul.f32 %v699, %v696
          %v702 = vmul.f32 %v699, %v695
          %v703 = vadd.f32 %v685, %v700
          %v704 = vadd.f32 %v686, %v701
          %v705 = vadd.f32 %v687, %v702
          %706 = vrot.lane.b32.xlu0 %v329, 114
          %v707 = vpop.permute.xlu0 %706
          %708 = vrot.lane.b32.xlu0 %v333, 114
          %v709 = vpop.permute.xlu0 %708
          %710 = vrot.lane.b32.xlu0 %v337, 114
          %v711 = vpop.permute.xlu0 %710
          %vm712 = vcmp.lt.s32.totalorder %v348, 114
          %v713 = vsel %vm712, %v709, %v711
          %v714 = vsel %vm712, %v707, %v709
          %v715 = vsel %vm712, %v711, %v707
          %s716 = sld [smem:[#allocation4 + $0x1d]]
          %v717 = vstv %s716
          %v718 = vmul.f32 %v717, %v714
          %v719 = vmul.f32 %v717, %v713
          %v720 = vmul.f32 %v717, %v715
          %v721 = vadd.f32 %v703, %v718
          %v722 = vadd.f32 %v704, %v719
          %v723 = vadd.f32 %v705, %v720
          %724 = vrot.lane.b32.xlu0 %v329, 98
          %v725 = vpop.permute.xlu0 %724
          %726 = vrot.lane.b32.xlu0 %v333, 98
          %v727 = vpop.permute.xlu0 %726
          %728 = vrot.lane.b32.xlu0 %v337, 98
          %v729 = vpop.permute.xlu0 %728
          %vm730 = vcmp.lt.s32.totalorder %v348, 98
          %v731 = vsel %vm730, %v727, %v729
          %v732 = vsel %vm730, %v725, %v727
          %v733 = vsel %vm730, %v729, %v725
          %s734 = sld [smem:[#allocation4 + $0x24]]
          %v735 = vstv %s734
          %v736 = vmul.f32 %v735, %v732
          %v737 = vmul.f32 %v735, %v731
          %v738 = vmul.f32 %v735, %v733
          %v739 = vadd.f32 %v721, %v736
          %v740 = vadd.f32 %v722, %v737
          %v741 = vadd.f32 %v723, %v738
          %742 = vrot.lane.b32.xlu0 %v329, 82
          %v743 = vpop.permute.xlu0 %742
          %744 = vrot.lane.b32.xlu0 %v333, 82
          %v745 = vpop.permute.xlu0 %744
          %746 = vrot.lane.b32.xlu0 %v337, 82
          %v747 = vpop.permute.xlu0 %746
          %vm748 = vcmp.lt.s32.totalorder %v348, 82
          %v749 = vsel %vm748, %v745, %v747
          %v750 = vsel %vm748, %v743, %v745
          %v751 = vsel %vm748, %v747, %v743
          %s752 = sld [smem:[#allocation4 + $0x2b]]
          %v753 = vstv %s752
          %v754 = vmul.f32 %v753, %v750
          %v755 = vmul.f32 %v753, %v749
          %v756 = vmul.f32 %v753, %v751
          %v757 = vadd.f32 %v739, %v754
          %v758 = vadd.f32 %v740, %v755
          %v759 = vadd.f32 %v741, %v756
          %760 = vrot.lane.b32.xlu0 %v473, 50
          %v761 = vpop.permute.xlu0 %760
          %762 = vrot.lane.b32.xlu0 %v477, 50
          %v763 = vpop.permute.xlu0 %762
          %764 = vrot.lane.b32.xlu0 %v481, 50
          %v765 = vpop.permute.xlu0 %764
          %v766 = vsel %vm640, %v763, %v765
          %v767 = vsel %vm640, %v761, %v763
          %v768 = vsel %vm640, %v765, %v761
          %s769 = sld [smem:[#allocation4 + $0x32]]
          %v770 = vstv %s769
          %v771 = vmul.f32 %v770, %v768
          %v772 = vmul.f32 %v770, %v767
          %v773 = vmul.f32 %v770, %v766
          %v774 = vadd.f32 %v757, %v771
          %v775 = vadd.f32 %v758, %v772
          %v776 = vadd.f32 %v759, %v773
          %777 = vrot.lane.b32.xlu0 %v473, 34
          %v778 = vpop.permute.xlu0 %777
          %779 = vrot.lane.b32.xlu0 %v477, 34
          %v780 = vpop.permute.xlu0 %779
          %781 = vrot.lane.b32.xlu0 %v481, 34
          %v782 = vpop.permute.xlu0 %781
          %v783 = vsel %vm658, %v780, %v782
          %v784 = vsel %vm658, %v778, %v780
          %v785 = vsel %vm658, %v782, %v778
          %s786 = sld [smem:[#allocation4 + $0x39]]
          %v787 = vstv %s786
          %v788 = vmul.f32 %v787, %v785
          %v789 = vmul.f32 %v787, %v784
          %v790 = vmul.f32 %v787, %v783
          %v791 = vadd.f32 %v774, %v788
          %v792 = vadd.f32 %v775, %v789
          %v793 = vadd.f32 %v776, %v790
          %794 = vrot.lane.b32.xlu0 %v473, 18
          %v795 = vpop.permute.xlu0 %794
          %796 = vrot.lane.b32.xlu0 %v477, 18
          %v797 = vpop.permute.xlu0 %796
          %798 = vrot.lane.b32.xlu0 %v481, 18
          %v799 = vpop.permute.xlu0 %798
          %v800 = vsel %vm676, %v797, %v799
          %v801 = vsel %vm676, %v795, %v797
          %v802 = vsel %vm676, %v799, %v795
          %s803 = sld [smem:[#allocation4 + $0x40]]
          %v804 = vstv %s803
          %v805 = vmul.f32 %v804, %v802
          %v806 = vmul.f32 %v804, %v801
          %v807 = vmul.f32 %v804, %v800
          %v808 = vadd.f32 %v791, %v805
          %v809 = vadd.f32 %v792, %v806
          %v810 = vadd.f32 %v793, %v807
          %811 = vrot.lane.b32.xlu0 %v473, 2
          %v812 = vpop.permute.xlu0 %811
          %813 = vrot.lane.b32.xlu0 %v477, 2
          %v814 = vpop.permute.xlu0 %813
          %815 = vrot.lane.b32.xlu0 %v481, 2
          %v816 = vpop.permute.xlu0 %815
          %v817 = vsel %vm694, %v814, %v816
          %v818 = vsel %vm694, %v812, %v814
          %v819 = vsel %vm694, %v816, %v812
          %s820 = sld [smem:[#allocation4 + $0x47]]
          %v821 = vstv %s820
          %v822 = vmul.f32 %v821, %v819
          %v823 = vmul.f32 %v821, %v818
          %v824 = vmul.f32 %v821, %v817
          %v825 = vadd.f32 %v808, %v822
          %v826 = vadd.f32 %v809, %v823
          %v827 = vadd.f32 %v810, %v824
          %828 = vrot.lane.b32.xlu0 %v473, 114
          %v829 = vpop.permute.xlu0 %828
          %830 = vrot.lane.b32.xlu0 %v477, 114
          %v831 = vpop.permute.xlu0 %830
          %832 = vrot.lane.b32.xlu0 %v481, 114
          %v833 = vpop.permute.xlu0 %832
          %v834 = vsel %vm712, %v831, %v833
          %v835 = vsel %vm712, %v829, %v831
          %v836 = vsel %vm712, %v833, %v829
          %s837 = sld [smem:[#allocation4 + $0x4e]]
          %v838 = vstv %s837
          %v839 = vmul.f32 %v838, %v835
          %v840 = vmul.f32 %v838, %v834
          %v841 = vmul.f32 %v838, %v836
          %v842 = vadd.f32 %v825, %v839
          %v843 = vadd.f32 %v826, %v840
          %v844 = vadd.f32 %v827, %v841
          %845 = vrot.lane.b32.xlu0 %v473, 98
          %v846 = vpop.permute.xlu0 %845
          %847 = vrot.lane.b32.xlu0 %v477, 98
          %v848 = vpop.permute.xlu0 %847
          %849 = vrot.lane.b32.xlu0 %v481, 98
          %v850 = vpop.permute.xlu0 %849
          %v851 = vsel %vm730, %v848, %v850
          %v852 = vsel %vm730, %v846, %v848
          %v853 = vsel %vm730, %v850, %v846
          %s854 = sld [smem:[#allocation4 + $0x55]]
          %v855 = vstv %s854
          %v856 = vmul.f32 %v855, %v852
          %v857 = vmul.f32 %v855, %v851
          %v858 = vmul.f32 %v855, %v853
          %v859 = vadd.f32 %v842, %v856
          %v860 = vadd.f32 %v843, %v857
          %v861 = vadd.f32 %v844, %v858
          %862 = vrot.lane.b32.xlu0 %v473, 82
          %v863 = vpop.permute.xlu0 %862
          %864 = vrot.lane.b32.xlu0 %v477, 82
          %v865 = vpop.permute.xlu0 %864
          %866 = vrot.lane.b32.xlu0 %v481, 82
          %v867 = vpop.permute.xlu0 %866
          %v868 = vsel %vm748, %v865, %v867
          %v869 = vsel %vm748, %v863, %v865
          %v870 = vsel %vm748, %v867, %v863
          %s871 = sld [smem:[#allocation4 + $0x5c]]
          %v872 = vstv %s871
          %v873 = vmul.f32 %v872, %v869
          %v874 = vmul.f32 %v872, %v868
          %v875 = vmul.f32 %v872, %v870
          %v876 = vadd.f32 %v859, %v873
          %v877 = vadd.f32 %v860, %v874
          %v878 = vadd.f32 %v861, %v875
          %s879 = scalar_lea.vmem [#allocation8], 1
          %v880 = vld [vmem:[%s879] ss:$8 sm:$0x7]
          %v884 = vcombine.low %v876, %v877
          %v886 = vunpack.c.l.s4 1966171168
          %v887 = vunpack.c.0.s8 %v886
          %v888 = vlaneseq
          %v889 = vshrl.u32 %v888, 7
          %v890 = vsub.s32 %v887, %v889
          %v891 = vrot.slane %v884, %v890
          %v893 = vunpack.c.l.s4 1966171168
          %v894 = vunpack.c.0.s8 %v893
          %v895 = vlaneseq
          %v896 = vshrl.u32 %v895, 7
          %v897 = vsub.s32 %v894, %v896
          %v898 = vrot.slane %v878, %v897
          %v899 = vcombine.low %v891, %v898
          %v901 = vunpack.c.l.s4 1966171168
          %v902 = vunpack.c.0.s8 %v901
          %v903 = vlaneseq
          %v904 = vshrl.u32 %v903, 7
          %v905 = vsub.s32 %v902, %v904
          %v906 = vrot.slane %v899, %v905
          %v908 = vmul.f32 %v880, %v906
          %v909 = vadd.f32 %v633, %v908
          %910 = vrot.lane.b32.xlu0 %v329, 49
          %v911 = vpop.permute.xlu0 %910
          %912 = vrot.lane.b32.xlu0 %v333, 49
          %v913 = vpop.permute.xlu0 %912
          %914 = vrot.lane.b32.xlu0 %v337, 49
          %v915 = vpop.permute.xlu0 %914
          %vm916 = vcmp.lt.s32.totalorder %v348, 49
          %v917 = vsel %vm916, %v913, %v915
          %v918 = vsel %vm916, %v911, %v913
          %v919 = vsel %vm916, %v915, %v911
          %s920 = sld [smem:[#allocation4 + $0x2]]
          %v921 = vstv %s920
          %v922 = vmul.f32 %v921, %v919
          %v923 = vmul.f32 %v921, %v918
          %v924 = vmul.f32 %v921, %v917
          %v925 = vadd.f32 %v922, 0.0
          %v926 = vadd.f32 %v923, 0.0
          %v927 = vadd.f32 %v924, 0.0
          %928 = vrot.lane.b32.xlu0 %v329, 33
          %v929 = vpop.permute.xlu0 %928
          %930 = vrot.lane.b32.xlu0 %v333, 33
          %v931 = vpop.permute.xlu0 %930
          %932 = vrot.lane.b32.xlu0 %v337, 33
          %v933 = vpop.permute.xlu0 %932
          %vm934 = vcmp.lt.s32.totalorder %v348, 33
          %v935 = vsel %vm934, %v931, %v933
          %v936 = vsel %vm934, %v929, %v931
          %v937 = vsel %vm934, %v933, %v929
          %s938 = sld [smem:[#allocation4 + $0x9]]
          %v939 = vstv %s938
          %v940 = vmul.f32 %v939, %v937
          %v941 = vmul.f32 %v939, %v936
          %v942 = vmul.f32 %v939, %v935
          %v943 = vadd.f32 %v925, %v940
          %v944 = vadd.f32 %v926, %v941
          %v945 = vadd.f32 %v927, %v942
          %946 = vrot.lane.b32.xlu0 %v329, 17
          %v947 = vpop.permute.xlu0 %946
          %948 = vrot.lane.b32.xlu0 %v333, 17
          %v949 = vpop.permute.xlu0 %948
          %950 = vrot.lane.b32.xlu0 %v337, 17
          %v951 = vpop.permute.xlu0 %950
          %vm952 = vcmp.lt.s32.totalorder %v348, 17
          %v953 = vsel %vm952, %v949, %v951
          %v954 = vsel %vm952, %v947, %v949
          %v955 = vsel %vm952, %v951, %v947
          %s956 = sld [smem:[#allocation4 + $0x10]]
          %v957 = vstv %s956
          %v958 = vmul.f32 %v957, %v955
          %v959 = vmul.f32 %v957, %v954
          %v960 = vmul.f32 %v957, %v953
          %v961 = vadd.f32 %v943, %v958
          %v962 = vadd.f32 %v944, %v959
          %v963 = vadd.f32 %v945, %v960
          %964 = vrot.lane.b32.xlu0 %v329, 1
          %v965 = vpop.permute.xlu0 %964
          %966 = vrot.lane.b32.xlu0 %v333, 1
          %v967 = vpop.permute.xlu0 %966
          %968 = vrot.lane.b32.xlu0 %v337, 1
          %v969 = vpop.permute.xlu0 %968
          %vm970 = vcmp.lt.s32.totalorder %v348, 1
          %v971 = vsel %vm970, %v967, %v969
          %v972 = vsel %vm970, %v965, %v967
          %v973 = vsel %vm970, %v969, %v965
          %s974 = sld [smem:[#allocation4 + $0x17]]
          %v975 = vstv %s974
          %v976 = vmul.f32 %v975, %v973
          %v977 = vmul.f32 %v975, %v972
          %v978 = vmul.f32 %v975, %v971
          %v979 = vadd.f32 %v961, %v976
          %v980 = vadd.f32 %v962, %v977
          %v981 = vadd.f32 %v963, %v978
          %982 = vrot.lane.b32.xlu0 %v329, 113
          %v983 = vpop.permute.xlu0 %982
          %984 = vrot.lane.b32.xlu0 %v333, 113
          %v985 = vpop.permute.xlu0 %984
          %986 = vrot.lane.b32.xlu0 %v337, 113
          %v987 = vpop.permute.xlu0 %986
          %vm988 = vcmp.lt.s32.totalorder %v348, 113
          %v989 = vsel %vm988, %v985, %v987
          %v990 = vsel %vm988, %v983, %v985
          %v991 = vsel %vm988, %v987, %v983
          %s992 = sld [smem:[#allocation4 + $0x1e]]
          %v993 = vstv %s992
          %v994 = vmul.f32 %v993, %v990
          %v995 = vmul.f32 %v993, %v989
          %v996 = vmul.f32 %v993, %v991
          %v997 = vadd.f32 %v979, %v994
          %v998 = vadd.f32 %v980, %v995
          %v999 = vadd.f32 %v981, %v996
          %1000 = vrot.lane.b32.xlu0 %v329, 97
          %v1001 = vpop.permute.xlu0 %1000
          %1002 = vrot.lane.b32.xlu0 %v333, 97
          %v1003 = vpop.permute.xlu0 %1002
          %1004 = vrot.lane.b32.xlu0 %v337, 97
          %v1005 = vpop.permute.xlu0 %1004
          %vm1006 = vcmp.lt.s32.totalorder %v348, 97
          %v1007 = vsel %vm1006, %v1003, %v1005
          %v1008 = vsel %vm1006, %v1001, %v1003
          %v1009 = vsel %vm1006, %v1005, %v1001
          %s1010 = sld [smem:[#allocation4 + $0x25]]
          %v1011 = vstv %s1010
          %v1012 = vmul.f32 %v1011, %v1008
          %v1013 = vmul.f32 %v1011, %v1007
          %v1014 = vmul.f32 %v1011, %v1009
          %v1015 = vadd.f32 %v997, %v1012
          %v1016 = vadd.f32 %v998, %v1013
          %v1017 = vadd.f32 %v999, %v1014
          %1018 = vrot.lane.b32.xlu0 %v329, 81
          %v1019 = vpop.permute.xlu0 %1018
          %1020 = vrot.lane.b32.xlu0 %v333, 81
          %v1021 = vpop.permute.xlu0 %1020
          %1022 = vrot.lane.b32.xlu0 %v337, 81
          %v1023 = vpop.permute.xlu0 %1022
          %vm1024 = vcmp.lt.s32.totalorder %v348, 81
          %v1025 = vsel %vm1024, %v1021, %v1023
          %v1026 = vsel %vm1024, %v1019, %v1021
          %v1027 = vsel %vm1024, %v1023, %v1019
          %s1028 = sld [smem:[#allocation4 + $0x2c]]
          %v1029 = vstv %s1028
          %v1030 = vmul.f32 %v1029, %v1026
          %v1031 = vmul.f32 %v1029, %v1025
          %v1032 = vmul.f32 %v1029, %v1027
          %v1033 = vadd.f32 %v1015, %v1030
          %v1034 = vadd.f32 %v1016, %v1031
          %v1035 = vadd.f32 %v1017, %v1032
          %1036 = vrot.lane.b32.xlu0 %v473, 49
          %v1037 = vpop.permute.xlu0 %1036
          %1038 = vrot.lane.b32.xlu0 %v477, 49
          %v1039 = vpop.permute.xlu0 %1038
          %1040 = vrot.lane.b32.xlu0 %v481, 49
          %v1041 = vpop.permute.xlu0 %1040
          %v1042 = vsel %vm916, %v1039, %v1041
          %v1043 = vsel %vm916, %v1037, %v1039
          %v1044 = vsel %vm916, %v1041, %v1037
          %s1045 = sld [smem:[#allocation4 + $0x33]]
          %v1046 = vstv %s1045
          %v1047 = vmul.f32 %v1046, %v1044
          %v1048 = vmul.f32 %v1046, %v1043
          %v1049 = vmul.f32 %v1046, %v1042
          %v1050 = vadd.f32 %v1033, %v1047
          %v1051 = vadd.f32 %v1034, %v1048
          %v1052 = vadd.f32 %v1035, %v1049
          %1053 = vrot.lane.b32.xlu0 %v473, 33
          %v1054 = vpop.permute.xlu0 %1053
          %1055 = vrot.lane.b32.xlu0 %v477, 33
          %v1056 = vpop.permute.xlu0 %1055
          %1057 = vrot.lane.b32.xlu0 %v481, 33
          %v1058 = vpop.permute.xlu0 %1057
          %v1059 = vsel %vm934, %v1056, %v1058
          %v1060 = vsel %vm934, %v1054, %v1056
          %v1061 = vsel %vm934, %v1058, %v1054
          %s1062 = sld [smem:[#allocation4 + $0x3a]]
          %v1063 = vstv %s1062
          %v1064 = vmul.f32 %v1063, %v1061
          %v1065 = vmul.f32 %v1063, %v1060
          %v1066 = vmul.f32 %v1063, %v1059
          %v1067 = vadd.f32 %v1050, %v1064
          %v1068 = vadd.f32 %v1051, %v1065
          %v1069 = vadd.f32 %v1052, %v1066
          %1070 = vrot.lane.b32.xlu0 %v473, 17
          %v1071 = vpop.permute.xlu0 %1070
          %1072 = vrot.lane.b32.xlu0 %v477, 17
          %v1073 = vpop.permute.xlu0 %1072
          %1074 = vrot.lane.b32.xlu0 %v481, 17
          %v1075 = vpop.permute.xlu0 %1074
          %v1076 = vsel %vm952, %v1073, %v1075
          %v1077 = vsel %vm952, %v1071, %v1073
          %v1078 = vsel %vm952, %v1075, %v1071
          %s1079 = sld [smem:[#allocation4 + $0x41]]
          %v1080 = vstv %s1079
          %v1081 = vmul.f32 %v1080, %v1078
          %v1082 = vmul.f32 %v1080, %v1077
          %v1083 = vmul.f32 %v1080, %v1076
          %v1084 = vadd.f32 %v1067, %v1081
          %v1085 = vadd.f32 %v1068, %v1082
          %v1086 = vadd.f32 %v1069, %v1083
          %1087 = vrot.lane.b32.xlu0 %v473, 1
          %v1088 = vpop.permute.xlu0 %1087
          %1089 = vrot.lane.b32.xlu0 %v477, 1
          %v1090 = vpop.permute.xlu0 %1089
          %1091 = vrot.lane.b32.xlu0 %v481, 1
          %v1092 = vpop.permute.xlu0 %1091
          %v1093 = vsel %vm970, %v1090, %v1092
          %v1094 = vsel %vm970, %v1088, %v1090
          %v1095 = vsel %vm970, %v1092, %v1088
          %s1096 = sld [smem:[#allocation4 + $0x48]]
          %v1097 = vstv %s1096
          %v1098 = vmul.f32 %v1097, %v1095
          %v1099 = vmul.f32 %v1097, %v1094
          %v1100 = vmul.f32 %v1097, %v1093
          %v1101 = vadd.f32 %v1084, %v1098
          %v1102 = vadd.f32 %v1085, %v1099
          %v1103 = vadd.f32 %v1086, %v1100
          %1104 = vrot.lane.b32.xlu0 %v473, 113
          %v1105 = vpop.permute.xlu0 %1104
          %1106 = vrot.lane.b32.xlu0 %v477, 113
          %v1107 = vpop.permute.xlu0 %1106
          %1108 = vrot.lane.b32.xlu0 %v481, 113
          %v1109 = vpop.permute.xlu0 %1108
          %v1110 = vsel %vm988, %v1107, %v1109
          %v1111 = vsel %vm988, %v1105, %v1107
          %v1112 = vsel %vm988, %v1109, %v1105
          %s1113 = sld [smem:[#allocation4 + $0x4f]]
          %v1114 = vstv %s1113
          %v1115 = vmul.f32 %v1114, %v1111
          %v1116 = vmul.f32 %v1114, %v1110
          %v1117 = vmul.f32 %v1114, %v1112
          %v1118 = vadd.f32 %v1101, %v1115
          %v1119 = vadd.f32 %v1102, %v1116
          %v1120 = vadd.f32 %v1103, %v1117
          %1121 = vrot.lane.b32.xlu0 %v473, 97
          %v1122 = vpop.permute.xlu0 %1121
          %1123 = vrot.lane.b32.xlu0 %v477, 97
          %v1124 = vpop.permute.xlu0 %1123
          %1125 = vrot.lane.b32.xlu0 %v481, 97
          %v1126 = vpop.permute.xlu0 %1125
          %v1127 = vsel %vm1006, %v1124, %v1126
          %v1128 = vsel %vm1006, %v1122, %v1124
          %v1129 = vsel %vm1006, %v1126, %v1122
          %s1130 = sld [smem:[#allocation4 + $0x56]]
          %v1131 = vstv %s1130
          %v1132 = vmul.f32 %v1131, %v1128
          %v1133 = vmul.f32 %v1131, %v1127
          %v1134 = vmul.f32 %v1131, %v1129
          %v1135 = vadd.f32 %v1118, %v1132
          %v1136 = vadd.f32 %v1119, %v1133
          %v1137 = vadd.f32 %v1120, %v1134
          %1138 = vrot.lane.b32.xlu0 %v473, 81
          %v1139 = vpop.permute.xlu0 %1138
          %1140 = vrot.lane.b32.xlu0 %v477, 81
          %v1141 = vpop.permute.xlu0 %1140
          %1142 = vrot.lane.b32.xlu0 %v481, 81
          %v1143 = vpop.permute.xlu0 %1142
          %v1144 = vsel %vm1024, %v1141, %v1143
          %v1145 = vsel %vm1024, %v1139, %v1141
          %v1146 = vsel %vm1024, %v1143, %v1139
          %s1147 = sld [smem:[#allocation4 + $0x5d]]
          %v1148 = vstv %s1147
          %v1149 = vmul.f32 %v1148, %v1145
          %v1150 = vmul.f32 %v1148, %v1144
          %v1151 = vmul.f32 %v1148, %v1146
          %v1152 = vadd.f32 %v1135, %v1149
          %v1153 = vadd.f32 %v1136, %v1150
          %v1154 = vadd.f32 %v1137, %v1151
          %s1155 = scalar_lea.vmem [#allocation8], 2
          %v1156 = vld [vmem:[%s1155] ss:$8 sm:$0x7]
          %v1160 = vcombine.low %v1152, %v1153
          %v1162 = vunpack.c.l.s4 1966171168
          %v1163 = vunpack.c.0.s8 %v1162
          %v1164 = vlaneseq
          %v1165 = vshrl.u32 %v1164, 7
          %v1166 = vsub.s32 %v1163, %v1165
          %v1167 = vrot.slane %v1160, %v1166
          %v1169 = vunpack.c.l.s4 1966171168
          %v1170 = vunpack.c.0.s8 %v1169
          %v1171 = vlaneseq
          %v1172 = vshrl.u32 %v1171, 7
          %v1173 = vsub.s32 %v1170, %v1172
          %v1174 = vrot.slane %v1154, %v1173
          %v1175 = vcombine.low %v1167, %v1174
          %v1177 = vunpack.c.l.s4 1966171168
          %v1178 = vunpack.c.0.s8 %v1177
          %v1179 = vlaneseq
          %v1180 = vshrl.u32 %v1179, 7
          %v1181 = vsub.s32 %v1178, %v1180
          %v1182 = vrot.slane %v1175, %v1181
          %v1184 = vmul.f32 %v1156, %v1182
          %v1185 = vadd.f32 %v909, %v1184
          %1186 = vrot.lane.b32.xlu0 %v329, 48
          %v1187 = vpop.permute.xlu0 %1186
          %1188 = vrot.lane.b32.xlu0 %v333, 48
          %v1189 = vpop.permute.xlu0 %1188
          %1190 = vrot.lane.b32.xlu0 %v337, 48
          %v1191 = vpop.permute.xlu0 %1190
          %vm1192 = vcmp.lt.s32.totalorder %v348, 48
          %v1193 = vsel %vm1192, %v1189, %v1191
          %v1194 = vsel %vm1192, %v1187, %v1189
          %v1195 = vsel %vm1192, %v1191, %v1187
          %s1196 = sld [smem:[#allocation4 + $0x3]]
          %v1197 = vstv %s1196
          %v1198 = vmul.f32 %v1197, %v1195
          %v1199 = vmul.f32 %v1197, %v1194
          %v1200 = vmul.f32 %v1197, %v1193
          %v1201 = vadd.f32 %v1198, 0.0
          %v1202 = vadd.f32 %v1199, 0.0
          %v1203 = vadd.f32 %v1200, 0.0
          %1204 = vrot.lane.b32.xlu0 %v329, 32
          %v1205 = vpop.permute.xlu0 %1204
          %1206 = vrot.lane.b32.xlu0 %v333, 32
          %v1207 = vpop.permute.xlu0 %1206
          %1208 = vrot.lane.b32.xlu0 %v337, 32
          %v1209 = vpop.permute.xlu0 %1208
          %vm1210 = vcmp.lt.s32.totalorder %v348, 32
          %v1211 = vsel %vm1210, %v1207, %v1209
          %v1212 = vsel %vm1210, %v1205, %v1207
          %v1213 = vsel %vm1210, %v1209, %v1205
          %s1214 = sld [smem:[#allocation4 + $0xa]]
          %v1215 = vstv %s1214
          %v1216 = vmul.f32 %v1215, %v1213
          %v1217 = vmul.f32 %v1215, %v1212
          %v1218 = vmul.f32 %v1215, %v1211
          %v1219 = vadd.f32 %v1201, %v1216
          %v1220 = vadd.f32 %v1202, %v1217
          %v1221 = vadd.f32 %v1203, %v1218
          %1222 = vrot.lane.b32.xlu0 %v329, 16
          %v1223 = vpop.permute.xlu0 %1222
          %1224 = vrot.lane.b32.xlu0 %v333, 16
          %v1225 = vpop.permute.xlu0 %1224
          %1226 = vrot.lane.b32.xlu0 %v337, 16
          %v1227 = vpop.permute.xlu0 %1226
          %vm1228 = vcmp.lt.s32.totalorder %v348, 16
          %v1229 = vsel %vm1228, %v1225, %v1227
          %v1230 = vsel %vm1228, %v1223, %v1225
          %v1231 = vsel %vm1228, %v1227, %v1223
          %s1232 = sld [smem:[#allocation4 + $0x11]]
          %v1233 = vstv %s1232
          %v1234 = vmul.f32 %v1233, %v1231
          %v1235 = vmul.f32 %v1233, %v1230
          %v1236 = vmul.f32 %v1233, %v1229
          %v1237 = vadd.f32 %v1219, %v1234
          %v1238 = vadd.f32 %v1220, %v1235
          %v1239 = vadd.f32 %v1221, %v1236
          %s1240 = sld [smem:[#allocation4 + $0x18]]
          %v1241 = vstv %s1240
          %v1242 = vmul.f32 %v1241, %v323
          %v1244 = vlaneseq
          %v1245 = vshrl.u32 %v1244, 7
          %v1246 = vsub.s32 0, %v1245
          %v1247 = vrot.slane %v1242, %v1246
          %v1248 = vlaneseq
          %v1249 = vshrl.u32 %v1248, 7
          %v1250 = vsub.s32 1, %v1249
          %v1251 = vrot.slane %v1242, %v1250
          %v1252 = vlaneseq
          %v1253 = vshrl.u32 %v1252, 7
          %v1254 = vsub.s32 2, %v1253
          %v1255 = vrot.slane %v1242, %v1254
          %v1259 = vadd.f32 %v1237, %v1247
          %v1260 = vadd.f32 %v1238, %v1251
          %v1261 = vadd.f32 %v1239, %v1255
          %1262 = vrot.lane.b32.xlu0 %v329, 112
          %v1263 = vpop.permute.xlu0 %1262
          %1264 = vrot.lane.b32.xlu0 %v333, 112
          %v1265 = vpop.permute.xlu0 %1264
          %1266 = vrot.lane.b32.xlu0 %v337, 112
          %v1267 = vpop.permute.xlu0 %1266
          %vm1268 = vcmp.lt.s32.totalorder %v348, 112
          %v1269 = vsel %vm1268, %v1265, %v1267
          %v1270 = vsel %vm1268, %v1263, %v1265
          %v1271 = vsel %vm1268, %v1267, %v1263
          %s1272 = sld [smem:[#allocation4 + $0x1f]]
          %v1273 = vstv %s1272
          %v1274 = vmul.f32 %v1273, %v1270
          %v1275 = vmul.f32 %v1273, %v1269
          %v1276 = vmul.f32 %v1273, %v1271
          %v1277 = vadd.f32 %v1259, %v1274
          %v1278 = vadd.f32 %v1260, %v1275
          %v1279 = vadd.f32 %v1261, %v1276
          %1280 = vrot.lane.b32.xlu0 %v329, 96
          %v1281 = vpop.permute.xlu0 %1280
          %1282 = vrot.lane.b32.xlu0 %v333, 96
          %v1283 = vpop.permute.xlu0 %1282
          %1284 = vrot.lane.b32.xlu0 %v337, 96
          %v1285 = vpop.permute.xlu0 %1284
          %vm1286 = vcmp.lt.s32.totalorder %v348, 96
          %v1287 = vsel %vm1286, %v1283, %v1285
          %v1288 = vsel %vm1286, %v1281, %v1283
          %v1289 = vsel %vm1286, %v1285, %v1281
          %s1290 = sld [smem:[#allocation4 + $0x26]]
          %v1291 = vstv %s1290
          %v1292 = vmul.f32 %v1291, %v1288
          %v1293 = vmul.f32 %v1291, %v1287
          %v1294 = vmul.f32 %v1291, %v1289
          %v1295 = vadd.f32 %v1277, %v1292
          %v1296 = vadd.f32 %v1278, %v1293
          %v1297 = vadd.f32 %v1279, %v1294
          %1298 = vrot.lane.b32.xlu0 %v329, 80
          %v1299 = vpop.permute.xlu0 %1298
          %1300 = vrot.lane.b32.xlu0 %v333, 80
          %v1301 = vpop.permute.xlu0 %1300
          %1302 = vrot.lane.b32.xlu0 %v337, 80
          %v1303 = vpop.permute.xlu0 %1302
          %vm1304 = vcmp.lt.s32.totalorder %v348, 80
          %v1305 = vsel %vm1304, %v1301, %v1303
          %v1306 = vsel %vm1304, %v1299, %v1301
          %v1307 = vsel %vm1304, %v1303, %v1299
          %s1308 = sld [smem:[#allocation4 + $0x2d]]
          %v1309 = vstv %s1308
          %v1310 = vmul.f32 %v1309, %v1306
          %v1311 = vmul.f32 %v1309, %v1305
          %v1312 = vmul.f32 %v1309, %v1307
          %v1313 = vadd.f32 %v1295, %v1310
          %v1314 = vadd.f32 %v1296, %v1311
          %v1315 = vadd.f32 %v1297, %v1312
          %1316 = vrot.lane.b32.xlu0 %v473, 48
          %v1317 = vpop.permute.xlu0 %1316
          %1318 = vrot.lane.b32.xlu0 %v477, 48
          %v1319 = vpop.permute.xlu0 %1318
          %1320 = vrot.lane.b32.xlu0 %v481, 48
          %v1321 = vpop.permute.xlu0 %1320
          %v1322 = vsel %vm1192, %v1319, %v1321
          %v1323 = vsel %vm1192, %v1317, %v1319
          %v1324 = vsel %vm1192, %v1321, %v1317
          %s1325 = sld [smem:[#allocation4 + $0x34]]
          %v1326 = vstv %s1325
          %v1327 = vmul.f32 %v1326, %v1324
          %v1328 = vmul.f32 %v1326, %v1323
          %v1329 = vmul.f32 %v1326, %v1322
          %v1330 = vadd.f32 %v1313, %v1327
          %v1331 = vadd.f32 %v1314, %v1328
          %v1332 = vadd.f32 %v1315, %v1329
          %1333 = vrot.lane.b32.xlu0 %v473, 32
          %v1334 = vpop.permute.xlu0 %1333
          %1335 = vrot.lane.b32.xlu0 %v477, 32
          %v1336 = vpop.permute.xlu0 %1335
          %1337 = vrot.lane.b32.xlu0 %v481, 32
          %v1338 = vpop.permute.xlu0 %1337
          %v1339 = vsel %vm1210, %v1336, %v1338
          %v1340 = vsel %vm1210, %v1334, %v1336
          %v1341 = vsel %vm1210, %v1338, %v1334
          %s1342 = sld [smem:[#allocation4 + $0x3b]]
          %v1343 = vstv %s1342
          %v1344 = vmul.f32 %v1343, %v1341
          %v1345 = vmul.f32 %v1343, %v1340
          %v1346 = vmul.f32 %v1343, %v1339
          %v1347 = vadd.f32 %v1330, %v1344
          %v1348 = vadd.f32 %v1331, %v1345
          %v1349 = vadd.f32 %v1332, %v1346
          %1350 = vrot.lane.b32.xlu0 %v473, 16
          %v1351 = vpop.permute.xlu0 %1350
          %1352 = vrot.lane.b32.xlu0 %v477, 16
          %v1353 = vpop.permute.xlu0 %1352
          %1354 = vrot.lane.b32.xlu0 %v481, 16
          %v1355 = vpop.permute.xlu0 %1354
          %v1356 = vsel %vm1228, %v1353, %v1355
          %v1357 = vsel %vm1228, %v1351, %v1353
          %v1358 = vsel %vm1228, %v1355, %v1351
          %s1359 = sld [smem:[#allocation4 + $0x42]]
          %v1360 = vstv %s1359
          %v1361 = vmul.f32 %v1360, %v1358
          %v1362 = vmul.f32 %v1360, %v1357
          %v1363 = vmul.f32 %v1360, %v1356
          %v1364 = vadd.f32 %v1347, %v1361
          %v1365 = vadd.f32 %v1348, %v1362
          %v1366 = vadd.f32 %v1349, %v1363
          %s1367 = sld [smem:[#allocation4 + $0x49]]
          %v1368 = vstv %s1367
          %v1369 = vmul.f32 %v1368, %v324
          %v1371 = vlaneseq
          %v1372 = vshrl.u32 %v1371, 7
          %v1373 = vsub.s32 0, %v1372
          %v1374 = vrot.slane %v1369, %v1373
          %v1375 = vlaneseq
          %v1376 = vshrl.u32 %v1375, 7
          %v1377 = vsub.s32 1, %v1376
          %v1378 = vrot.slane %v1369, %v1377
          %v1379 = vlaneseq
          %v1380 = vshrl.u32 %v1379, 7
          %v1381 = vsub.s32 2, %v1380
          %v1382 = vrot.slane %v1369, %v1381
          %v1386 = vadd.f32 %v1364, %v1374
          %v1387 = vadd.f32 %v1365, %v1378
          %v1388 = vadd.f32 %v1366, %v1382
          %1389 = vrot.lane.b32.xlu0 %v473, 112
          %v1390 = vpop.permute.xlu0 %1389
          %1391 = vrot.lane.b32.xlu0 %v477, 112
          %v1392 = vpop.permute.xlu0 %1391
          %1393 = vrot.lane.b32.xlu0 %v481, 112
          %v1394 = vpop.permute.xlu0 %1393
          %v1395 = vsel %vm1268, %v1392, %v1394
          %v1396 = vsel %vm1268, %v1390, %v1392
          %v1397 = vsel %vm1268, %v1394, %v1390
          %s1398 = sld [smem:[#allocation4 + $0x50]]
          %v1399 = vstv %s1398
          %v1400 = vmul.f32 %v1399, %v1396
          %v1401 = vmul.f32 %v1399, %v1395
          %v1402 = vmul.f32 %v1399, %v1397
          %v1403 = vadd.f32 %v1386, %v1400
          %v1404 = vadd.f32 %v1387, %v1401
          %v1405 = vadd.f32 %v1388, %v1402
          %1406 = vrot.lane.b32.xlu0 %v473, 96
          %v1407 = vpop.permute.xlu0 %1406
          %1408 = vrot.lane.b32.xlu0 %v477, 96
          %v1409 = vpop.permute.xlu0 %1408
          %1410 = vrot.lane.b32.xlu0 %v481, 96
          %v1411 = vpop.permute.xlu0 %1410
          %v1412 = vsel %vm1286, %v1409, %v1411
          %v1413 = vsel %vm1286, %v1407, %v1409
          %v1414 = vsel %vm1286, %v1411, %v1407
          %s1415 = sld [smem:[#allocation4 + $0x57]]
          %v1416 = vstv %s1415
          %v1417 = vmul.f32 %v1416, %v1413
          %v1418 = vmul.f32 %v1416, %v1412
          %v1419 = vmul.f32 %v1416, %v1414
          %v1420 = vadd.f32 %v1403, %v1417
          %v1421 = vadd.f32 %v1404, %v1418
          %v1422 = vadd.f32 %v1405, %v1419
          %1423 = vrot.lane.b32.xlu0 %v473, 80
          %v1424 = vpop.permute.xlu0 %1423
          %1425 = vrot.lane.b32.xlu0 %v477, 80
          %v1426 = vpop.permute.xlu0 %1425
          %1427 = vrot.lane.b32.xlu0 %v481, 80
          %v1428 = vpop.permute.xlu0 %1427
          %v1429 = vsel %vm1304, %v1426, %v1428
          %v1430 = vsel %vm1304, %v1424, %v1426
          %v1431 = vsel %vm1304, %v1428, %v1424
          %s1432 = sld [smem:[#allocation4 + $0x5e]]
          %v1433 = vstv %s1432
          %v1434 = vmul.f32 %v1433, %v1430
          %v1435 = vmul.f32 %v1433, %v1429
          %v1436 = vmul.f32 %v1433, %v1431
          %v1437 = vadd.f32 %v1420, %v1434
          %v1438 = vadd.f32 %v1421, %v1435
          %v1439 = vadd.f32 %v1422, %v1436
          %s1440 = scalar_lea.vmem [#allocation8], 3
          %v1441 = vld [vmem:[%s1440] ss:$8 sm:$0x7]
          %v1445 = vcombine.low %v1437, %v1438
          %v1447 = vunpack.c.l.s4 1966171168
          %v1448 = vunpack.c.0.s8 %v1447
          %v1449 = vlaneseq
          %v1450 = vshrl.u32 %v1449, 7
          %v1451 = vsub.s32 %v1448, %v1450
          %v1452 = vrot.slane %v1445, %v1451
          %v1454 = vunpack.c.l.s4 1966171168
          %v1455 = vunpack.c.0.s8 %v1454
          %v1456 = vlaneseq
          %v1457 = vshrl.u32 %v1456, 7
          %v1458 = vsub.s32 %v1455, %v1457
          %v1459 = vrot.slane %v1439, %v1458
          %v1460 = vcombine.low %v1452, %v1459
          %v1462 = vunpack.c.l.s4 1966171168
          %v1463 = vunpack.c.0.s8 %v1462
          %v1464 = vlaneseq
          %v1465 = vshrl.u32 %v1464, 7
          %v1466 = vsub.s32 %v1463, %v1465
          %v1467 = vrot.slane %v1460, %v1466
          %v1469 = vmul.f32 %v1441, %v1467
          %v1470 = vadd.f32 %v1185, %v1469
          %1471 = vrot.lane.b32.xlu0 %v329, 47
          %v1472 = vpop.permute.xlu0 %1471
          %1473 = vrot.lane.b32.xlu0 %v333, 47
          %v1474 = vpop.permute.xlu0 %1473
          %1475 = vrot.lane.b32.xlu0 %v337, 47
          %v1476 = vpop.permute.xlu0 %1475
          %vm1477 = vcmp.lt.s32.totalorder %v348, 47
          %v1478 = vsel %vm1477, %v1474, %v1476
          %v1479 = vsel %vm1477, %v1472, %v1474
          %v1480 = vsel %vm1477, %v1476, %v1472
          %s1481 = sld [smem:[#allocation4 + $0x4]]
          %v1482 = vstv %s1481
          %v1483 = vmul.f32 %v1482, %v1480
          %v1484 = vmul.f32 %v1482, %v1479
          %v1485 = vmul.f32 %v1482, %v1478
          %v1486 = vadd.f32 %v1483, 0.0
          %v1487 = vadd.f32 %v1484, 0.0
          %v1488 = vadd.f32 %v1485, 0.0
          %1489 = vrot.lane.b32.xlu0 %v329, 31
          %v1490 = vpop.permute.xlu0 %1489
          %1491 = vrot.lane.b32.xlu0 %v333, 31
          %v1492 = vpop.permute.xlu0 %1491
          %1493 = vrot.lane.b32.xlu0 %v337, 31
          %v1494 = vpop.permute.xlu0 %1493
          %vm1495 = vcmp.lt.s32.totalorder %v348, 31
          %v1496 = vsel %vm1495, %v1492, %v1494
          %v1497 = vsel %vm1495, %v1490, %v1492
          %v1498 = vsel %vm1495, %v1494, %v1490
          %s1499 = sld [smem:[#allocation4 + $0xb]]
          %v1500 = vstv %s1499
          %v1501 = vmul.f32 %v1500, %v1498
          %v1502 = vmul.f32 %v1500, %v1497
          %v1503 = vmul.f32 %v1500, %v1496
          %v1504 = vadd.f32 %v1486, %v1501
          %v1505 = vadd.f32 %v1487, %v1502
          %v1506 = vadd.f32 %v1488, %v1503
          %1507 = vrot.lane.b32.xlu0 %v329, 15
          %v1508 = vpop.permute.xlu0 %1507
          %1509 = vrot.lane.b32.xlu0 %v333, 15
          %v1510 = vpop.permute.xlu0 %1509
          %1511 = vrot.lane.b32.xlu0 %v337, 15
          %v1512 = vpop.permute.xlu0 %1511
          %vm1513 = vcmp.lt.s32.totalorder %v348, 15
          %v1514 = vsel %vm1513, %v1510, %v1512
          %v1515 = vsel %vm1513, %v1508, %v1510
          %v1516 = vsel %vm1513, %v1512, %v1508
          %s1517 = sld [smem:[#allocation4 + $0x12]]
          %v1518 = vstv %s1517
          %v1519 = vmul.f32 %v1518, %v1516
          %v1520 = vmul.f32 %v1518, %v1515
          %v1521 = vmul.f32 %v1518, %v1514
          %v1522 = vadd.f32 %v1504, %v1519
          %v1523 = vadd.f32 %v1505, %v1520
          %v1524 = vadd.f32 %v1506, %v1521
          %1525 = vrot.lane.b32.xlu0 %v329, 127
          %v1526 = vpop.permute.xlu0 %1525
          %1527 = vrot.lane.b32.xlu0 %v333, 127
          %v1528 = vpop.permute.xlu0 %1527
          %1529 = vrot.lane.b32.xlu0 %v337, 127
          %v1530 = vpop.permute.xlu0 %1529
          %vm1531 = vcmp.lt.s32.totalorder %v348, 127
          %v1532 = vsel %vm1531, %v1528, %v1530
          %v1533 = vsel %vm1531, %v1526, %v1528
          %v1534 = vsel %vm1531, %v1530, %v1526
          %s1535 = sld [smem:[#allocation4 + $0x19]]
          %v1536 = vstv %s1535
          %v1537 = vmul.f32 %v1536, %v1533
          %v1538 = vmul.f32 %v1536, %v1532
          %v1539 = vmul.f32 %v1536, %v1534
          %v1540 = vadd.f32 %v1522, %v1537
          %v1541 = vadd.f32 %v1523, %v1538
          %v1542 = vadd.f32 %v1524, %v1539
          %1543 = vrot.lane.b32.xlu0 %v329, 111
          %v1544 = vpop.permute.xlu0 %1543
          %1545 = vrot.lane.b32.xlu0 %v333, 111
          %v1546 = vpop.permute.xlu0 %1545
          %1547 = vrot.lane.b32.xlu0 %v337, 111
          %v1548 = vpop.permute.xlu0 %1547
          %vm1549 = vcmp.lt.s32.totalorder %v348, 111
          %v1550 = vsel %vm1549, %v1546, %v1548
          %v1551 = vsel %vm1549, %v1544, %v1546
          %v1552 = vsel %vm1549, %v1548, %v1544
          %s1553 = sld [smem:[#allocation4 + $0x20]]
          %v1554 = vstv %s1553
          %v1555 = vmul.f32 %v1554, %v1551
          %v1556 = vmul.f32 %v1554, %v1550
          %v1557 = vmul.f32 %v1554, %v1552
          %v1558 = vadd.f32 %v1540, %v1555
          %v1559 = vadd.f32 %v1541, %v1556
          %v1560 = vadd.f32 %v1542, %v1557
          %1561 = vrot.lane.b32.xlu0 %v329, 95
          %v1562 = vpop.permute.xlu0 %1561
          %1563 = vrot.lane.b32.xlu0 %v333, 95
          %v1564 = vpop.permute.xlu0 %1563
          %1565 = vrot.lane.b32.xlu0 %v337, 95
          %v1566 = vpop.permute.xlu0 %1565
          %vm1567 = vcmp.lt.s32.totalorder %v348, 95
          %v1568 = vsel %vm1567, %v1564, %v1566
          %v1569 = vsel %vm1567, %v1562, %v1564
          %v1570 = vsel %vm1567, %v1566, %v1562
          %s1571 = sld [smem:[#allocation4 + $0x27]]
          %v1572 = vstv %s1571
          %v1573 = vmul.f32 %v1572, %v1569
          %v1574 = vmul.f32 %v1572, %v1568
          %v1575 = vmul.f32 %v1572, %v1570
          %v1576 = vadd.f32 %v1558, %v1573
          %v1577 = vadd.f32 %v1559, %v1574
          %v1578 = vadd.f32 %v1560, %v1575
          %1579 = vrot.lane.b32.xlu0 %v329, 79
          %v1580 = vpop.permute.xlu0 %1579
          %1581 = vrot.lane.b32.xlu0 %v333, 79
          %v1582 = vpop.permute.xlu0 %1581
          %1583 = vrot.lane.b32.xlu0 %v337, 79
          %v1584 = vpop.permute.xlu0 %1583
          %vm1585 = vcmp.lt.s32.totalorder %v348, 79
          %v1586 = vsel %vm1585, %v1582, %v1584
          %v1587 = vsel %vm1585, %v1580, %v1582
          %v1588 = vsel %vm1585, %v1584, %v1580
          %s1589 = sld [smem:[#allocation4 + $0x2e]]
          %v1590 = vstv %s1589
          %v1591 = vmul.f32 %v1590, %v1587
          %v1592 = vmul.f32 %v1590, %v1586
          %v1593 = vmul.f32 %v1590, %v1588
          %v1594 = vadd.f32 %v1576, %v1591
          %v1595 = vadd.f32 %v1577, %v1592
          %v1596 = vadd.f32 %v1578, %v1593
          %1597 = vrot.lane.b32.xlu0 %v473, 47
          %v1598 = vpop.permute.xlu0 %1597
          %1599 = vrot.lane.b32.xlu0 %v477, 47
          %v1600 = vpop.permute.xlu0 %1599
          %1601 = vrot.lane.b32.xlu0 %v481, 47
          %v1602 = vpop.permute.xlu0 %1601
          %v1603 = vsel %vm1477, %v1600, %v1602
          %v1604 = vsel %vm1477, %v1598, %v1600
          %v1605 = vsel %vm1477, %v1602, %v1598
          %s1606 = sld [smem:[#allocation4 + $0x35]]
          %v1607 = vstv %s1606
          %v1608 = vmul.f32 %v1607, %v1605
          %v1609 = vmul.f32 %v1607, %v1604
          %v1610 = vmul.f32 %v1607, %v1603
          %v1611 = vadd.f32 %v1594, %v1608
          %v1612 = vadd.f32 %v1595, %v1609
          %v1613 = vadd.f32 %v1596, %v1610
          %1614 = vrot.lane.b32.xlu0 %v473, 31
          %v1615 = vpop.permute.xlu0 %1614
          %1616 = vrot.lane.b32.xlu0 %v477, 31
          %v1617 = vpop.permute.xlu0 %1616
          %1618 = vrot.lane.b32.xlu0 %v481, 31
          %v1619 = vpop.permute.xlu0 %1618
          %v1620 = vsel %vm1495, %v1617, %v1619
          %v1621 = vsel %vm1495, %v1615, %v1617
          %v1622 = vsel %vm1495, %v1619, %v1615
          %s1623 = sld [smem:[#allocation4 + $0x3c]]
          %v1624 = vstv %s1623
          %v1625 = vmul.f32 %v1624, %v1622
          %v1626 = vmul.f32 %v1624, %v1621
          %v1627 = vmul.f32 %v1624, %v1620
          %v1628 = vadd.f32 %v1611, %v1625
          %v1629 = vadd.f32 %v1612, %v1626
          %v1630 = vadd.f32 %v1613, %v1627
          %1631 = vrot.lane.b32.xlu0 %v473, 15
          %v1632 = vpop.permute.xlu0 %1631
          %1633 = vrot.lane.b32.xlu0 %v477, 15
          %v1634 = vpop.permute.xlu0 %1633
          %1635 = vrot.lane.b32.xlu0 %v481, 15
          %v1636 = vpop.permute.xlu0 %1635
          %v1637 = vsel %vm1513, %v1634, %v1636
          %v1638 = vsel %vm1513, %v1632, %v1634
          %v1639 = vsel %vm1513, %v1636, %v1632
          %s1640 = sld [smem:[#allocation4 + $0x43]]
          %v1641 = vstv %s1640
          %v1642 = vmul.f32 %v1641, %v1639
          %v1643 = vmul.f32 %v1641, %v1638
          %v1644 = vmul.f32 %v1641, %v1637
          %v1645 = vadd.f32 %v1628, %v1642
          %v1646 = vadd.f32 %v1629, %v1643
          %v1647 = vadd.f32 %v1630, %v1644
          %1648 = vrot.lane.b32.xlu0 %v473, 127
          %v1649 = vpop.permute.xlu0 %1648
          %1650 = vrot.lane.b32.xlu0 %v477, 127
          %v1651 = vpop.permute.xlu0 %1650
          %1652 = vrot.lane.b32.xlu0 %v481, 127
          %v1653 = vpop.permute.xlu0 %1652
          %v1654 = vsel %vm1531, %v1651, %v1653
          %v1655 = vsel %vm1531, %v1649, %v1651
          %v1656 = vsel %vm1531, %v1653, %v1649
          %s1657 = sld [smem:[#allocation4 + $0x4a]]
          %v1658 = vstv %s1657
          %v1659 = vmul.f32 %v1658, %v1655
          %v1660 = vmul.f32 %v1658, %v1654
          %v1661 = vmul.f32 %v1658, %v1656
          %v1662 = vadd.f32 %v1645, %v1659
          %v1663 = vadd.f32 %v1646, %v1660
          %v1664 = vadd.f32 %v1647, %v1661
          %1665 = vrot.lane.b32.xlu0 %v473, 111
          %v1666 = vpop.permute.xlu0 %1665
          %1667 = vrot.lane.b32.xlu0 %v477, 111
          %v1668 = vpop.permute.xlu0 %1667
          %1669 = vrot.lane.b32.xlu0 %v481, 111
          %v1670 = vpop.permute.xlu0 %1669
          %v1671 = vsel %vm1549, %v1668, %v1670
          %v1672 = vsel %vm1549, %v1666, %v1668
          %v1673 = vsel %vm1549, %v1670, %v1666
          %s1674 = sld [smem:[#allocation4 + $0x51]]
          %v1675 = vstv %s1674
          %v1676 = vmul.f32 %v1675, %v1672
          %v1677 = vmul.f32 %v1675, %v1671
          %v1678 = vmul.f32 %v1675, %v1673
          %v1679 = vadd.f32 %v1662, %v1676
          %v1680 = vadd.f32 %v1663, %v1677
          %v1681 = vadd.f32 %v1664, %v1678
          %1682 = vrot.lane.b32.xlu0 %v473, 95
          %v1683 = vpop.permute.xlu0 %1682
          %1684 = vrot.lane.b32.xlu0 %v477, 95
          %v1685 = vpop.permute.xlu0 %1684
          %1686 = vrot.lane.b32.xlu0 %v481, 95
          %v1687 = vpop.permute.xlu0 %1686
          %v1688 = vsel %vm1567, %v1685, %v1687
          %v1689 = vsel %vm1567, %v1683, %v1685
          %v1690 = vsel %vm1567, %v1687, %v1683
          %s1691 = sld [smem:[#allocation4 + $0x58]]
          %v1692 = vstv %s1691
          %v1693 = vmul.f32 %v1692, %v1689
          %v1694 = vmul.f32 %v1692, %v1688
          %v1695 = vmul.f32 %v1692, %v1690
          %v1696 = vadd.f32 %v1679, %v1693
          %v1697 = vadd.f32 %v1680, %v1694
          %v1698 = vadd.f32 %v1681, %v1695
          %1699 = vrot.lane.b32.xlu0 %v473, 79
          %v1700 = vpop.permute.xlu0 %1699
          %1701 = vrot.lane.b32.xlu0 %v477, 79
          %v1702 = vpop.permute.xlu0 %1701
          %1703 = vrot.lane.b32.xlu0 %v481, 79
          %v1704 = vpop.permute.xlu0 %1703
          %v1705 = vsel %vm1585, %v1702, %v1704
          %v1706 = vsel %vm1585, %v1700, %v1702
          %v1707 = vsel %vm1585, %v1704, %v1700
          %s1708 = sld [smem:[#allocation4 + $0x5f]]
          %v1709 = vstv %s1708
          %v1710 = vmul.f32 %v1709, %v1706
          %v1711 = vmul.f32 %v1709, %v1705
          %v1712 = vmul.f32 %v1709, %v1707
          %v1713 = vadd.f32 %v1696, %v1710
          %v1714 = vadd.f32 %v1697, %v1711
          %v1715 = vadd.f32 %v1698, %v1712
          %s1716 = scalar_lea.vmem [#allocation8], 4
          %v1717 = vld [vmem:[%s1716] ss:$8 sm:$0x7]
          %v1721 = vcombine.low %v1713, %v1714
          %v1723 = vunpack.c.l.s4 1966171168
          %v1724 = vunpack.c.0.s8 %v1723
          %v1725 = vlaneseq
          %v1726 = vshrl.u32 %v1725, 7
          %v1727 = vsub.s32 %v1724, %v1726
          %v1728 = vrot.slane %v1721, %v1727
          %v1730 = vunpack.c.l.s4 1966171168
          %v1731 = vunpack.c.0.s8 %v1730
          %v1732 = vlaneseq
          %v1733 = vshrl.u32 %v1732, 7
          %v1734 = vsub.s32 %v1731, %v1733
          %v1735 = vrot.slane %v1715, %v1734
          %v1736 = vcombine.low %v1728, %v1735
          %v1738 = vunpack.c.l.s4 1966171168
          %v1739 = vunpack.c.0.s8 %v1738
          %v1740 = vlaneseq
          %v1741 = vshrl.u32 %v1740, 7
          %v1742 = vsub.s32 %v1739, %v1741
          %v1743 = vrot.slane %v1736, %v1742
          %v1745 = vmul.f32 %v1717, %v1743
          %v1746 = vadd.f32 %v1470, %v1745
          %1747 = vrot.lane.b32.xlu0 %v329, 46
          %v1748 = vpop.permute.xlu0 %1747
          %1749 = vrot.lane.b32.xlu0 %v333, 46
          %v1750 = vpop.permute.xlu0 %1749
          %1751 = vrot.lane.b32.xlu0 %v337, 46
          %v1752 = vpop.permute.xlu0 %1751
          %vm1753 = vcmp.lt.s32.totalorder %v348, 46
          %v1754 = vsel %vm1753, %v1750, %v1752
          %v1755 = vsel %vm1753, %v1748, %v1750
          %v1756 = vsel %vm1753, %v1752, %v1748
          %s1757 = sld [smem:[#allocation4 + $0x5]]
          %v1758 = vstv %s1757
          %v1759 = vmul.f32 %v1758, %v1756
          %v1760 = vmul.f32 %v1758, %v1755
          %v1761 = vmul.f32 %v1758, %v1754
          %v1762 = vadd.f32 %v1759, 0.0
          %v1763 = vadd.f32 %v1760, 0.0
          %v1764 = vadd.f32 %v1761, 0.0
          %1765 = vrot.lane.b32.xlu0 %v329, 30
          %v1766 = vpop.permute.xlu0 %1765
          %1767 = vrot.lane.b32.xlu0 %v333, 30
          %v1768 = vpop.permute.xlu0 %1767
          %1769 = vrot.lane.b32.xlu0 %v337, 30
          %v1770 = vpop.permute.xlu0 %1769
          %vm1771 = vcmp.lt.s32.totalorder %v348, 30
          %v1772 = vsel %vm1771, %v1768, %v1770
          %v1773 = vsel %vm1771, %v1766, %v1768
          %v1774 = vsel %vm1771, %v1770, %v1766
          %s1775 = sld [smem:[#allocation4 + $0xc]]
          %v1776 = vstv %s1775
          %v1777 = vmul.f32 %v1776, %v1774
          %v1778 = vmul.f32 %v1776, %v1773
          %v1779 = vmul.f32 %v1776, %v1772
          %v1780 = vadd.f32 %v1762, %v1777
          %v1781 = vadd.f32 %v1763, %v1778
          %v1782 = vadd.f32 %v1764, %v1779
          %1783 = vrot.lane.b32.xlu0 %v329, 14
          %v1784 = vpop.permute.xlu0 %1783
          %1785 = vrot.lane.b32.xlu0 %v333, 14
          %v1786 = vpop.permute.xlu0 %1785
          %1787 = vrot.lane.b32.xlu0 %v337, 14
          %v1788 = vpop.permute.xlu0 %1787
          %vm1789 = vcmp.lt.s32.totalorder %v348, 14
          %v1790 = vsel %vm1789, %v1786, %v1788
          %v1791 = vsel %vm1789, %v1784, %v1786
          %v1792 = vsel %vm1789, %v1788, %v1784
          %s1793 = sld [smem:[#allocation4 + $0x13]]
          %v1794 = vstv %s1793
          %v1795 = vmul.f32 %v1794, %v1792
          %v1796 = vmul.f32 %v1794, %v1791
          %v1797 = vmul.f32 %v1794, %v1790
          %v1798 = vadd.f32 %v1780, %v1795
          %v1799 = vadd.f32 %v1781, %v1796
          %v1800 = vadd.f32 %v1782, %v1797
          %1801 = vrot.lane.b32.xlu0 %v329, 126
          %v1802 = vpop.permute.xlu0 %1801
          %1803 = vrot.lane.b32.xlu0 %v333, 126
          %v1804 = vpop.permute.xlu0 %1803
          %1805 = vrot.lane.b32.xlu0 %v337, 126
          %v1806 = vpop.permute.xlu0 %1805
          %vm1807 = vcmp.lt.s32.totalorder %v348, 126
          %v1808 = vsel %vm1807, %v1804, %v1806
          %v1809 = vsel %vm1807, %v1802, %v1804
          %v1810 = vsel %vm1807, %v1806, %v1802
          %s1811 = sld [smem:[#allocation4 + $0x1a]]
          %v1812 = vstv %s1811
          %v1813 = vmul.f32 %v1812, %v1809
          %v1814 = vmul.f32 %v1812, %v1808
          %v1815 = vmul.f32 %v1812, %v1810
          %v1816 = vadd.f32 %v1798, %v1813
          %v1817 = vadd.f32 %v1799, %v1814
          %v1818 = vadd.f32 %v1800, %v1815
          %1819 = vrot.lane.b32.xlu0 %v329, 110
          %v1820 = vpop.permute.xlu0 %1819
          %1821 = vrot.lane.b32.xlu0 %v333, 110
          %v1822 = vpop.permute.xlu0 %1821
          %1823 = vrot.lane.b32.xlu0 %v337, 110
          %v1824 = vpop.permute.xlu0 %1823
          %vm1825 = vcmp.lt.s32.totalorder %v348, 110
          %v1826 = vsel %vm1825, %v1822, %v1824
          %v1827 = vsel %vm1825, %v1820, %v1822
          %v1828 = vsel %vm1825, %v1824, %v1820
          %s1829 = sld [smem:[#allocation4 + $0x21]]
          %v1830 = vstv %s1829
          %v1831 = vmul.f32 %v1830, %v1827
          %v1832 = vmul.f32 %v1830, %v1826
          %v1833 = vmul.f32 %v1830, %v1828
          %v1834 = vadd.f32 %v1816, %v1831
          %v1835 = vadd.f32 %v1817, %v1832
          %v1836 = vadd.f32 %v1818, %v1833
          %1837 = vrot.lane.b32.xlu0 %v329, 94
          %v1838 = vpop.permute.xlu0 %1837
          %1839 = vrot.lane.b32.xlu0 %v333, 94
          %v1840 = vpop.permute.xlu0 %1839
          %1841 = vrot.lane.b32.xlu0 %v337, 94
          %v1842 = vpop.permute.xlu0 %1841
          %vm1843 = vcmp.lt.s32.totalorder %v348, 94
          %v1844 = vsel %vm1843, %v1840, %v1842
          %v1845 = vsel %vm1843, %v1838, %v1840
          %v1846 = vsel %vm1843, %v1842, %v1838
          %s1847 = sld [smem:[#allocation4 + $0x28]]
          %v1848 = vstv %s1847
          %v1849 = vmul.f32 %v1848, %v1845
          %v1850 = vmul.f32 %v1848, %v1844
          %v1851 = vmul.f32 %v1848, %v1846
          %v1852 = vadd.f32 %v1834, %v1849
          %v1853 = vadd.f32 %v1835, %v1850
          %v1854 = vadd.f32 %v1836, %v1851
          %1855 = vrot.lane.b32.xlu0 %v329, 78
          %v1856 = vpop.permute.xlu0 %1855
          %1857 = vrot.lane.b32.xlu0 %v333, 78
          %v1858 = vpop.permute.xlu0 %1857
          %1859 = vrot.lane.b32.xlu0 %v337, 78
          %v1860 = vpop.permute.xlu0 %1859
          %vm1861 = vcmp.lt.s32.totalorder %v348, 78
          %v1862 = vsel %vm1861, %v1858, %v1860
          %v1863 = vsel %vm1861, %v1856, %v1858
          %v1864 = vsel %vm1861, %v1860, %v1856
          %s1865 = sld [smem:[#allocation4 + $0x2f]]
          %v1866 = vstv %s1865
          %v1867 = vmul.f32 %v1866, %v1863
          %v1868 = vmul.f32 %v1866, %v1862
          %v1869 = vmul.f32 %v1866, %v1864
          %v1870 = vadd.f32 %v1852, %v1867
          %v1871 = vadd.f32 %v1853, %v1868
          %v1872 = vadd.f32 %v1854, %v1869
          %1873 = vrot.lane.b32.xlu0 %v473, 46
          %v1874 = vpop.permute.xlu0 %1873
          %1875 = vrot.lane.b32.xlu0 %v477, 46
          %v1876 = vpop.permute.xlu0 %1875
          %1877 = vrot.lane.b32.xlu0 %v481, 46
          %v1878 = vpop.permute.xlu0 %1877
          %v1879 = vsel %vm1753, %v1876, %v1878
          %v1880 = vsel %vm1753, %v1874, %v1876
          %v1881 = vsel %vm1753, %v1878, %v1874
          %s1882 = sld [smem:[#allocation4 + $0x36]]
          %v1883 = vstv %s1882
          %v1884 = vmul.f32 %v1883, %v1881
          %v1885 = vmul.f32 %v1883, %v1880
          %v1886 = vmul.f32 %v1883, %v1879
          %v1887 = vadd.f32 %v1870, %v1884
          %v1888 = vadd.f32 %v1871, %v1885
          %v1889 = vadd.f32 %v1872, %v1886
          %1890 = vrot.lane.b32.xlu0 %v473, 30
          %v1891 = vpop.permute.xlu0 %1890
          %1892 = vrot.lane.b32.xlu0 %v477, 30
          %v1893 = vpop.permute.xlu0 %1892
          %1894 = vrot.lane.b32.xlu0 %v481, 30
          %v1895 = vpop.permute.xlu0 %1894
          %v1896 = vsel %vm1771, %v1893, %v1895
          %v1897 = vsel %vm1771, %v1891, %v1893
          %v1898 = vsel %vm1771, %v1895, %v1891
          %s1899 = sld [smem:[#allocation4 + $0x3d]]
          %v1900 = vstv %s1899
          %v1901 = vmul.f32 %v1900, %v1898
          %v1902 = vmul.f32 %v1900, %v1897
          %v1903 = vmul.f32 %v1900, %v1896
          %v1904 = vadd.f32 %v1887, %v1901
          %v1905 = vadd.f32 %v1888, %v1902
          %v1906 = vadd.f32 %v1889, %v1903
          %1907 = vrot.lane.b32.xlu0 %v473, 14
          %v1908 = vpop.permute.xlu0 %1907
          %1909 = vrot.lane.b32.xlu0 %v477, 14
          %v1910 = vpop.permute.xlu0 %1909
          %1911 = vrot.lane.b32.xlu0 %v481, 14
          %v1912 = vpop.permute.xlu0 %1911
          %v1913 = vsel %vm1789, %v1910, %v1912
          %v1914 = vsel %vm1789, %v1908, %v1910
          %v1915 = vsel %vm1789, %v1912, %v1908
          %s1916 = sld [smem:[#allocation4 + $0x44]]
          %v1917 = vstv %s1916
          %v1918 = vmul.f32 %v1917, %v1915
          %v1919 = vmul.f32 %v1917, %v1914
          %v1920 = vmul.f32 %v1917, %v1913
          %v1921 = vadd.f32 %v1904, %v1918
          %v1922 = vadd.f32 %v1905, %v1919
          %v1923 = vadd.f32 %v1906, %v1920
          %1924 = vrot.lane.b32.xlu0 %v473, 126
          %v1925 = vpop.permute.xlu0 %1924
          %1926 = vrot.lane.b32.xlu0 %v477, 126
          %v1927 = vpop.permute.xlu0 %1926
          %1928 = vrot.lane.b32.xlu0 %v481, 126
          %v1929 = vpop.permute.xlu0 %1928
          %v1930 = vsel %vm1807, %v1927, %v1929
          %v1931 = vsel %vm1807, %v1925, %v1927
          %v1932 = vsel %vm1807, %v1929, %v1925
          %s1933 = sld [smem:[#allocation4 + $0x4b]]
          %v1934 = vstv %s1933
          %v1935 = vmul.f32 %v1934, %v1931
          %v1936 = vmul.f32 %v1934, %v1930
          %v1937 = vmul.f32 %v1934, %v1932
          %v1938 = vadd.f32 %v1921, %v1935
          %v1939 = vadd.f32 %v1922, %v1936
          %v1940 = vadd.f32 %v1923, %v1937
          %1941 = vrot.lane.b32.xlu0 %v473, 110
          %v1942 = vpop.permute.xlu0 %1941
          %1943 = vrot.lane.b32.xlu0 %v477, 110
          %v1944 = vpop.permute.xlu0 %1943
          %1945 = vrot.lane.b32.xlu0 %v481, 110
          %v1946 = vpop.permute.xlu0 %1945
          %v1947 = vsel %vm1825, %v1944, %v1946
          %v1948 = vsel %vm1825, %v1942, %v1944
          %v1949 = vsel %vm1825, %v1946, %v1942
          %s1950 = sld [smem:[#allocation4 + $0x52]]
          %v1951 = vstv %s1950
          %v1952 = vmul.f32 %v1951, %v1948
          %v1953 = vmul.f32 %v1951, %v1947
          %v1954 = vmul.f32 %v1951, %v1949
          %v1955 = vadd.f32 %v1938, %v1952
          %v1956 = vadd.f32 %v1939, %v1953
          %v1957 = vadd.f32 %v1940, %v1954
          %1958 = vrot.lane.b32.xlu0 %v473, 94
          %v1959 = vpop.permute.xlu0 %1958
          %1960 = vrot.lane.b32.xlu0 %v477, 94
          %v1961 = vpop.permute.xlu0 %1960
          %1962 = vrot.lane.b32.xlu0 %v481, 94
          %v1963 = vpop.permute.xlu0 %1962
          %v1964 = vsel %vm1843, %v1961, %v1963
          %v1965 = vsel %vm1843, %v1959, %v1961
          %v1966 = vsel %vm1843, %v1963, %v1959
          %s1967 = sld [smem:[#allocation4 + $0x59]]
          %v1968 = vstv %s1967
          %v1969 = vmul.f32 %v1968, %v1965
          %v1970 = vmul.f32 %v1968, %v1964
          %v1971 = vmul.f32 %v1968, %v1966
          %v1972 = vadd.f32 %v1955, %v1969
          %v1973 = vadd.f32 %v1956, %v1970
          %v1974 = vadd.f32 %v1957, %v1971
          %1975 = vrot.lane.b32.xlu0 %v473, 78
          %v1976 = vpop.permute.xlu0 %1975
          %1977 = vrot.lane.b32.xlu0 %v477, 78
          %v1978 = vpop.permute.xlu0 %1977
          %1979 = vrot.lane.b32.xlu0 %v481, 78
          %v1980 = vpop.permute.xlu0 %1979
          %v1981 = vsel %vm1861, %v1978, %v1980
          %v1982 = vsel %vm1861, %v1976, %v1978
          %v1983 = vsel %vm1861, %v1980, %v1976
          %s1984 = sld [smem:[#allocation4 + $0x60]]
          %v1985 = vstv %s1984
          %v1986 = vmul.f32 %v1985, %v1982
          %v1987 = vmul.f32 %v1985, %v1981
          %v1988 = vmul.f32 %v1985, %v1983
          %v1989 = vadd.f32 %v1972, %v1986
          %v1990 = vadd.f32 %v1973, %v1987
          %v1991 = vadd.f32 %v1974, %v1988
          %s1992 = scalar_lea.vmem [#allocation8], 5
          %v1993 = vld [vmem:[%s1992] ss:$8 sm:$0x7]
          %v1997 = vcombine.low %v1989, %v1990
          %v1999 = vunpack.c.l.s4 1966171168
          %v2000 = vunpack.c.0.s8 %v1999
          %v2001 = vlaneseq
          %v2002 = vshrl.u32 %v2001, 7
          %v2003 = vsub.s32 %v2000, %v2002
          %v2004 = vrot.slane %v1997, %v2003
          %v2006 = vunpack.c.l.s4 1966171168
          %v2007 = vunpack.c.0.s8 %v2006
          %v2008 = vlaneseq
          %v2009 = vshrl.u32 %v2008, 7
          %v2010 = vsub.s32 %v2007, %v2009
          %v2011 = vrot.slane %v1991, %v2010
          %v2012 = vcombine.low %v2004, %v2011
          %v2014 = vunpack.c.l.s4 1966171168
          %v2015 = vunpack.c.0.s8 %v2014
          %v2016 = vlaneseq
          %v2017 = vshrl.u32 %v2016, 7
          %v2018 = vsub.s32 %v2015, %v2017
          %v2019 = vrot.slane %v2012, %v2018
          %v2021 = vmul.f32 %v1993, %v2019
          %v2022 = vadd.f32 %v1746, %v2021
          %2023 = vrot.lane.b32.xlu0 %v329, 45
          %v2024 = vpop.permute.xlu0 %2023
          %2025 = vrot.lane.b32.xlu0 %v333, 45
          %v2026 = vpop.permute.xlu0 %2025
          %2027 = vrot.lane.b32.xlu0 %v337, 45
          %v2028 = vpop.permute.xlu0 %2027
          %vm2029 = vcmp.lt.s32.totalorder %v348, 45
          %v2030 = vsel %vm2029, %v2026, %v2028
          %v2031 = vsel %vm2029, %v2024, %v2026
          %v2032 = vsel %vm2029, %v2028, %v2024
          %s2033 = sld [smem:[#allocation4 + $0x6]]
          %v2034 = vstv %s2033
          %v2035 = vmul.f32 %v2034, %v2032
          %v2036 = vmul.f32 %v2034, %v2031
          %v2037 = vmul.f32 %v2034, %v2030
          %v2038 = vadd.f32 %v2035, 0.0
          %v2039 = vadd.f32 %v2036, 0.0
          %v2040 = vadd.f32 %v2037, 0.0
          %2041 = vrot.lane.b32.xlu0 %v329, 29
          %v2042 = vpop.permute.xlu0 %2041
          %2043 = vrot.lane.b32.xlu0 %v333, 29
          %v2044 = vpop.permute.xlu0 %2043
          %2045 = vrot.lane.b32.xlu0 %v337, 29
          %v2046 = vpop.permute.xlu0 %2045
          %vm2047 = vcmp.lt.s32.totalorder %v348, 29
          %v2048 = vsel %vm2047, %v2044, %v2046
          %v2049 = vsel %vm2047, %v2042, %v2044
          %v2050 = vsel %vm2047, %v2046, %v2042
          %s2051 = sld [smem:[#allocation4 + $0xd]]
          %v2052 = vstv %s2051
          %v2053 = vmul.f32 %v2052, %v2050
          %v2054 = vmul.f32 %v2052, %v2049
          %v2055 = vmul.f32 %v2052, %v2048
          %v2056 = vadd.f32 %v2038, %v2053
          %v2057 = vadd.f32 %v2039, %v2054
          %v2058 = vadd.f32 %v2040, %v2055
          %2059 = vrot.lane.b32.xlu0 %v329, 13
          %v2060 = vpop.permute.xlu0 %2059
          %2061 = vrot.lane.b32.xlu0 %v333, 13
          %v2062 = vpop.permute.xlu0 %2061
          %2063 = vrot.lane.b32.xlu0 %v337, 13
          %v2064 = vpop.permute.xlu0 %2063
          %vm2065 = vcmp.lt.s32.totalorder %v348, 13
          %v2066 = vsel %vm2065, %v2062, %v2064
          %v2067 = vsel %vm2065, %v2060, %v2062
          %v2068 = vsel %vm2065, %v2064, %v2060
          %s2069 = sld [smem:[#allocation4 + $0x14]]
          %v2070 = vstv %s2069
          %v2071 = vmul.f32 %v2070, %v2068
          %v2072 = vmul.f32 %v2070, %v2067
          %v2073 = vmul.f32 %v2070, %v2066
          %v2074 = vadd.f32 %v2056, %v2071
          %v2075 = vadd.f32 %v2057, %v2072
          %v2076 = vadd.f32 %v2058, %v2073
          %2077 = vrot.lane.b32.xlu0 %v329, 125
          %v2078 = vpop.permute.xlu0 %2077
          %2079 = vrot.lane.b32.xlu0 %v333, 125
          %v2080 = vpop.permute.xlu0 %2079
          %2081 = vrot.lane.b32.xlu0 %v337, 125
          %v2082 = vpop.permute.xlu0 %2081
          %vm2083 = vcmp.lt.s32.totalorder %v348, 125
          %v2084 = vsel %vm2083, %v2080, %v2082
          %v2085 = vsel %vm2083, %v2078, %v2080
          %v2086 = vsel %vm2083, %v2082, %v2078
          %s2087 = sld [smem:[#allocation4 + $0x1b]]
          %v2088 = vstv %s2087
          %v2089 = vmul.f32 %v2088, %v2085
          %v2090 = vmul.f32 %v2088, %v2084
          %v2091 = vmul.f32 %v2088, %v2086
          %v2092 = vadd.f32 %v2074, %v2089
          %v2093 = vadd.f32 %v2075, %v2090
          %v2094 = vadd.f32 %v2076, %v2091
          %2095 = vrot.lane.b32.xlu0 %v329, 109
          %v2096 = vpop.permute.xlu0 %2095
          %2097 = vrot.lane.b32.xlu0 %v333, 109
          %v2098 = vpop.permute.xlu0 %2097
          %2099 = vrot.lane.b32.xlu0 %v337, 109
          %v2100 = vpop.permute.xlu0 %2099
          %vm2101 = vcmp.lt.s32.totalorder %v348, 109
          %v2102 = vsel %vm2101, %v2098, %v2100
          %v2103 = vsel %vm2101, %v2096, %v2098
          %v2104 = vsel %vm2101, %v2100, %v2096
          %s2105 = sld [smem:[#allocation4 + $0x22]]
          %v2106 = vstv %s2105
          %v2107 = vmul.f32 %v2106, %v2103
          %v2108 = vmul.f32 %v2106, %v2102
          %v2109 = vmul.f32 %v2106, %v2104
          %v2110 = vadd.f32 %v2092, %v2107
          %v2111 = vadd.f32 %v2093, %v2108
          %v2112 = vadd.f32 %v2094, %v2109
          %2113 = vrot.lane.b32.xlu0 %v329, 93
          %v2114 = vpop.permute.xlu0 %2113
          %2115 = vrot.lane.b32.xlu0 %v333, 93
          %v2116 = vpop.permute.xlu0 %2115
          %2117 = vrot.lane.b32.xlu0 %v337, 93
          %v2118 = vpop.permute.xlu0 %2117
          %vm2119 = vcmp.lt.s32.totalorder %v348, 93
          %v2120 = vsel %vm2119, %v2116, %v2118
          %v2121 = vsel %vm2119, %v2114, %v2116
          %v2122 = vsel %vm2119, %v2118, %v2114
          %s2123 = sld [smem:[#allocation4 + $0x29]]
          %v2124 = vstv %s2123
          %v2125 = vmul.f32 %v2124, %v2121
          %v2126 = vmul.f32 %v2124, %v2120
          %v2127 = vmul.f32 %v2124, %v2122
          %v2128 = vadd.f32 %v2110, %v2125
          %v2129 = vadd.f32 %v2111, %v2126
          %v2130 = vadd.f32 %v2112, %v2127
          %2131 = vrot.lane.b32.xlu0 %v329, 77
          %v2132 = vpop.permute.xlu0 %2131
          %2133 = vrot.lane.b32.xlu0 %v333, 77
          %v2134 = vpop.permute.xlu0 %2133
          %2135 = vrot.lane.b32.xlu0 %v337, 77
          %v2136 = vpop.permute.xlu0 %2135
          %vm2137 = vcmp.lt.s32.totalorder %v348, 77
          %v2138 = vsel %vm2137, %v2134, %v2136
          %v2139 = vsel %vm2137, %v2132, %v2134
          %v2140 = vsel %vm2137, %v2136, %v2132
          %s2141 = sld [smem:[#allocation4 + $0x30]]
          %v2142 = vstv %s2141
          %v2143 = vmul.f32 %v2142, %v2139
          %v2144 = vmul.f32 %v2142, %v2138
          %v2145 = vmul.f32 %v2142, %v2140
          %v2146 = vadd.f32 %v2128, %v2143
          %v2147 = vadd.f32 %v2129, %v2144
          %v2148 = vadd.f32 %v2130, %v2145
          %2149 = vrot.lane.b32.xlu0 %v473, 45
          %v2150 = vpop.permute.xlu0 %2149
          %2151 = vrot.lane.b32.xlu0 %v477, 45
          %v2152 = vpop.permute.xlu0 %2151
          %2153 = vrot.lane.b32.xlu0 %v481, 45
          %v2154 = vpop.permute.xlu0 %2153
          %v2155 = vsel %vm2029, %v2152, %v2154
          %v2156 = vsel %vm2029, %v2150, %v2152
          %v2157 = vsel %vm2029, %v2154, %v2150
          %s2158 = sld [smem:[#allocation4 + $0x37]]
          %v2159 = vstv %s2158
          %v2160 = vmul.f32 %v2159, %v2157
          %v2161 = vmul.f32 %v2159, %v2156
          %v2162 = vmul.f32 %v2159, %v2155
          %v2163 = vadd.f32 %v2146, %v2160
          %v2164 = vadd.f32 %v2147, %v2161
          %v2165 = vadd.f32 %v2148, %v2162
          %2166 = vrot.lane.b32.xlu0 %v473, 29
          %v2167 = vpop.permute.xlu0 %2166
          %2168 = vrot.lane.b32.xlu0 %v477, 29
          %v2169 = vpop.permute.xlu0 %2168
          %2170 = vrot.lane.b32.xlu0 %v481, 29
          %v2171 = vpop.permute.xlu0 %2170
          %v2172 = vsel %vm2047, %v2169, %v2171
          %v2173 = vsel %vm2047, %v2167, %v2169
          %v2174 = vsel %vm2047, %v2171, %v2167
          %s2175 = sld [smem:[#allocation4 + $0x3e]]
          %v2176 = vstv %s2175
          %v2177 = vmul.f32 %v2176, %v2174
          %v2178 = vmul.f32 %v2176, %v2173
          %v2179 = vmul.f32 %v2176, %v2172
          %v2180 = vadd.f32 %v2163, %v2177
          %v2181 = vadd.f32 %v2164, %v2178
          %v2182 = vadd.f32 %v2165, %v2179
          %2183 = vrot.lane.b32.xlu0 %v473, 13
          %v2184 = vpop.permute.xlu0 %2183
          %2185 = vrot.lane.b32.xlu0 %v477, 13
          %v2186 = vpop.permute.xlu0 %2185
          %2187 = vrot.lane.b32.xlu0 %v481, 13
          %v2188 = vpop.permute.xlu0 %2187
          %v2189 = vsel %vm2065, %v2186, %v2188
          %v2190 = vsel %vm2065, %v2184, %v2186
          %v2191 = vsel %vm2065, %v2188, %v2184
          %s2192 = sld [smem:[#allocation4 + $0x45]]
          %v2193 = vstv %s2192
          %v2194 = vmul.f32 %v2193, %v2191
          %v2195 = vmul.f32 %v2193, %v2190
          %v2196 = vmul.f32 %v2193, %v2189
          %v2197 = vadd.f32 %v2180, %v2194
          %v2198 = vadd.f32 %v2181, %v2195
          %v2199 = vadd.f32 %v2182, %v2196
          %2200 = vrot.lane.b32.xlu0 %v473, 125
          %v2201 = vpop.permute.xlu0 %2200
          %2202 = vrot.lane.b32.xlu0 %v477, 125
          %v2203 = vpop.permute.xlu0 %2202
          %2204 = vrot.lane.b32.xlu0 %v481, 125
          %v2205 = vpop.permute.xlu0 %2204
          %v2206 = vsel %vm2083, %v2203, %v2205
          %v2207 = vsel %vm2083, %v2201, %v2203
          %v2208 = vsel %vm2083, %v2205, %v2201
          %s2209 = sld [smem:[#allocation4 + $0x4c]]
          %v2210 = vstv %s2209
          %v2211 = vmul.f32 %v2210, %v2207
          %v2212 = vmul.f32 %v2210, %v2206
          %v2213 = vmul.f32 %v2210, %v2208
          %v2214 = vadd.f32 %v2197, %v2211
          %v2215 = vadd.f32 %v2198, %v2212
          %v2216 = vadd.f32 %v2199, %v2213
          %2217 = vrot.lane.b32.xlu0 %v473, 109
          %v2218 = vpop.permute.xlu0 %2217
          %2219 = vrot.lane.b32.xlu0 %v477, 109
          %v2220 = vpop.permute.xlu0 %2219
          %2221 = vrot.lane.b32.xlu0 %v481, 109
          %v2222 = vpop.permute.xlu0 %2221
          %v2223 = vsel %vm2101, %v2220, %v2222
          %v2224 = vsel %vm2101, %v2218, %v2220
          %v2225 = vsel %vm2101, %v2222, %v2218
          %s2226 = sld [smem:[#allocation4 + $0x53]]
          %v2227 = vstv %s2226
          %v2228 = vmul.f32 %v2227, %v2224
          %v2229 = vmul.f32 %v2227, %v2223
          %v2230 = vmul.f32 %v2227, %v2225
          %v2231 = vadd.f32 %v2214, %v2228
          %v2232 = vadd.f32 %v2215, %v2229
          %v2233 = vadd.f32 %v2216, %v2230
          %2234 = vrot.lane.b32.xlu0 %v473, 93
          %v2235 = vpop.permute.xlu0 %2234
          %2236 = vrot.lane.b32.xlu0 %v477, 93
          %v2237 = vpop.permute.xlu0 %2236
          %2238 = vrot.lane.b32.xlu0 %v481, 93
          %v2239 = vpop.permute.xlu0 %2238
          %v2240 = vsel %vm2119, %v2237, %v2239
          %v2241 = vsel %vm2119, %v2235, %v2237
          %v2242 = vsel %vm2119, %v2239, %v2235
          %s2243 = sld [smem:[#allocation4 + $0x5a]]
          %v2244 = vstv %s2243
          %v2245 = vmul.f32 %v2244, %v2241
          %v2246 = vmul.f32 %v2244, %v2240
          %v2247 = vmul.f32 %v2244, %v2242
          %v2248 = vadd.f32 %v2231, %v2245
          %v2249 = vadd.f32 %v2232, %v2246
          %v2250 = vadd.f32 %v2233, %v2247
          %2251 = vrot.lane.b32.xlu0 %v473, 77
          %v2252 = vpop.permute.xlu0 %2251
          %2253 = vrot.lane.b32.xlu0 %v477, 77
          %v2254 = vpop.permute.xlu0 %2253
          %2255 = vrot.lane.b32.xlu0 %v481, 77
          %v2256 = vpop.permute.xlu0 %2255
          %v2257 = vsel %vm2137, %v2254, %v2256
          %v2258 = vsel %vm2137, %v2252, %v2254
          %v2259 = vsel %vm2137, %v2256, %v2252
          %s2260 = sld [smem:[#allocation4 + $0x61]]
          %v2261 = vstv %s2260
          %v2262 = vmul.f32 %v2261, %v2258
          %v2263 = vmul.f32 %v2261, %v2257
          %v2264 = vmul.f32 %v2261, %v2259
          %v2265 = vadd.f32 %v2248, %v2262
          %v2266 = vadd.f32 %v2249, %v2263
          %v2267 = vadd.f32 %v2250, %v2264
          %s2268 = scalar_lea.vmem [#allocation8], 6
          %v2269 = vld [vmem:[%s2268] ss:$8 sm:$0x7]
          %v2273 = vcombine.low %v2265, %v2266
          %v2275 = vunpack.c.l.s4 1966171168
          %v2276 = vunpack.c.0.s8 %v2275
          %v2277 = vlaneseq
          %v2278 = vshrl.u32 %v2277, 7
          %v2279 = vsub.s32 %v2276, %v2278
          %v2280 = vrot.slane %v2273, %v2279
          %v2282 = vunpack.c.l.s4 1966171168
          %v2283 = vunpack.c.0.s8 %v2282
          %v2284 = vlaneseq
          %v2285 = vshrl.u32 %v2284, 7
          %v2286 = vsub.s32 %v2283, %v2285
          %v2287 = vrot.slane %v2267, %v2286
          %v2288 = vcombine.low %v2280, %v2287
          %v2290 = vunpack.c.l.s4 1966171168
          %v2291 = vunpack.c.0.s8 %v2290
          %v2292 = vlaneseq
          %v2293 = vshrl.u32 %v2292, 7
          %v2294 = vsub.s32 %v2291, %v2293
          %v2295 = vrot.slane %v2288, %v2294
          %v2297 = vmul.f32 %v2269, %v2295
          %v2298 = vadd.f32 %v2022, %v2297
          %v2299 = vxor.u32 %v2298, 2147483648
          %v2300 = vmul.f32 %v2299, 1.442695
          %v2301 = vpow.pop %v2300
          %v2302 = vadd.f32 %v2301, 1.0
          %v2303 = vrcp.pop %v2302
          %v2304 = vmul.f32 1.0, %v2303
          %vm2305 = vcmp.lt.s32.totalorder %v280, 384
          %vm2306 = vmand %vm281, %vm2305
          %2307 = vst.msk [vmem:[%s227] sm:$0x7] %vm2306, %v2304
        $region52: #{tpu_custom_call.1} parent=31 // pred_fallthru
          _
        %s2308 = sand.u32 %s112, 1
        %s2309 = scalar_lea.sflag [#allocation6], %s2308
        %s2310 = sand.u32 %s112, 1
        %s2311 = smul.addr %s2310, 3
        %s2312 = scalar_lea.vmem [#allocation11], %s2311
        // Predicated region
        $region53: #{tpu_custom_call.1} parent=31 // pred_check
          %p2313 = pneg %p122
        $region54: #{tpu_custom_call.1} parent=31 // pred_check_branch
          %2315 = sbr.rel (%p2313) target = $region56
        $region55: #{tpu_custom_call.1} parent=31 // pred_region
          %s2317 = ssub.s32 48, 48
          %2318 = vsyncadd %s2309, %s2317
          %s2319 = smul.addr %s26, 3
          %s2320 = smul.addr %s2319, 16
          %s2321 = scalar_lea.hbm %s3, %s2320
          %s2323 = sshll.u32 %s2312, 4
          %s2324 = int_to_ptr.vmem [resolvable:$true] %s2323
          %2326 = dma.vmem_to_hbm [thread:$0]  %s2324, 48, %s2321, %s2309
        $region56: #{tpu_custom_call.1} parent=31 // pred_fallthru
          _
      $region32: #{tpu_custom_call.1} parent=5 // pred_fallthru
        _
      %p2327 = scmp.le.s32.totalorder 2, %s17
      // Predicated region
      $region57: #{tpu_custom_call.1} parent=5 // pred_check
        %p2328 = pneg %p2327
      $region58: #{tpu_custom_call.1} parent=5 // pred_check_branch
        %2330 = sbr.rel (%p2328) target = $region60
      $region59: #{tpu_custom_call.1} parent=5 // pred_region
        %s2331 = ssub.s32 %s17, 2
        // Predicated region
        $region61: #{tpu_custom_call.1} parent=59 // pred_check
          %p2332 = pneg %p128
        $region62: #{tpu_custom_call.1} parent=59 // pred_check_branch
          %2334 = sbr.rel (%p2332) target = $region64
        $region63: #{tpu_custom_call.1} parent=59 // pred_region
          %s2335 = sand.u32 %s113, 1
          %s2336 = scalar_lea.sflag [#allocation6], %s2335
          %s2337 = sand.u32 %s113, 1
          %s2338 = smul.addr %s2337, 3
          %s2339 = scalar_lea.vmem [#allocation11], %s2338
          %2340 = dma.done %s2336, 48
        $region64: #{tpu_custom_call.1} parent=59 // pred_fallthru
          _
      $region60: #{tpu_custom_call.1} parent=5 // pred_fallthru
        _
    $region6: #{tpu_custom_call.1} parent=1 // loop_footer
      %s21 = sadd.s32 1, %s17
    $region7: #{tpu_custom_call.1} parent=1 // loop_footer_branch
      %16 = sbr.rel target = $region3
    $region8: #{tpu_custom_call.1} parent=1 // loop_exit
      _
    %2341 = vsyncpa [#allocation5], 1
    %s2342 = scalar_lea.sflag [#allocation5], 1
    %2343 = vsyncpa %s2342, 1
    %2344 = vsyncpa [#allocation10], 1
    %s2345 = scalar_lea.sflag [#allocation10], 1
    %2346 = vsyncpa %s2345, 1
    %2347 = vsyncpa [#allocation6], 1
    %s2348 = scalar_lea.sflag [#allocation6], 1
    %2349 = vsyncpa %s2348, 1
    %2350 = vsyncpa [#allocation7], 1
    %s2351 = scalar_lea.sflag [#allocation7], 1
    %2352 = vsyncpa %s2351, 1

</llo_original>
